<compile_context>
chip_gen: v7x
topology: tpu7x:2x2x1
jax: 0.10.0
libtpu: 0.0.40
codegen_flags: <defaults>
</compile_context>

<pallas_src>
import math
import functools

import jax
import jax.numpy as jnp
from jax.experimental import pallas as pl
from jax.experimental.pallas import tpu as pltpu

ALPHA = 0.25      # nn.PReLU() default init (single shared parameter)
BN_EPS = 1e-5     # nn.BatchNorm2d default eps


def _prelu(y):
    return jnp.maximum(y, 0.0) + ALPHA * jnp.minimum(y, 0.0)


# ------------------------------ fused kernel --------------------------------

def _fused_kernel(x_ref, w_ref, b_ref, wo_ref, bo_ref, o_ref,
                  y_scr, qv3_scr, kb_scr, logits_scr, *, C2, T, F):
    """Whole TemporalSelfAttention forward for one batch element, all in VMEM."""
    x = x_ref[0]                                                    # (C, T*F)

    # (1) stacked q/v/k 1x1 convs (+ folded BN) + PReLU: one lane-dense MXU matmul.
    #     Rows [0,C2)=q (scale pre-folded), [C2,2C2)=v, [2C2,3C2)=k.
    y = jnp.dot(w_ref[...], x, preferred_element_type=jnp.float32) + b_ref[...]
    y_scr[...] = _prelu(y)                                          # (3*C2, T*F)

    # (2) torch's k.transpose(1, 2): a single 2-D transpose, kept in VMEM.
    kt = y_scr[2 * C2:3 * C2, :].T                                  # (T*F, C2)

    # (3) relayout conv view (channels, T*F) -> attention views entirely in VMEM.
    #     Aligned slab copies only (replaces the old inter-kernel HBM round trip).
    for t in range(T):
        qv3_scr[:, t, :] = y_scr[0:2 * C2, t * F:(t + 1) * F]       # (2*C2, F) slab
        kb_scr[t, :, :] = kt[t * F:(t + 1) * F, :]                  # kb[t,f,c] = k[c,t,f]

    qv3 = qv3_scr[...]
    q3 = qv3[0:C2]                # (C2, T, F)  scaled conv_q(x)
    v3 = qv3[C2:2 * C2]           # (C2, T, F)  conv_v(x)
    kb = kb_scr[...]              # (T, F, C2)

    # (4) attention over all C2 channels at once:
    #     s[i,t,j] = sum_m q3[i,t,m] * conv_k(x)[m,i,j]   (softmax scale pre-folded)
    s = jnp.einsum("itf,ijf->itj", q3, kb, preferred_element_type=jnp.float32)
    s = s - jnp.max(s, axis=-1, keepdims=True)
    p = jnp.exp(s)
    p = p * pl.reciprocal(jnp.sum(p, axis=-1, keepdims=True), approx=True)
    mm = jnp.einsum("itu,iuj->itj", p, v3, preferred_element_type=jnp.float32)

    # (5) torch .view(B,T,C//2,F).permute(0,2,1,3): logits[c,t,f] = mm[t,c,f],
    #     assembled lane-dense so the output conv is one big matmul.
    for t in range(T):
        logits_scr[:, t * F:(t + 1) * F] = mm[t]

    # (6) output 1x1 conv (+ folded BN) + PReLU + residual; lane-dense (C, T*F) store.
    out = jnp.dot(wo_ref[...], logits_scr[...],
                  preferred_element_type=jnp.float32) + bo_ref[...]
    o_ref[0] = _prelu(out) + x


# ------------------------------- glue / host --------------------------------

def fold_conv_bn(w, b, gamma, beta, mean, var):
    """Fold inference-mode BatchNorm into the preceding 1x1 conv."""
    scale = gamma / jnp.sqrt(var + BN_EPS)
    return w * scale[:, None], (b - mean) * scale + beta


def pack_params(params, C, F):
    """BN-fold + weight stacking, hoisted out of the forward (done once)."""
    inv_scale = 1.0 / math.sqrt(C * F // 2)
    # PReLU is positively homogeneous, so folding the (strictly positive) softmax
    # scale straight into conv_q is exact.  A learned / negative scale would break it.
    assert inv_scale > 0.0
    wq, bq = fold_conv_bn(*params["q"])
    wk, bk = fold_conv_bn(*params["k"])
    wv, bv = fold_conv_bn(*params["v"])
    wo, bo = fold_conv_bn(*params["out"])
    wq, bq = wq * inv_scale, bq * inv_scale
    return {
        "w_qvk": jnp.concatenate([wq, wv, wk], axis=0),              # (3*C2, C)
        "b_qvk": jnp.concatenate([bq, bv, bk], axis=0)[:, None],     # (3*C2, 1)
        "wo": wo,                                                    # (C, C2)
        "bo": bo[:, None],                                           # (C, 1)
    }


def temporal_self_attention(x, packed):
    B, C, T, F = x.shape
    C2 = C // 2
    assert T == C2 and F == C2, "module's matmuls require T == F == C // 2"
    TF = T * F
    xf = x.reshape(B, C, TF)    # metadata-only

    out = pl.pallas_call(
        functools.partial(_fused_kernel, C2=C2, T=T, F=F),
        grid=(B,),
        in_specs=[
            pl.BlockSpec((1, C, TF), lambda b: (b, 0, 0)),          # x (conv input + residual)
            pl.BlockSpec((3 * C2, C), lambda b: (0, 0)),            # stacked q/v/k weight
            pl.BlockSpec((3 * C2, 1), lambda b: (0, 0)),            # stacked q/v/k bias
            pl.BlockSpec((C, C2), lambda b: (0, 0)),                # output conv weight
            pl.BlockSpec((C, 1), lambda b: (0, 0)),                 # output conv bias
        ],
        out_specs=pl.BlockSpec((1, C, TF), lambda b: (b, 0, 0)),
        out_shape=jax.ShapeDtypeStruct((B, C, TF), jnp.float32),
        scratch_shapes=[
            pltpu.VMEM((3 * C2, TF), jnp.float32),   # q/v/k conv result (channel-major)
            pltpu.VMEM((2 * C2, T, F), jnp.float32), # q/v in attention layout
            pltpu.VMEM((T, F, C2), jnp.float32),     # k, time-major (torch's transpose)
            pltpu.VMEM((C2, TF), jnp.float32),       # permuted logits, lane-dense
        ],
        input_output_aliases={0: 0},                 # result reuses x's HBM buffer
        compiler_params=pltpu.CompilerParams(
            dimension_semantics=("parallel",),
            vmem_limit_bytes=32 * 1024 * 1024,       # > v5e 16 MiB default, <= v7x physical
        ),
    )(xf, packed["w_qvk"], packed["b_qvk"], packed["wo"], packed["bo"])

    return out.reshape(B, C, T, F)


# ----------------------- pure-JAX reference (for check) ---------------------

def ref_forward(x, params):
    B, C, T, F = x.shape

    def proj(p, inp):
        w, b = fold_conv_bn(*p)
        y = jnp.einsum("oc,bcyz->boyz", w, inp) + b[None, :, None, None]
        return jnp.where(y >= 0, y, ALPHA * y)

    q = proj(params["q"], x)                              # (B, C2, T, F)
    k = proj(params["k"], x).transpose(0, 2, 1, 3)        # (B, T, C2, F)
    v = proj(params["v"], x)                              # (B, C2, T, F)
    s = jnp.matmul(q, k) / math.sqrt(C * F // 2)
    p = jax.nn.softmax(s, axis=-1)
    mm = jnp.matmul(p, v)                                 # (B, C2, T, F)
    logits = mm.reshape(B, T, C // 2, F).transpose(0, 2, 1, 3)
    return proj(params["out"], logits) + x


# ------------------------------ parameter init ------------------------------

def init_params(key, C):
    C2 = C // 2

    def conv_init(k, cout, cin):
        kw, kb = jax.random.split(k)
        bound = 1.0 / math.sqrt(cin)            # 1x1 kernel -> fan_in = cin
        w = jax.random.uniform(kw, (cout, cin), jnp.float32, -bound, bound)
        b = jax.random.uniform(kb, (cout,), jnp.float32, -bound, bound)
        return w, b

    def bn_init(c):
        return (jnp.ones((c,), jnp.float32),    # gamma
                jnp.zeros((c,), jnp.float32),   # beta
                jnp.zeros((c,), jnp.float32),   # running_mean
                jnp.ones((c,), jnp.float32))    # running_var

    kq, kk, kv, ko = jax.random.split(key, 4)
    params = {}
    for name, k, cout, cin in (("q", kq, C2, C), ("k", kk, C2, C),
                               ("v", kv, C2, C), ("out", ko, C, C2)):
        w, b = conv_init(k, cout, cin)
        params[name] = (w, b) + bn_init(cout)
    return params


if __name__ == "__main__":
    key = jax.random.PRNGKey(0)
    B, C = 2, 16
    T = F = C // 2          # required by the module's matmul shapes
    kx, kp = jax.random.split(key)
    x = jax.random.normal(kx, (B, C, T, F), dtype=jnp.float32)
    params = init_params(kp, C)
    packed = pack_params(params, C, F)

    fwd = jax.jit(temporal_self_attention)
    out = jax.block_until_ready(fwd(x, packed))

    ref = ref_forward(x, params)
    assert out.shape == x.shape
    err = float(jnp.max(jnp.abs(out - ref)))
    assert err < 2e-3, f"max abs error vs reference: {err}"
    print("KERNEL_OK")
</pallas_src>

<mosaic_0001>
module attributes {stable_mosaic.version = 11 : i64} {
  func.func @_fused_kernel(%arg0: i32, %arg1: memref<1x16x64xf32, #tpu.memory_space<vmem>>, %arg2: memref<24x16xf32, #tpu.memory_space<vmem>>, %arg3: memref<24x1xf32, #tpu.memory_space<vmem>>, %arg4: memref<16x8xf32, #tpu.memory_space<vmem>>, %arg5: memref<16x1xf32, #tpu.memory_space<vmem>>, %arg6: memref<1x16x64xf32, #tpu.memory_space<vmem>>, %arg7: memref<24x64xf32, #tpu.memory_space<vmem>>, %arg8: memref<16x8x8xf32, #tpu.memory_space<vmem>>, %arg9: memref<8x8x8xf32, #tpu.memory_space<vmem>>, %arg10: memref<8x64xf32, #tpu.memory_space<vmem>>) attributes {dimension_semantics = [#tpu.dimension_semantics<parallel>], iteration_bounds = array<i64: 2>, scalar_prefetch = 0 : i64, scratch_operands = 4 : i64, tpu.core_type = #tpu.core_type<tc>, window_params = [{transform_indices = @transform_0, window_bounds = array<i64: 1, 16, 64>}, {pipeline_mode = #tpu.pipeline_mode<synchronous>, transform_indices = @transform_1, window_bounds = array<i64: 24, 16>}, {pipeline_mode = #tpu.pipeline_mode<synchronous>, transform_indices = @transform_2, window_bounds = array<i64: 24, 1>}, {pipeline_mode = #tpu.pipeline_mode<synchronous>, transform_indices = @transform_3, window_bounds = array<i64: 16, 8>}, {pipeline_mode = #tpu.pipeline_mode<synchronous>, transform_indices = @transform_4, window_bounds = array<i64: 16, 1>}, {transform_indices = @transform_5, window_bounds = array<i64: 1, 16, 64>}]} {
    %c0 = arith.constant 0 : index
    %c0_0 = arith.constant 0 : index
    %c0_1 = arith.constant 0 : index
    %0 = vector.load %arg1[%c0, %c0_0, %c0_1] : memref<1x16x64xf32, #tpu.memory_space<vmem>>, vector<1x16x64xf32>
    %1 = vector.shape_cast %0 : vector<1x16x64xf32> to vector<16x64xf32>
    %c0_2 = arith.constant 0 : index
    %c0_3 = arith.constant 0 : index
    %2 = vector.load %arg2[%c0_2, %c0_3] : memref<24x16xf32, #tpu.memory_space<vmem>>, vector<24x16xf32>
    %cst = arith.constant dense<0.000000e+00> : vector<24x64xf32>
    %3 = tpu.matmul %2, %1, %cst {dimension_numbers = #tpu.dot_dimension_numbers<[1], [0], [0], [1], [0, 0, 1, 1], [], []>} : vector<24x16xf32>, vector<16x64xf32>, vector<24x64xf32> -> vector<24x64xf32>
    %c0_4 = arith.constant 0 : index
    %c0_5 = arith.constant 0 : index
    %4 = vector.load %arg3[%c0_4, %c0_5] : memref<24x1xf32, #tpu.memory_space<vmem>>, vector<24x1xf32>
    %5 = vector.broadcast %4 : vector<24x1xf32> to vector<24x64xf32>
    %6 = arith.addf %3, %5 : vector<24x64xf32>
    %cst_6 = arith.constant 0.000000e+00 : f32
    %7 = vector.broadcast %cst_6 : f32 to vector<24x64xf32>
    %8 = arith.maximumf %6, %7 : vector<24x64xf32>
    %cst_7 = arith.constant 0.000000e+00 : f32
    %9 = vector.broadcast %cst_7 : f32 to vector<24x64xf32>
    %10 = arith.minimumf %6, %9 : vector<24x64xf32>
    %cst_8 = arith.constant 2.500000e-01 : f32
    %11 = vector.broadcast %cst_8 : f32 to vector<24x64xf32>
    %12 = arith.mulf %11, %10 : vector<24x64xf32>
    %13 = arith.addf %8, %12 : vector<24x64xf32>
    %c0_9 = arith.constant 0 : index
    %c0_10 = arith.constant 0 : index
    %14 = vector.load %arg7[%c0_9, %c0_10] : memref<24x64xf32, #tpu.memory_space<vmem>>, vector<24x64xf32>
    tpu.vector_store %arg7[%c0_9, %c0_10], %13 {strides = array<i32>} : memref<24x64xf32, #tpu.memory_space<vmem>>, vector<24x64xf32>,
    %c16 = arith.constant 16 : index
    %c0_11 = arith.constant 0 : index
    %15 = vector.load %arg7[%c16, %c0_11] : memref<24x64xf32, #tpu.memory_space<vmem>>, vector<8x64xf32>
    %16 = tpu.transpose %15, [1, 0] : vector<8x64xf32> -> vector<64x8xf32>
    %c0_12 = arith.constant 0 : index
    %c0_13 = arith.constant 0 : index
    %17 = vector.load %arg7[%c0_12, %c0_13] : memref<24x64xf32, #tpu.memory_space<vmem>>, vector<16x8xf32>
    %c0_14 = arith.constant 0 : index
    %c0_15 = arith.constant 0 : index
    %c0_16 = arith.constant 0 : index
    %18 = vector.load %arg8[%c0_14, %c0_15, %c0_16] : memref<16x8x8xf32, #tpu.memory_space<vmem>>, vector<16x1x8xf32>
    %19 = vector.shape_cast %18 : vector<16x1x8xf32> to vector<16x8xf32>
    %20 = vector.shape_cast %17 : vector<16x8xf32> to vector<16x1x8xf32>
    tpu.vector_store %arg8[%c0_14, %c0_15, %c0_16], %20 {strides = array<i32>} : memref<16x8x8xf32, #tpu.memory_space<vmem>>, vector<16x1x8xf32>,
    %21 = vector.extract_strided_slice %16 {offsets = [0, 0], sizes = [8, 8], strides = [1, 1]} : vector<64x8xf32> to vector<8x8xf32>
    %c0_17 = arith.constant 0 : index
    %c0_18 = arith.constant 0 : index
    %c0_19 = arith.constant 0 : index
    %22 = vector.load %arg9[%c0_17, %c0_18, %c0_19] : memref<8x8x8xf32, #tpu.memory_space<vmem>>, vector<1x8x8xf32>
    %23 = vector.shape_cast %22 : vector<1x8x8xf32> to vector<8x8xf32>
    %24 = vector.shape_cast %21 : vector<8x8xf32> to vector<1x8x8xf32>
    tpu.vector_store %arg9[%c0_17, %c0_18, %c0_19], %24 {strides = array<i32>} : memref<8x8x8xf32, #tpu.memory_space<vmem>>, vector<1x8x8xf32>,
    %c0_20 = arith.constant 0 : index
    %c8 = arith.constant 8 : index
    %25 = vector.load %arg7[%c0_20, %c8] : memref<24x64xf32, #tpu.memory_space<vmem>>, vector<16x8xf32>
    %c0_21 = arith.constant 0 : index
    %c1 = arith.constant 1 : index
    %c0_22 = arith.constant 0 : index
    %26 = vector.load %arg8[%c0_21, %c1, %c0_22] : memref<16x8x8xf32, #tpu.memory_space<vmem>>, vector<16x1x8xf32>
    %27 = vector.shape_cast %26 : vector<16x1x8xf32> to vector<16x8xf32>
    %28 = vector.shape_cast %25 : vector<16x8xf32> to vector<16x1x8xf32>
    tpu.vector_store %arg8[%c0_21, %c1, %c0_22], %28 {strides = array<i32>} : memref<16x8x8xf32, #tpu.memory_space<vmem>>, vector<16x1x8xf32>,
    %29 = vector.extract_strided_slice %16 {offsets = [8, 0], sizes = [8, 8], strides = [1, 1]} : vector<64x8xf32> to vector<8x8xf32>
    %c1_23 = arith.constant 1 : index
    %c0_24 = arith.constant 0 : index
    %c0_25 = arith.constant 0 : index
    %30 = vector.load %arg9[%c1_23, %c0_24, %c0_25] : memref<8x8x8xf32, #tpu.memory_space<vmem>>, vector<1x8x8xf32>
    %31 = vector.shape_cast %30 : vector<1x8x8xf32> to vector<8x8xf32>
    %32 = vector.shape_cast %29 : vector<8x8xf32> to vector<1x8x8xf32>
    tpu.vector_store %arg9[%c1_23, %c0_24, %c0_25], %32 {strides = array<i32>} : memref<8x8x8xf32, #tpu.memory_space<vmem>>, vector<1x8x8xf32>,
    %c0_26 = arith.constant 0 : index
    %c16_27 = arith.constant 16 : index
    %33 = vector.load %arg7[%c0_26, %c16_27] : memref<24x64xf32, #tpu.memory_space<vmem>>, vector<16x8xf32>
    %c0_28 = arith.constant 0 : index
    %c2 = arith.constant 2 : index
    %c0_29 = arith.constant 0 : index
    %34 = vector.load %arg8[%c0_28, %c2, %c0_29] : memref<16x8x8xf32, #tpu.memory_space<vmem>>, vector<16x1x8xf32>
    %35 = vector.shape_cast %34 : vector<16x1x8xf32> to vector<16x8xf32>
    %36 = vector.shape_cast %33 : vector<16x8xf32> to vector<16x1x8xf32>
    tpu.vector_store %arg8[%c0_28, %c2, %c0_29], %36 {strides = array<i32>} : memref<16x8x8xf32, #tpu.memory_space<vmem>>, vector<16x1x8xf32>,
    %37 = vector.extract_strided_slice %16 {offsets = [16, 0], sizes = [8, 8], strides = [1, 1]} : vector<64x8xf32> to vector<8x8xf32>
    %c2_30 = arith.constant 2 : index
    %c0_31 = arith.constant 0 : index
    %c0_32 = arith.constant 0 : index
    %38 = vector.load %arg9[%c2_30, %c0_31, %c0_32] : memref<8x8x8xf32, #tpu.memory_space<vmem>>, vector<1x8x8xf32>
    %39 = vector.shape_cast %38 : vector<1x8x8xf32> to vector<8x8xf32>
    %40 = vector.shape_cast %37 : vector<8x8xf32> to vector<1x8x8xf32>
    tpu.vector_store %arg9[%c2_30, %c0_31, %c0_32], %40 {strides = array<i32>} : memref<8x8x8xf32, #tpu.memory_space<vmem>>, vector<1x8x8xf32>,
    %c0_33 = arith.constant 0 : index
    %c24 = arith.constant 24 : index
    %41 = vector.load %arg7[%c0_33, %c24] : memref<24x64xf32, #tpu.memory_space<vmem>>, vector<16x8xf32>
    %c0_34 = arith.constant 0 : index
    %c3 = arith.constant 3 : index
    %c0_35 = arith.constant 0 : index
    %42 = vector.load %arg8[%c0_34, %c3, %c0_35] : memref<16x8x8xf32, #tpu.memory_space<vmem>>, vector<16x1x8xf32>
    %43 = vector.shape_cast %42 : vector<16x1x8xf32> to vector<16x8xf32>
    %44 = vector.shape_cast %41 : vector<16x8xf32> to vector<16x1x8xf32>
    tpu.vector_store %arg8[%c0_34, %c3, %c0_35], %44 {strides = array<i32>} : memref<16x8x8xf32, #tpu.memory_space<vmem>>, vector<16x1x8xf32>,
    %45 = vector.extract_strided_slice %16 {offsets = [24, 0], sizes = [8, 8], strides = [1, 1]} : vector<64x8xf32> to vector<8x8xf32>
    %c3_36 = arith.constant 3 : index
    %c0_37 = arith.constant 0 : index
    %c0_38 = arith.constant 0 : index
    %46 = vector.load %arg9[%c3_36, %c0_37, %c0_38] : memref<8x8x8xf32, #tpu.memory_space<vmem>>, vector<1x8x8xf32>
    %47 = vector.shape_cast %46 : vector<1x8x8xf32> to vector<8x8xf32>
    %48 = vector.shape_cast %45 : vector<8x8xf32> to vector<1x8x8xf32>
    tpu.vector_store %arg9[%c3_36, %c0_37, %c0_38], %48 {strides = array<i32>} : memref<8x8x8xf32, #tpu.memory_space<vmem>>, vector<1x8x8xf32>,
    %c0_39 = arith.constant 0 : index
    %c32 = arith.constant 32 : index
    %49 = vector.load %arg7[%c0_39, %c32] : memref<24x64xf32, #tpu.memory_space<vmem>>, vector<16x8xf32>
    %c0_40 = arith.constant 0 : index
    %c4 = arith.constant 4 : index
    %c0_41 = arith.constant 0 : index
    %50 = vector.load %arg8[%c0_40, %c4, %c0_41] : memref<16x8x8xf32, #tpu.memory_space<vmem>>, vector<16x1x8xf32>
    %51 = vector.shape_cast %50 : vector<16x1x8xf32> to vector<16x8xf32>
    %52 = vector.shape_cast %49 : vector<16x8xf32> to vector<16x1x8xf32>
    tpu.vector_store %arg8[%c0_40, %c4, %c0_41], %52 {strides = array<i32>} : memref<16x8x8xf32, #tpu.memory_space<vmem>>, vector<16x1x8xf32>,
    %53 = vector.extract_strided_slice %16 {offsets = [32, 0], sizes = [8, 8], strides = [1, 1]} : vector<64x8xf32> to vector<8x8xf32>
    %c4_42 = arith.constant 4 : index
    %c0_43 = arith.constant 0 : index
    %c0_44 = arith.constant 0 : index
    %54 = vector.load %arg9[%c4_42, %c0_43, %c0_44] : memref<8x8x8xf32, #tpu.memory_space<vmem>>, vector<1x8x8xf32>
    %55 = vector.shape_cast %54 : vector<1x8x8xf32> to vector<8x8xf32>
    %56 = vector.shape_cast %53 : vector<8x8xf32> to vector<1x8x8xf32>
    tpu.vector_store %arg9[%c4_42, %c0_43, %c0_44], %56 {strides = array<i32>} : memref<8x8x8xf32, #tpu.memory_space<vmem>>, vector<1x8x8xf32>,
    %c0_45 = arith.constant 0 : index
    %c40 = arith.constant 40 : index
    %57 = vector.load %arg7[%c0_45, %c40] : memref<24x64xf32, #tpu.memory_space<vmem>>, vector<16x8xf32>
    %c0_46 = arith.constant 0 : index
    %c5 = arith.constant 5 : index
    %c0_47 = arith.constant 0 : index
    %58 = vector.load %arg8[%c0_46, %c5, %c0_47] : memref<16x8x8xf32, #tpu.memory_space<vmem>>, vector<16x1x8xf32>
    %59 = vector.shape_cast %58 : vector<16x1x8xf32> to vector<16x8xf32>
    %60 = vector.shape_cast %57 : vector<16x8xf32> to vector<16x1x8xf32>
    tpu.vector_store %arg8[%c0_46, %c5, %c0_47], %60 {strides = array<i32>} : memref<16x8x8xf32, #tpu.memory_space<vmem>>, vector<16x1x8xf32>,
    %61 = vector.extract_strided_slice %16 {offsets = [40, 0], sizes = [8, 8], strides = [1, 1]} : vector<64x8xf32> to vector<8x8xf32>
    %c5_48 = arith.constant 5 : index
    %c0_49 = arith.constant 0 : index
    %c0_50 = arith.constant 0 : index
    %62 = vector.load %arg9[%c5_48, %c0_49, %c0_50] : memref<8x8x8xf32, #tpu.memory_space<vmem>>, vector<1x8x8xf32>
    %63 = vector.shape_cast %62 : vector<1x8x8xf32> to vector<8x8xf32>
    %64 = vector.shape_cast %61 : vector<8x8xf32> to vector<1x8x8xf32>
    tpu.vector_store %arg9[%c5_48, %c0_49, %c0_50], %64 {strides = array<i32>} : memref<8x8x8xf32, #tpu.memory_space<vmem>>, vector<1x8x8xf32>,
    %c0_51 = arith.constant 0 : index
    %c48 = arith.constant 48 : index
    %65 = vector.load %arg7[%c0_51, %c48] : memref<24x64xf32, #tpu.memory_space<vmem>>, vector<16x8xf32>
    %c0_52 = arith.constant 0 : index
    %c6 = arith.constant 6 : index
    %c0_53 = arith.constant 0 : index
    %66 = vector.load %arg8[%c0_52, %c6, %c0_53] : memref<16x8x8xf32, #tpu.memory_space<vmem>>, vector<16x1x8xf32>
    %67 = vector.shape_cast %66 : vector<16x1x8xf32> to vector<16x8xf32>
    %68 = vector.shape_cast %65 : vector<16x8xf32> to vector<16x1x8xf32>
    tpu.vector_store %arg8[%c0_52, %c6, %c0_53], %68 {strides = array<i32>} : memref<16x8x8xf32, #tpu.memory_space<vmem>>, vector<16x1x8xf32>,
    %69 = vector.extract_strided_slice %16 {offsets = [48, 0], sizes = [8, 8], strides = [1, 1]} : vector<64x8xf32> to vector<8x8xf32>
    %c6_54 = arith.constant 6 : index
    %c0_55 = arith.constant 0 : index
    %c0_56 = arith.constant 0 : index
    %70 = vector.load %arg9[%c6_54, %c0_55, %c0_56] : memref<8x8x8xf32, #tpu.memory_space<vmem>>, vector<1x8x8xf32>
    %71 = vector.shape_cast %70 : vector<1x8x8xf32> to vector<8x8xf32>
    %72 = vector.shape_cast %69 : vector<8x8xf32> to vector<1x8x8xf32>
    tpu.vector_store %arg9[%c6_54, %c0_55, %c0_56], %72 {strides = array<i32>} : memref<8x8x8xf32, #tpu.memory_space<vmem>>, vector<1x8x8xf32>,
    %c0_57 = arith.constant 0 : index
    %c56 = arith.constant 56 : index
    %73 = vector.load %arg7[%c0_57, %c56] : memref<24x64xf32, #tpu.memory_space<vmem>>, vector<16x8xf32>
    %c0_58 = arith.constant 0 : index
    %c7 = arith.constant 7 : index
    %c0_59 = arith.constant 0 : index
    %74 = vector.load %arg8[%c0_58, %c7, %c0_59] : memref<16x8x8xf32, #tpu.memory_space<vmem>>, vector<16x1x8xf32>
    %75 = vector.shape_cast %74 : vector<16x1x8xf32> to vector<16x8xf32>
    %76 = vector.shape_cast %73 : vector<16x8xf32> to vector<16x1x8xf32>
    tpu.vector_store %arg8[%c0_58, %c7, %c0_59], %76 {strides = array<i32>} : memref<16x8x8xf32, #tpu.memory_space<vmem>>, vector<16x1x8xf32>,
    %77 = vector.extract_strided_slice %16 {offsets = [56, 0], sizes = [8, 8], strides = [1, 1]} : vector<64x8xf32> to vector<8x8xf32>
    %c7_60 = arith.constant 7 : index
    %c0_61 = arith.constant 0 : index
    %c0_62 = arith.constant 0 : index
    %78 = vector.load %arg9[%c7_60, %c0_61, %c0_62] : memref<8x8x8xf32, #tpu.memory_space<vmem>>, vector<1x8x8xf32>
    %79 = vector.shape_cast %78 : vector<1x8x8xf32> to vector<8x8xf32>
    %80 = vector.shape_cast %77 : vector<8x8xf32> to vector<1x8x8xf32>
    tpu.vector_store %arg9[%c7_60, %c0_61, %c0_62], %80 {strides = array<i32>} : memref<8x8x8xf32, #tpu.memory_space<vmem>>, vector<1x8x8xf32>,
    %c0_63 = arith.constant 0 : index
    %c0_64 = arith.constant 0 : index
    %c0_65 = arith.constant 0 : index
    %81 = vector.load %arg8[%c0_63, %c0_64, %c0_65] : memref<16x8x8xf32, #tpu.memory_space<vmem>>, vector<16x8x8xf32>
    %82 = vector.extract_strided_slice %81 {offsets = [0, 0, 0], sizes = [8, 8, 8], strides = [1, 1, 1]} : vector<16x8x8xf32> to vector<8x8x8xf32>
    %83 = vector.extract_strided_slice %81 {offsets = [8, 0, 0], sizes = [8, 8, 8], strides = [1, 1, 1]} : vector<16x8x8xf32> to vector<8x8x8xf32>
    %c0_66 = arith.constant 0 : index
    %c0_67 = arith.constant 0 : index
    %c0_68 = arith.constant 0 : index
    %84 = vector.load %arg9[%c0_66, %c0_67, %c0_68] : memref<8x8x8xf32, #tpu.memory_space<vmem>>, vector<8x8x8xf32>
    "tpu.trace_start"() <{level = 10 : i32, message = "itf,ijf->itj"}> : () -> ()
    %cst_69 = arith.constant dense<0.000000e+00> : vector<8x8x8xf32>
    %85 = tpu.matmul %82, %84, %cst_69 {dimension_numbers = #tpu.dot_dimension_numbers<[2], [2], [1], [1], [0, 0, 0, 1, 1, 1], [0], [0]>} : vector<8x8x8xf32>, vector<8x8x8xf32>, vector<8x8x8xf32> -> vector<8x8x8xf32>
    "tpu.trace_stop"() : () -> ()
    %cst_70 = arith.constant dense<0xFF800000> : vector<8x8xf32>
    %86 = vector.multi_reduction <maximumf>, %85, %cst_70 [2] : vector<8x8x8xf32> to vector<8x8xf32>
    %87 = vector.shape_cast %86 : vector<8x8xf32> to vector<8x8x1xf32>
    %88 = vector.broadcast %87 : vector<8x8x1xf32> to vector<8x8x8xf32>
    %89 = arith.subf %85, %88 : vector<8x8x8xf32>
    %90 = math.exp %89 : vector<8x8x8xf32>
    %cst_71 = arith.constant dense<0.000000e+00> : vector<8x8xf32>
    %91 = vector.multi_reduction <add>, %90, %cst_71 [2] : vector<8x8x8xf32> to vector<8x8xf32>
    %92 = vector.shape_cast %91 : vector<8x8xf32> to vector<8x8x1xf32>
    %93 = tpu.reciprocal %92 {approx = true} : vector<8x8x1xf32> -> vector<8x8x1xf32>
    %94 = vector.broadcast %93 : vector<8x8x1xf32> to vector<8x8x8xf32>
    %95 = arith.mulf %90, %94 : vector<8x8x8xf32>
    "tpu.trace_start"() <{level = 10 : i32, message = "itu,iuj->itj"}> : () -> ()
    %cst_72 = arith.constant dense<0.000000e+00> : vector<8x8x8xf32>
    %96 = tpu.matmul %95, %83, %cst_72 {dimension_numbers = #tpu.dot_dimension_numbers<[2], [1], [1], [2], [0, 0, 0, 1, 1, 2], [0], [0]>} : vector<8x8x8xf32>, vector<8x8x8xf32>, vector<8x8x8xf32> -> vector<8x8x8xf32>
    "tpu.trace_stop"() : () -> ()
    %97 = vector.extract_strided_slice %96 {offsets = [0, 0, 0], sizes = [1, 8, 8], strides = [1, 1, 1]} : vector<8x8x8xf32> to vector<1x8x8xf32>
    %98 = vector.shape_cast %97 : vector<1x8x8xf32> to vector<8x8xf32>
    %c0_73 = arith.constant 0 : index
    %c0_74 = arith.constant 0 : index
    %99 = vector.load %arg10[%c0_73, %c0_74] : memref<8x64xf32, #tpu.memory_space<vmem>>, vector<8x8xf32>
    tpu.vector_store %arg10[%c0_73, %c0_74], %98 {strides = array<i32>} : memref<8x64xf32, #tpu.memory_space<vmem>>, vector<8x8xf32>,
    %100 = vector.extract_strided_slice %96 {offsets = [1, 0, 0], sizes = [1, 8, 8], strides = [1, 1, 1]} : vector<8x8x8xf32> to vector<1x8x8xf32>
    %101 = vector.shape_cast %100 : vector<1x8x8xf32> to vector<8x8xf32>
    %c0_75 = arith.constant 0 : index
    %c8_76 = arith.constant 8 : index
    %102 = vector.load %arg10[%c0_75, %c8_76] : memref<8x64xf32, #tpu.memory_space<vmem>>, vector<8x8xf32>
    tpu.vector_store %arg10[%c0_75, %c8_76], %101 {strides = array<i32>} : memref<8x64xf32, #tpu.memory_space<vmem>>, vector<8x8xf32>,
    %103 = vector.extract_strided_slice %96 {offsets = [2, 0, 0], sizes = [1, 8, 8], strides = [1, 1, 1]} : vector<8x8x8xf32> to vector<1x8x8xf32>
    %104 = vector.shape_cast %103 : vector<1x8x8xf32> to vector<8x8xf32>
    %c0_77 = arith.constant 0 : index
    %c16_78 = arith.constant 16 : index
    %105 = vector.load %arg10[%c0_77, %c16_78] : memref<8x64xf32, #tpu.memory_space<vmem>>, vector<8x8xf32>
    tpu.vector_store %arg10[%c0_77, %c16_78], %104 {strides = array<i32>} : memref<8x64xf32, #tpu.memory_space<vmem>>, vector<8x8xf32>,
    %106 = vector.extract_strided_slice %96 {offsets = [3, 0, 0], sizes = [1, 8, 8], strides = [1, 1, 1]} : vector<8x8x8xf32> to vector<1x8x8xf32>
    %107 = vector.shape_cast %106 : vector<1x8x8xf32> to vector<8x8xf32>
    %c0_79 = arith.constant 0 : index
    %c24_80 = arith.constant 24 : index
    %108 = vector.load %arg10[%c0_79, %c24_80] : memref<8x64xf32, #tpu.memory_space<vmem>>, vector<8x8xf32>
    tpu.vector_store %arg10[%c0_79, %c24_80], %107 {strides = array<i32>} : memref<8x64xf32, #tpu.memory_space<vmem>>, vector<8x8xf32>,
    %109 = vector.extract_strided_slice %96 {offsets = [4, 0, 0], sizes = [1, 8, 8], strides = [1, 1, 1]} : vector<8x8x8xf32> to vector<1x8x8xf32>
    %110 = vector.shape_cast %109 : vector<1x8x8xf32> to vector<8x8xf32>
    %c0_81 = arith.constant 0 : index
    %c32_82 = arith.constant 32 : index
    %111 = vector.load %arg10[%c0_81, %c32_82] : memref<8x64xf32, #tpu.memory_space<vmem>>, vector<8x8xf32>
    tpu.vector_store %arg10[%c0_81, %c32_82], %110 {strides = array<i32>} : memref<8x64xf32, #tpu.memory_space<vmem>>, vector<8x8xf32>,
    %112 = vector.extract_strided_slice %96 {offsets = [5, 0, 0], sizes = [1, 8, 8], strides = [1, 1, 1]} : vector<8x8x8xf32> to vector<1x8x8xf32>
    %113 = vector.shape_cast %112 : vector<1x8x8xf32> to vector<8x8xf32>
    %c0_83 = arith.constant 0 : index
    %c40_84 = arith.constant 40 : index
    %114 = vector.load %arg10[%c0_83, %c40_84] : memref<8x64xf32, #tpu.memory_space<vmem>>, vector<8x8xf32>
    tpu.vector_store %arg10[%c0_83, %c40_84], %113 {strides = array<i32>} : memref<8x64xf32, #tpu.memory_space<vmem>>, vector<8x8xf32>,
    %115 = vector.extract_strided_slice %96 {offsets = [6, 0, 0], sizes = [1, 8, 8], strides = [1, 1, 1]} : vector<8x8x8xf32> to vector<1x8x8xf32>
    %116 = vector.shape_cast %115 : vector<1x8x8xf32> to vector<8x8xf32>
    %c0_85 = arith.constant 0 : index
    %c48_86 = arith.constant 48 : index
    %117 = vector.load %arg10[%c0_85, %c48_86] : memref<8x64xf32, #tpu.memory_space<vmem>>, vector<8x8xf32>
    tpu.vector_store %arg10[%c0_85, %c48_86], %116 {strides = array<i32>} : memref<8x64xf32, #tpu.memory_space<vmem>>, vector<8x8xf32>,
    %118 = vector.extract_strided_slice %96 {offsets = [7, 0, 0], sizes = [1, 8, 8], strides = [1, 1, 1]} : vector<8x8x8xf32> to vector<1x8x8xf32>
    %119 = vector.shape_cast %118 : vector<1x8x8xf32> to vector<8x8xf32>
    %c0_87 = arith.constant 0 : index
    %c56_88 = arith.constant 56 : index
    %120 = vector.load %arg10[%c0_87, %c56_88] : memref<8x64xf32, #tpu.memory_space<vmem>>, vector<8x8xf32>
    tpu.vector_store %arg10[%c0_87, %c56_88], %119 {strides = array<i32>} : memref<8x64xf32, #tpu.memory_space<vmem>>, vector<8x8xf32>,
    %c0_89 = arith.constant 0 : index
    %c0_90 = arith.constant 0 : index
    %121 = vector.load %arg4[%c0_89, %c0_90] : memref<16x8xf32, #tpu.memory_space<vmem>>, vector<16x8xf32>
    %c0_91 = arith.constant 0 : index
    %c0_92 = arith.constant 0 : index
    %122 = vector.load %arg10[%c0_91, %c0_92] : memref<8x64xf32, #tpu.memory_space<vmem>>, vector<8x64xf32>
    %cst_93 = arith.constant dense<0.000000e+00> : vector<16x64xf32>
    %123 = tpu.matmul %121, %122, %cst_93 {dimension_numbers = #tpu.dot_dimension_numbers<[1], [0], [0], [1], [0, 0, 1, 1], [], []>} : vector<16x8xf32>, vector<8x64xf32>, vector<16x64xf32> -> vector<16x64xf32>
    %c0_94 = arith.constant 0 : index
    %c0_95 = arith.constant 0 : index
    %124 = vector.load %arg5[%c0_94, %c0_95] : memref<16x1xf32, #tpu.memory_space<vmem>>, vector<16x1xf32>
    %125 = vector.broadcast %124 : vector<16x1xf32> to vector<16x64xf32>
    %126 = arith.addf %123, %125 : vector<16x64xf32>
    %cst_96 = arith.constant 0.000000e+00 : f32
    %127 = vector.broadcast %cst_96 : f32 to vector<16x64xf32>
    %128 = arith.maximumf %126, %127 : vector<16x64xf32>
    %cst_97 = arith.constant 0.000000e+00 : f32
    %129 = vector.broadcast %cst_97 : f32 to vector<16x64xf32>
    %130 = arith.minimumf %126, %129 : vector<16x64xf32>
    %cst_98 = arith.constant 2.500000e-01 : f32
    %131 = vector.broadcast %cst_98 : f32 to vector<16x64xf32>
    %132 = arith.mulf %131, %130 : vector<16x64xf32>
    %133 = arith.addf %128, %132 : vector<16x64xf32>
    %134 = arith.addf %133, %1 : vector<16x64xf32>
    %c0_99 = arith.constant 0 : index
    %c0_100 = arith.constant 0 : index
    %c0_101 = arith.constant 0 : index
    %135 = vector.load %arg6[%c0_99, %c0_100, %c0_101] : memref<1x16x64xf32, #tpu.memory_space<vmem>>, vector<1x16x64xf32>
    %136 = vector.shape_cast %135 : vector<1x16x64xf32> to vector<16x64xf32>
    %137 = vector.shape_cast %134 : vector<16x64xf32> to vector<1x16x64xf32>
    tpu.vector_store %arg6[%c0_99, %c0_100, %c0_101], %137 {strides = array<i32>} : memref<1x16x64xf32, #tpu.memory_space<vmem>>, vector<1x16x64xf32>,
    return
  }
  func.func @transform_0(%arg0: i32) -> (i32, i32, i32) {
    %c0_i32 = arith.constant 0 : i32
    %c0_i32_0 = arith.constant 0 : i32
    %c0_i32_1 = arith.constant 0 : i32
    return %arg0, %c0_i32, %c0_i32_0 : i32, i32, i32
  }
  func.func @transform_1(%arg0: i32) -> (i32, i32) {
    %c0_i32 = arith.constant 0 : i32
    %c0_i32_0 = arith.constant 0 : i32
    %c0_i32_1 = arith.constant 0 : i32
    return %c0_i32, %c0_i32_0 : i32, i32
  }
  func.func @transform_2(%arg0: i32) -> (i32, i32) {
    %c0_i32 = arith.constant 0 : i32
    %c0_i32_0 = arith.constant 0 : i32
    %c0_i32_1 = arith.constant 0 : i32
    return %c0_i32, %c0_i32_0 : i32, i32
  }
  func.func @transform_3(%arg0: i32) -> (i32, i32) {
    %c0_i32 = arith.constant 0 : i32
    %c0_i32_0 = arith.constant 0 : i32
    %c0_i32_1 = arith.constant 0 : i32
    return %c0_i32, %c0_i32_0 : i32, i32
  }
  func.func @transform_4(%arg0: i32) -> (i32, i32) {
    %c0_i32 = arith.constant 0 : i32
    %c0_i32_0 = arith.constant 0 : i32
    %c0_i32_1 = arith.constant 0 : i32
    return %c0_i32, %c0_i32_0 : i32, i32
  }
  func.func @transform_5(%arg0: i32) -> (i32, i32, i32) {
    %c0_i32 = arith.constant 0 : i32
    %c0_i32_0 = arith.constant 0 : i32
    %c0_i32_1 = arith.constant 0 : i32
    return %arg0, %c0_i32, %c0_i32_0 : i32, i32, i32
  }
}

</mosaic_0001>

<llo_original>
// kernel: temporal_self_attention.1
$region0: #{temporal_self_attention.1}
  #allocation0 [shape = 'u32[]', space=smem, size = 0x4, offset = 0x4, fixed_abs, tag = 'smem constant byte address 0x4 - core index']
  #allocation1 [shape = 'u32[144,128]{1,0:T(1,128)}', space=vmem, size = 0x12000, scoped, tag = 'internal scratch']
  #allocation2 [shape = 'f32[24,64]{1,0:T(8,128)}', space=vmem, size = 0x3000, scoped, tag = 'scratch operand']
  #allocation3 [shape = 'f32[16,8,8]{2,1,0:T(8,128)}', space=vmem, size = 0x10000, scoped, tag = 'scratch operand']
  #allocation4 [shape = 'f32[8,8,8]{2,1,0:T(8,128)}', space=vmem, size = 0x8000, scoped, tag = 'scratch operand']
  #allocation5 [shape = 'f32[8,64]{1,0:T(8,128)}', space=vmem, size = 0x1000, scoped, tag = 'scratch operand']
  %s0 = inlined_call_operand.vmem [shape: f32[2,16,64], index: 0, kind: input, shape index: {}, may-alias: {0,5}]
  %s1 = inlined_call_operand.vmem [shape: f32[24,16], index: 1, kind: input, shape index: {}]
  %s2 = inlined_call_operand.vmem [shape: f32[24,1], index: 2, kind: input, shape index: {}]
  %s3 = inlined_call_operand.vmem [shape: f32[16,8], index: 3, kind: input, shape index: {}]
  %s4 = inlined_call_operand.vmem [shape: f32[16,1], index: 4, kind: input, shape index: {}]
  %s5 = inlined_call_operand.vmem [shape: f32[2,16,64], index: 5, kind: output, shape index: {}, may-alias: {0,5}]
  %s6 = sld [smem:[#allocation0]]
  $region53: #{temporal_self_attention.1} parent=0
    _
  %s8 = ssub.s32 1, %s6
  %s9 = scalar_select 0, %s8, %s6
  loop: start=0, step=1, limit=4
  $region2: #{temporal_self_attention.1} parent=0 // loop_pre_header
    _
  $region3: #{temporal_self_attention.1} parent=0 // loop_header
    %s11 = sphi 0, %s15
    %p12 = scmp.ge.s32.totalorder %s11, 4
    %s21 = sphi 0, %s23
    %s24 = sphi 0, %s21
    %s25 = sphi 0, %s24
    %s41 = sphi 0, %s25
    %s45 = sphi 0, %s45
    %s47 = sphi 0, %s45
    %s48 = sphi 0, %s47
    %s62 = sphi 0, %s48
    %s66 = sphi 0, %s66
    %s68 = sphi 0, %s66
    %s69 = sphi 0, %s68
    %s83 = sphi 0, %s69
    %s87 = sphi 0, %s87
    %s89 = sphi 0, %s87
    %s90 = sphi 0, %s89
    %s104 = sphi 0, %s90
    %s108 = sphi 0, %s108
    %s110 = sphi 0, %s108
    %s111 = sphi 0, %s110
    %s125 = sphi 0, %s111
    %s131 = sphi 0, %s133
    %s134 = sphi 0, %s131
    %s135 = sphi 0, %s134
    %s151 = sphi 0, %s135
  $region4: #{temporal_self_attention.1} parent=0 // loop_header_branch
    %14 = sbr.rel (%p12) target = $region8
  $region5: #{temporal_self_attention.1} parent=0 // loop_body
    %s16 = ssub.s32 %s11, 1
    %s17 = ssub.s32 %s11, 2
    %s18 = sadd.s32 %s11, 1
    %s19 = ssub.s32 %s11, %s18
    %p20 = scmp.eq.s32.totalorder %s19, 0
    %s22 = sadd.s32 %s21, 1
    %s23 = scalar_select %p20, %s21, %s22
    %p26 = pneg %p20
    %p27 = scmp.eq.s32.totalorder %s11, 1
    %p28 = por %p26, %p27
    %p29 = scmp.ne.s32.totalorder %s21, %s24
    %p30 = scmp.eq.s32.totalorder %s11, 0
    %p31 = por %p29, %p30
    %p32 = scmp.ne.s32.totalorder %s21, %s24
    %p33 = scmp.eq.s32.totalorder %s16, 1
    %p34 = por %p32, %p33
    %p35 = scmp.ne.s32.totalorder %s24, %s25
    %p36 = scmp.eq.s32.totalorder %s16, 0
    %p37 = por %p35, %p36
    %p38 = scmp.ne.s32.totalorder %s24, %s25
    %p39 = scmp.eq.s32.totalorder %s17, 1
    %p40 = por %p38, %p39
    %p42 = scmp.ne.s32.totalorder %s25, %s41
    %p43 = scmp.eq.s32.totalorder %s17, 0
    %p44 = por %p42, %p43
    %s46 = sadd.s32 %s45, 1
    %p49 = scmp.eq.s32.totalorder %s11, 1
    %p50 = scmp.ne.s32.totalorder %s45, %s47
    %p51 = scmp.eq.s32.totalorder %s11, 0
    %p52 = por %p50, %p51
    %p53 = scmp.ne.s32.totalorder %s45, %s47
    %p54 = scmp.eq.s32.totalorder %s16, 1
    %p55 = por %p53, %p54
    %p56 = scmp.ne.s32.totalorder %s47, %s48
    %p57 = scmp.eq.s32.totalorder %s16, 0
    %p58 = por %p56, %p57
    %p59 = scmp.ne.s32.totalorder %s47, %s48
    %p60 = scmp.eq.s32.totalorder %s17, 1
    %p61 = por %p59, %p60
    %p63 = scmp.ne.s32.totalorder %s48, %s62
    %p64 = scmp.eq.s32.totalorder %s17, 0
    %p65 = por %p63, %p64
    %s67 = sadd.s32 %s66, 1
    %p70 = scmp.eq.s32.totalorder %s11, 1
    %p71 = scmp.ne.s32.totalorder %s66, %s68
    %p72 = scmp.eq.s32.totalorder %s11, 0
    %p73 = por %p71, %p72
    %p74 = scmp.ne.s32.totalorder %s66, %s68
    %p75 = scmp.eq.s32.totalorder %s16, 1
    %p76 = por %p74, %p75
    %p77 = scmp.ne.s32.totalorder %s68, %s69
    %p78 = scmp.eq.s32.totalorder %s16, 0
    %p79 = por %p77, %p78
    %p80 = scmp.ne.s32.totalorder %s68, %s69
    %p81 = scmp.eq.s32.totalorder %s17, 1
    %p82 = por %p80, %p81
    %p84 = scmp.ne.s32.totalorder %s69, %s83
    %p85 = scmp.eq.s32.totalorder %s17, 0
    %p86 = por %p84, %p85
    %s88 = sadd.s32 %s87, 1
    %p91 = scmp.eq.s32.totalorder %s11, 1
    %p92 = scmp.ne.s32.totalorder %s87, %s89
    %p93 = scmp.eq.s32.totalorder %s11, 0
    %p94 = por %p92, %p93
    %p95 = scmp.ne.s32.totalorder %s87, %s89
    %p96 = scmp.eq.s32.totalorder %s16, 1
    %p97 = por %p95, %p96
    %p98 = scmp.ne.s32.totalorder %s89, %s90
    %p99 = scmp.eq.s32.totalorder %s16, 0
    %p100 = por %p98, %p99
    %p101 = scmp.ne.s32.totalorder %s89, %s90
    %p102 = scmp.eq.s32.totalorder %s17, 1
    %p103 = por %p101, %p102
    %p105 = scmp.ne.s32.totalorder %s90, %s104
    %p106 = scmp.eq.s32.totalorder %s17, 0
    %p107 = por %p105, %p106
    %s109 = sadd.s32 %s108, 1
    %p112 = scmp.eq.s32.totalorder %s11, 1
    %p113 = scmp.ne.s32.totalorder %s108, %s110
    %p114 = scmp.eq.s32.totalorder %s11, 0
    %p115 = por %p113, %p114
    %p116 = scmp.ne.s32.totalorder %s108, %s110
    %p117 = scmp.eq.s32.totalorder %s16, 1
    %p118 = por %p116, %p117
    %p119 = scmp.ne.s32.totalorder %s110, %s111
    %p120 = scmp.eq.s32.totalorder %s16, 0
    %p121 = por %p119, %p120
    %p122 = scmp.ne.s32.totalorder %s110, %s111
    %p123 = scmp.eq.s32.totalorder %s17, 1
    %p124 = por %p122, %p123
    %p126 = scmp.ne.s32.totalorder %s111, %s125
    %p127 = scmp.eq.s32.totalorder %s17, 0
    %p128 = por %p126, %p127
    %s129 = ssub.s32 %s11, %s18
    %p130 = scmp.eq.s32.totalorder %s129, 0
    %s132 = sadd.s32 %s131, 1
    %s133 = scalar_select %p130, %s131, %s132
    %p136 = pneg %p130
    %p137 = scmp.eq.s32.totalorder %s11, 1
    %p138 = por %p136, %p137
    %p139 = scmp.ne.s32.totalorder %s131, %s134
    %p140 = scmp.eq.s32.totalorder %s11, 0
    %p141 = por %p139, %p140
    %p142 = scmp.ne.s32.totalorder %s131, %s134
    %p143 = scmp.eq.s32.totalorder %s16, 1
    %p144 = por %p142, %p143
    %p145 = scmp.ne.s32.totalorder %s134, %s135
    %p146 = scmp.eq.s32.totalorder %s16, 0
    %p147 = por %p145, %p146
    %p148 = scmp.ne.s32.totalorder %s134, %s135
    %p149 = scmp.eq.s32.totalorder %s17, 1
    %p150 = por %p148, %p149
    %p152 = scmp.ne.s32.totalorder %s135, %s151
    %p153 = scmp.eq.s32.totalorder %s17, 0
    %p154 = por %p152, %p153
    %p155 = scmp.le.s32.totalorder 1, %s11
    %p156 = scmp.lt.s32.totalorder %s11, 3
    %p157 = pnand %p155, %p156
    %p158 = pneg %p157
    // Predicated region
    $region9: #{temporal_self_attention.1} parent=5 // pred_check
      _
    $region10: #{temporal_self_attention.1} parent=5 // pred_check_branch
      %160 = sbr.rel (%p157) target = $region12
    $region11: #{temporal_self_attention.1} parent=5 // pred_region
      %s161 = ssub.s32 %s11, 1
      // Predicated region
      $region13: #{temporal_self_attention.1} parent=11 // pred_check
        %p162 = pneg %p58
      $region14: #{temporal_self_attention.1} parent=11 // pred_check_branch
        %164 = sbr.rel (%p162) target = $region16
      $region15: #{temporal_self_attention.1} parent=11 // pred_region
        _
      $region16: #{temporal_self_attention.1} parent=11 // pred_fallthru
        _
      // Predicated region
      $region17: #{temporal_self_attention.1} parent=11 // pred_check
        %p165 = pneg %p79
      $region18: #{temporal_self_attention.1} parent=11 // pred_check_branch
        %167 = sbr.rel (%p165) target = $region20
      $region19: #{temporal_self_attention.1} parent=11 // pred_region
        _
      $region20: #{temporal_self_attention.1} parent=11 // pred_fallthru
        _
      // Predicated region
      $region21: #{temporal_self_attention.1} parent=11 // pred_check
        %p168 = pneg %p100
      $region22: #{temporal_self_attention.1} parent=11 // pred_check_branch
        %170 = sbr.rel (%p168) target = $region24
      $region23: #{temporal_self_attention.1} parent=11 // pred_region
        _
      $region24: #{temporal_self_attention.1} parent=11 // pred_fallthru
        _
      // Predicated region
      $region25: #{temporal_self_attention.1} parent=11 // pred_check
        %p171 = pneg %p121
      $region26: #{temporal_self_attention.1} parent=11 // pred_check_branch
        %173 = sbr.rel (%p171) target = $region28
      $region27: #{temporal_self_attention.1} parent=11 // pred_region
        _
      $region28: #{temporal_self_attention.1} parent=11 // pred_fallthru
        _
    $region12: #{temporal_self_attention.1} parent=5 // pred_fallthru
      _
    %p174 = scmp.lt.s32.totalorder %s11, 2
    // Predicated region
    $region29: #{temporal_self_attention.1} parent=5 // pred_check
      %p175 = pneg %p174
    $region30: #{temporal_self_attention.1} parent=5 // pred_check_branch
      %177 = sbr.rel (%p175) target = $region32
    $region31: #{temporal_self_attention.1} parent=5 // pred_region
      // Predicated region
      $region33: #{temporal_self_attention.1} parent=31 // pred_check
        %p178 = pneg %p31
      $region34: #{temporal_self_attention.1} parent=31 // pred_check_branch
        %180 = sbr.rel (%p178) target = $region36
      $region35: #{temporal_self_attention.1} parent=31 // pred_region
        %p181 = scmp.lt.s32.totalorder %s11, 1
        %s182 = scalar_select %p181, %s11, 1
        %s183 = smul.addr %s182, 2
        %s184 = smul.addr %s183, 8
        %s185 = scalar_lea.vmem %s0, %s184
      $region36: #{temporal_self_attention.1} parent=31 // pred_fallthru
        _
    $region32: #{temporal_self_attention.1} parent=5 // pred_fallthru
      _
    %p186 = scmp.le.s32.totalorder 1, %s11
    %p187 = scmp.lt.s32.totalorder %s11, 3
    %p188 = pnand %p186, %p187
    %p189 = pneg %p188
    // Predicated region
    $region37: #{temporal_self_attention.1} parent=5 // pred_check
      _
    $region38: #{temporal_self_attention.1} parent=5 // pred_check_branch
      %191 = sbr.rel (%p188) target = $region40
    $region39: #{temporal_self_attention.1} parent=5 // pred_region
      %s192 = ssub.s32 %s11, 1
      %p193 = scmp.lt.s32.totalorder %s16, 1
      %s194 = scalar_select %p193, %s16, 1
      %s195 = smul.addr %s194, 2
      %s196 = smul.addr %s195, 8
      %s197 = scalar_lea.vmem %s0, %s196
      %p198 = pneg %p37
      %p199 = pneg %p34
      %p200 = pneg %p58
      %p201 = pneg %p55
      %p202 = pneg %p79
      %p203 = pneg %p76
      %p204 = pneg %p100
      %p205 = pneg %p97
      %p206 = pneg %p121
      %p207 = pneg %p118
      %p208 = pneg %p147
      %p209 = pneg %p144
      %p210 = scmp.lt.s32.totalorder %s16, 1
      %s211 = scalar_select %p210, %s16, 1
      %s212 = smul.addr %s211, 2
      %s213 = smul.addr %s212, 8
      %s214 = scalar_lea.vmem %s5, %s213
      %p215 = scmp.lt.s32.totalorder %s16, 1
      %s216 = scalar_select %p215, %s16, 1
      %s217 = smul.addr %s216, 2
      %s218 = smul.addr %s217, 8
      %s219 = scalar_lea.vmem %s0, %s218
      %p220 = scmp.lt.s32.totalorder %s16, 1
      %s221 = scalar_select %p220, %s16, 1
      %s222 = smul.addr %s221, 2
      %s223 = smul.addr %s222, 8
      %s224 = scalar_lea.vmem %s5, %s223
      %v225 = vld [vmem:[%s219] sm:$0xff]
      %v226 = vld [vmem:[%s219 + $0x8] sm:$0xff]
      %v227 = vld [vmem:[%s1] sm:$0xff]
      %v228 = vld [vmem:[%s1 + $0x8] sm:$0xff]
      %v229 = vld [vmem:[%s1 + $0x10] sm:$0xff]
      %v230 = vld [vmem:[%s2] sm:$0xff]
      %v231 = vld [vmem:[%s2 + $0x8] sm:$0xff]
      %v232 = vld [vmem:[%s2 + $0x10] sm:$0xff]
      %234 = vset.pattern.permute.xlu0 0
      %235 = vperm.xlu0 %234, %v230
      %v236 = vpop.permute.xlu0 %235
      %239 = vset.pattern.permute.xlu0 0
      %240 = vperm.xlu0 %239, %v231
      %v241 = vpop.permute.xlu0 %240
      %244 = vset.pattern.permute.xlu0 0
      %245 = vperm.xlu0 %244, %v232
      %v246 = vpop.permute.xlu0 %245
      %vm248 = vcmask 130048
      %v250 = vsel %vm248, %v227, 0
      %v253 = vsel %vm248, %v228, 0
      %v256 = vsel %vm248, %v229, 0
      %258 = vmatprep.subr.mxu0 0.0
      %259 = vmatpush1.msra.mxu0 %v225
      %260 = vmatprep.subr.mxu0 0.0
      %261 = vmatpush1.msra.mxu0 %v226
      %262 = vmatprep.subr.mxu0 0.0
      %263 = vmatpush1.msra.mxu0 0.0
      %264 = vmatprep.subr.mxu0 0.0
      %265 = vmatpush1.msra.mxu0 0.0
      %266 = vmatprep.subr.mxu0 0.0
      %267 = vmatpush1.msra.mxu0 0.0
      %268 = vmatprep.subr.mxu0 0.0
      %269 = vmatpush1.msra.mxu0 0.0
      %270 = vmatprep.subr.mxu0 0.0
      %271 = vmatpush1.msra.mxu0 0.0
      %272 = vmatprep.subr.mxu0 0.0
      %273 = vmatpush1.msra.mxu0 0.0
      %274 = vmatprep.subr.mxu0 0.0
      %275 = vmatpush1.msra.mxu0 0.0
      %276 = vmatprep.subr.mxu0 0.0
      %277 = vmatpush1.msra.mxu0 0.0
      %278 = vmatprep.subr.mxu0 0.0
      %279 = vmatpush1.msra.mxu0 0.0
      %280 = vmatprep.subr.mxu0 0.0
      %281 = vmatpush1.msra.mxu0 0.0
      %282 = vmatprep.subr.mxu0 0.0
      %283 = vmatpush1.msra.mxu0 0.0
      %284 = vmatprep.subr.mxu0 0.0
      %285 = vmatpush1.msra.mxu0 0.0
      %286 = vmatprep.subr.mxu0 0.0
      %287 = vmatpush1.msra.mxu0 0.0
      %288 = vmatprep.subr.mxu0 0.0
      %289 = vmatpush1.msra.mxu0 0.0
      %290 = vmatprep.subr.mxu0 0.0
      %291 = vmatpush1.msra.mxu0 0.0
      %292 = vmatprep.subr.mxu0 0.0
      %293 = vmatpush1.msra.mxu0 0.0
      %294 = vmatprep.subr.mxu0 0.0
      %295 = vmatpush1.msra.mxu0 0.0
      %296 = vmatprep.subr.mxu0 0.0
      %297 = vmatpush1.msra.mxu0 0.0
      %298 = vmatprep.subr.mxu0 0.0
      %299 = vmatpush1.msra.mxu0 0.0
      %300 = vmatprep.subr.mxu0 0.0
      %301 = vmatpush1.msra.mxu0 0.0
      %302 = vmatprep.subr.mxu0 0.0
      %303 = vmatpush1.msra.mxu0 0.0
      %304 = vmatprep.subr.mxu0 0.0
      %305 = vmatpush1.msra.mxu0 0.0
      %306 = vmatprep.subr.mxu0 0.0
      %307 = vmatpush1.msra.mxu0 0.0
      %308 = vmatprep.subr.mxu0 0.0
      %309 = vmatpush1.msra.mxu0 0.0
      %310 = vmatprep.subr.mxu0 0.0
      %311 = vmatpush1.msra.mxu0 0.0
      %312 = vmatprep.subr.mxu0 0.0
      %313 = vmatpush1.msra.mxu0 0.0
      %314 = vmatprep.subr.mxu0 0.0
      %315 = vmatpush1.msra.mxu0 0.0
      %316 = vmatprep.subr.mxu0 0.0
      %317 = vmatpush1.msra.mxu0 0.0
      %318 = vmatprep.subr.mxu0 0.0
      %319 = vmatpush1.msra.mxu0 0.0
      %320 = vmatprep.subr.mxu0 0.0
      %321 = vmatpush1.msra.mxu0 0.0
      %322 = vmatprep.mubr.f32.mxu0 0.0
      %323 = vmatmul.mubr.f32.gmra.mrb[0].mxu0 %v250
      %v324 = vpop.f32.mrb[0].mxu0
      %v325 = vadd.f32 %v236, %v324
      %v326 = vpop.f32.mrb[0].mxu0
      %327 = vmatprep.mubr.f32.mxu0 0.0
      %328 = vmatmul.mubr.f32.gmra.mrb[0].mxu0 %v253
      %v329 = vpop.f32.mrb[0].mxu0
      %v330 = vadd.f32 %v241, %v329
      %v331 = vpop.f32.mrb[0].mxu0
      %332 = vmatprep.mubr.f32.mxu0 0.0
      %333 = vmatmul.mubr.f32.gmra.mrb[0].mxu0 %v256
      %v334 = vpop.f32.mrb[0].mxu0
      %v335 = vadd.f32 %v246, %v334
      %v336 = vpop.f32.mrb[0].mxu0
      %337 = vdwg.mxu0
      %v338 = vmax.f32 %v325, 0.0
      %v339 = vmax.f32 %v330, 0.0
      %v340 = vmax.f32 %v335, 0.0
      %v341 = vmin.f32 %v325, 0.0
      %v342 = vmin.f32 %v330, 0.0
      %v343 = vmin.f32 %v335, 0.0
      %v344 = vmul.f32 %v341, 0.25
      %v345 = vmul.f32 %v342, 0.25
      %v346 = vmul.f32 %v343, 0.25
      %v347 = vadd.f32 %v338, %v344
      %v348 = vadd.f32 %v339, %v345
      %v349 = vadd.f32 %v340, %v346
      %vm350 = vcmask 523264
      %351 = vst.msk [vmem:[#allocation2] sm:$0xff] %vm350, %v347
      %352 = vst.msk [vmem:[#allocation2 + $0x8] sm:$0xff] %vm350, %v348
      %353 = vst.msk [vmem:[#allocation2 + $0x10] sm:$0xff] %vm350, %v349
      %v354 = vld [vmem:[#allocation2 + $0x10] sm:$0xff]
      %355 = vxpose.xlu0.b32.start [1/16] %v354, 128
      %356 = vxpose.xlu0.b32.cont [2/16] 0.0, 128
      %357 = vxpose.xlu0.b32.cont [3/16] 0.0, 128
      %358 = vxpose.xlu0.b32.cont [4/16] 0.0, 128
      %359 = vxpose.xlu0.b32.cont [5/16] 0.0, 128
      %360 = vxpose.xlu0.b32.cont [6/16] 0.0, 128
      %361 = vxpose.xlu0.b32.cont [7/16] 0.0, 128
      %362 = vxpose.xlu0.b32.cont [8/16] 0.0, 128
      %363 = vxpose.xlu0.b32.cont [9/16] 0.0, 128
      %364 = vxpose.xlu0.b32.cont [10/16] 0.0, 128
      %365 = vxpose.xlu0.b32.cont [11/16] 0.0, 128
      %366 = vxpose.xlu0.b32.cont [12/16] 0.0, 128
      %367 = vxpose.xlu0.b32.cont [13/16] 0.0, 128
      %368 = vxpose.xlu0.b32.cont [14/16] 0.0, 128
      %369 = vxpose.xlu0.b32.cont [15/16] 0.0, 128
      %370 = vxpose.xlu0.b32.end [16/16] 0.0, 128
      %v371 = vpop.trf.xlu0
      %v372 = vpop.trf.xlu0
      %v373 = vpop.trf.xlu0
      %v374 = vpop.trf.xlu0
      %v375 = vpop.trf.xlu0
      %v376 = vpop.trf.xlu0
      %v377 = vpop.trf.xlu0
      %v378 = vpop.trf.xlu0
      %v379 = vpop.trf.xlu0
      %v380 = vpop.trf.xlu0
      %v381 = vpop.trf.xlu0
      %v382 = vpop.trf.xlu0
      %v383 = vpop.trf.xlu0
      %v384 = vpop.trf.xlu0
      %v385 = vpop.trf.xlu0
      %v386 = vpop.trf.xlu0
      %v387 = vld [vmem:[#allocation2] sm:$0xff]
      %v388 = vld [vmem:[#allocation2 + $0x8] sm:$0xff]
      %v391 = vcombine.high %v387, %v387
      %v393 = vunpack.c.l.s4 1966171168
      %v394 = vunpack.c.0.s8 %v393
      %v395 = vlaneseq
      %v396 = vshrl.u32 %v395, 7
      %v397 = vsub.s32 %v394, %v396
      %v398 = vrot.slane %v387, %v397
      %v400 = vunpack.c.l.s4 1966171168
      %v401 = vunpack.c.0.s8 %v400
      %v402 = vlaneseq
      %v403 = vshrl.u32 %v402, 7
      %v404 = vsub.s32 %v401, %v403
      %v405 = vrot.slane %v391, %v404
      %v406 = vcombine.high %v398, %v398
      %v407 = vcombine.high %v405, %v405
      %v409 = vunpack.c.l.s4 1966171168
      %v410 = vunpack.c.0.s8 %v409
      %v411 = vlaneseq
      %v412 = vshrl.u32 %v411, 7
      %v413 = vsub.s32 %v410, %v412
      %v414 = vrot.slane %v398, %v413
      %v416 = vunpack.c.l.s4 1966171168
      %v417 = vunpack.c.0.s8 %v416
      %v418 = vlaneseq
      %v419 = vshrl.u32 %v418, 7
      %v420 = vsub.s32 %v417, %v419
      %v421 = vrot.slane %v405, %v420
      %v423 = vunpack.c.l.s4 1966171168
      %v424 = vunpack.c.0.s8 %v423
      %v425 = vlaneseq
      %v426 = vshrl.u32 %v425, 7
      %v427 = vsub.s32 %v424, %v426
      %v428 = vrot.slane %v406, %v427
      %v430 = vunpack.c.l.s4 1966171168
      %v431 = vunpack.c.0.s8 %v430
      %v432 = vlaneseq
      %v433 = vshrl.u32 %v432, 7
      %v434 = vsub.s32 %v431, %v433
      %v435 = vrot.slane %v407, %v434
      %v436 = vcombine.high %v414, %v414
      %v437 = vcombine.high %v421, %v421
      %v438 = vcombine.high %v428, %v428
      %v439 = vcombine.high %v435, %v435
      %v440 = vcombine.high %v388, %v388
      %v442 = vunpack.c.l.s4 1966171168
      %v443 = vunpack.c.0.s8 %v442
      %v444 = vlaneseq
      %v445 = vshrl.u32 %v444, 7
      %v446 = vsub.s32 %v443, %v445
      %v447 = vrot.slane %v388, %v446
      %v449 = vunpack.c.l.s4 1966171168
      %v450 = vunpack.c.0.s8 %v449
      %v451 = vlaneseq
      %v452 = vshrl.u32 %v451, 7
      %v453 = vsub.s32 %v450, %v452
      %v454 = vrot.slane %v440, %v453
      %v455 = vcombine.high %v447, %v447
      %v456 = vcombine.high %v454, %v454
      %v458 = vunpack.c.l.s4 1966171168
      %v459 = vunpack.c.0.s8 %v458
      %v460 = vlaneseq
      %v461 = vshrl.u32 %v460, 7
      %v462 = vsub.s32 %v459, %v461
      %v463 = vrot.slane %v447, %v462
      %v465 = vunpack.c.l.s4 1966171168
      %v466 = vunpack.c.0.s8 %v465
      %v467 = vlaneseq
      %v468 = vshrl.u32 %v467, 7
      %v469 = vsub.s32 %v466, %v468
      %v470 = vrot.slane %v454, %v469
      %v472 = vunpack.c.l.s4 1966171168
      %v473 = vunpack.c.0.s8 %v472
      %v474 = vlaneseq
      %v475 = vshrl.u32 %v474, 7
      %v476 = vsub.s32 %v473, %v475
      %v477 = vrot.slane %v455, %v476
      %v479 = vunpack.c.l.s4 1966171168
      %v480 = vunpack.c.0.s8 %v479
      %v481 = vlaneseq
      %v482 = vshrl.u32 %v481, 7
      %v483 = vsub.s32 %v480, %v482
      %v484 = vrot.slane %v456, %v483
      %v485 = vcombine.high %v463, %v463
      %v486 = vcombine.high %v470, %v470
      %v487 = vcombine.high %v477, %v477
      %v488 = vcombine.high %v484, %v484
      %vm505 = vcmask 57344
      %506 = vst.msk [vmem:[#allocation3] sm:$0x1] %vm505, %v414
      %507 = vst.msk [vmem:[#allocation3 + $0x8] sm:$0x1] %vm505, %v428
      %508 = vst.msk [vmem:[#allocation3 + $0x10] sm:$0x1] %vm505, %v436
      %509 = vst.msk [vmem:[#allocation3 + $0x18] sm:$0x1] %vm505, %v438
      %510 = vst.msk [vmem:[#allocation3 + $0x20] sm:$0x1] %vm505, %v421
      %511 = vst.msk [vmem:[#allocation3 + $0x28] sm:$0x1] %vm505, %v435
      %512 = vst.msk [vmem:[#allocation3 + $0x30] sm:$0x1] %vm505, %v437
      %513 = vst.msk [vmem:[#allocation3 + $0x38] sm:$0x1] %vm505, %v439
      %514 = vst.msk [vmem:[#allocation3 + $0x40] sm:$0x1] %vm505, %v463
      %515 = vst.msk [vmem:[#allocation3 + $0x48] sm:$0x1] %vm505, %v477
      %516 = vst.msk [vmem:[#allocation3 + $0x50] sm:$0x1] %vm505, %v485
      %517 = vst.msk [vmem:[#allocation3 + $0x58] sm:$0x1] %vm505, %v487
      %518 = vst.msk [vmem:[#allocation3 + $0x60] sm:$0x1] %vm505, %v470
      %519 = vst.msk [vmem:[#allocation3 + $0x68] sm:$0x1] %vm505, %v484
      %520 = vst.msk [vmem:[#allocation3 + $0x70] sm:$0x1] %vm505, %v486
      %521 = vst.msk [vmem:[#allocation3 + $0x78] sm:$0x1] %vm505, %v488
      %vm522 = vcmask 64512
      %523 = vst.msk [vmem:[#allocation4] sm:$0xff] %vm522, %v371
      %v524 = vld [vmem:[#allocation2] sm:$0xff]
      %v525 = vld [vmem:[#allocation2 + $0x8] sm:$0xff]
      %v528 = vcombine.high %v524, %v524
      %v530 = vunpack.c.l.s4 1966171168
      %v531 = vunpack.c.0.s8 %v530
      %v532 = vlaneseq
      %v533 = vshrl.u32 %v532, 7
      %v534 = vsub.s32 %v531, %v533
      %v535 = vrot.slane %v524, %v534
      %v537 = vunpack.c.l.s4 1966171168
      %v538 = vunpack.c.0.s8 %v537
      %v539 = vlaneseq
      %v540 = vshrl.u32 %v539, 7
      %v541 = vsub.s32 %v538, %v540
      %v542 = vrot.slane %v528, %v541
      %v543 = vcombine.high %v535, %v535
      %v544 = vcombine.high %v542, %v542
      %v546 = vunpack.c.l.s4 1966171168
      %v547 = vunpack.c.0.s8 %v546
      %v548 = vlaneseq
      %v549 = vshrl.u32 %v548, 7
      %v550 = vsub.s32 %v547, %v549
      %v551 = vrot.slane %v535, %v550
      %v553 = vunpack.c.l.s4 1966171168
      %v554 = vunpack.c.0.s8 %v553
      %v555 = vlaneseq
      %v556 = vshrl.u32 %v555, 7
      %v557 = vsub.s32 %v554, %v556
      %v558 = vrot.slane %v542, %v557
      %v560 = vunpack.c.l.s4 1966171168
      %v561 = vunpack.c.0.s8 %v560
      %v562 = vlaneseq
      %v563 = vshrl.u32 %v562, 7
      %v564 = vsub.s32 %v561, %v563
      %v565 = vrot.slane %v543, %v564
      %v567 = vunpack.c.l.s4 1966171168
      %v568 = vunpack.c.0.s8 %v567
      %v569 = vlaneseq
      %v570 = vshrl.u32 %v569, 7
      %v571 = vsub.s32 %v568, %v570
      %v572 = vrot.slane %v544, %v571
      %v573 = vcombine.high %v551, %v551
      %v574 = vcombine.high %v558, %v558
      %v575 = vcombine.high %v565, %v565
      %v576 = vcombine.high %v572, %v572
      %v577 = vcombine.high %v525, %v525
      %v579 = vunpack.c.l.s4 1966171168
      %v580 = vunpack.c.0.s8 %v579
      %v581 = vlaneseq
      %v582 = vshrl.u32 %v581, 7
      %v583 = vsub.s32 %v580, %v582
      %v584 = vrot.slane %v525, %v583
      %v586 = vunpack.c.l.s4 1966171168
      %v587 = vunpack.c.0.s8 %v586
      %v588 = vlaneseq
      %v589 = vshrl.u32 %v588, 7
      %v590 = vsub.s32 %v587, %v589
      %v591 = vrot.slane %v577, %v590
      %v592 = vcombine.high %v584, %v584
      %v593 = vcombine.high %v591, %v591
      %v595 = vunpack.c.l.s4 1966171168
      %v596 = vunpack.c.0.s8 %v595
      %v597 = vlaneseq
      %v598 = vshrl.u32 %v597, 7
      %v599 = vsub.s32 %v596, %v598
      %v600 = vrot.slane %v584, %v599
      %v602 = vunpack.c.l.s4 1966171168
      %v603 = vunpack.c.0.s8 %v602
      %v604 = vlaneseq
      %v605 = vshrl.u32 %v604, 7
      %v606 = vsub.s32 %v603, %v605
      %v607 = vrot.slane %v591, %v606
      %v609 = vunpack.c.l.s4 1966171168
      %v610 = vunpack.c.0.s8 %v609
      %v611 = vlaneseq
      %v612 = vshrl.u32 %v611, 7
      %v613 = vsub.s32 %v610, %v612
      %v614 = vrot.slane %v592, %v613
      %v616 = vunpack.c.l.s4 1966171168
      %v617 = vunpack.c.0.s8 %v616
      %v618 = vlaneseq
      %v619 = vshrl.u32 %v618, 7
      %v620 = vsub.s32 %v617, %v619
      %v621 = vrot.slane %v593, %v620
      %v622 = vcombine.high %v600, %v600
      %v623 = vcombine.high %v607, %v607
      %v624 = vcombine.high %v614, %v614
      %v625 = vcombine.high %v621, %v621
      %v626 = vlaneseq
      %v627 = vshrl.u32 %v626, 7
      %v628 = vsub.s32 0, %v627
      %v629 = vrot.slane %v551, %v628
      %v630 = vlaneseq
      %v631 = vshrl.u32 %v630, 7
      %v632 = vsub.s32 0, %v631
      %v633 = vrot.slane %v565, %v632
      %v634 = vlaneseq
      %v635 = vshrl.u32 %v634, 7
      %v636 = vsub.s32 0, %v635
      %v637 = vrot.slane %v573, %v636
      %v638 = vlaneseq
      %v639 = vshrl.u32 %v638, 7
      %v640 = vsub.s32 0, %v639
      %v641 = vrot.slane %v575, %v640
      %v642 = vlaneseq
      %v643 = vshrl.u32 %v642, 7
      %v644 = vsub.s32 0, %v643
      %v645 = vrot.slane %v558, %v644
      %v646 = vlaneseq
      %v647 = vshrl.u32 %v646, 7
      %v648 = vsub.s32 0, %v647
      %v649 = vrot.slane %v572, %v648
      %v650 = vlaneseq
      %v651 = vshrl.u32 %v650, 7
      %v652 = vsub.s32 0, %v651
      %v653 = vrot.slane %v574, %v652
      %v654 = vlaneseq
      %v655 = vshrl.u32 %v654, 7
      %v656 = vsub.s32 0, %v655
      %v657 = vrot.slane %v576, %v656
      %v658 = vlaneseq
      %v659 = vshrl.u32 %v658, 7
      %v660 = vsub.s32 0, %v659
      %v661 = vrot.slane %v600, %v660
      %v662 = vlaneseq
      %v663 = vshrl.u32 %v662, 7
      %v664 = vsub.s32 0, %v663
      %v665 = vrot.slane %v614, %v664
      %v666 = vlaneseq
      %v667 = vshrl.u32 %v666, 7
      %v668 = vsub.s32 0, %v667
      %v669 = vrot.slane %v622, %v668
      %v670 = vlaneseq
      %v671 = vshrl.u32 %v670, 7
      %v672 = vsub.s32 0, %v671
      %v673 = vrot.slane %v624, %v672
      %v674 = vlaneseq
      %v675 = vshrl.u32 %v674, 7
      %v676 = vsub.s32 0, %v675
      %v677 = vrot.slane %v607, %v676
      %v678 = vlaneseq
      %v679 = vshrl.u32 %v678, 7
      %v680 = vsub.s32 0, %v679
      %v681 = vrot.slane %v621, %v680
      %v682 = vlaneseq
      %v683 = vshrl.u32 %v682, 7
      %v684 = vsub.s32 0, %v683
      %v685 = vrot.slane %v623, %v684
      %v686 = vlaneseq
      %v687 = vshrl.u32 %v686, 7
      %v688 = vsub.s32 0, %v687
      %v689 = vrot.slane %v625, %v688
      %690 = vrot.lane.b32.xlu0 %v629, 120
      %v691 = vpop.permute.xlu0 %690
      %692 = vrot.lane.b32.xlu0 %v633, 120
      %v693 = vpop.permute.xlu0 %692
      %694 = vrot.lane.b32.xlu0 %v637, 120
      %v695 = vpop.permute.xlu0 %694
      %696 = vrot.lane.b32.xlu0 %v641, 120
      %v697 = vpop.permute.xlu0 %696
      %698 = vrot.lane.b32.xlu0 %v645, 120
      %v699 = vpop.permute.xlu0 %698
      %700 = vrot.lane.b32.xlu0 %v649, 120
      %v701 = vpop.permute.xlu0 %700
      %702 = vrot.lane.b32.xlu0 %v653, 120
      %v703 = vpop.permute.xlu0 %702
      %704 = vrot.lane.b32.xlu0 %v657, 120
      %v705 = vpop.permute.xlu0 %704
      %706 = vrot.lane.b32.xlu0 %v661, 120
      %v707 = vpop.permute.xlu0 %706
      %708 = vrot.lane.b32.xlu0 %v665, 120
      %v709 = vpop.permute.xlu0 %708
      %710 = vrot.lane.b32.xlu0 %v669, 120
      %v711 = vpop.permute.xlu0 %710
      %712 = vrot.lane.b32.xlu0 %v673, 120
      %v713 = vpop.permute.xlu0 %712
      %714 = vrot.lane.b32.xlu0 %v677, 120
      %v715 = vpop.permute.xlu0 %714
      %716 = vrot.lane.b32.xlu0 %v681, 120
      %v717 = vpop.permute.xlu0 %716
      %718 = vrot.lane.b32.xlu0 %v685, 120
      %v719 = vpop.permute.xlu0 %718
      %720 = vrot.lane.b32.xlu0 %v689, 120
      %v721 = vpop.permute.xlu0 %720
      %738 = vst.msk [vmem:[#allocation3 + $0x1] sm:$0x1] %vm505, %v691
      %739 = vst.msk [vmem:[#allocation3 + $0x9] sm:$0x1] %vm505, %v693
      %740 = vst.msk [vmem:[#allocation3 + $0x11] sm:$0x1] %vm505, %v695
      %741 = vst.msk [vmem:[#allocation3 + $0x19] sm:$0x1] %vm505, %v697
      %742 = vst.msk [vmem:[#allocation3 + $0x21] sm:$0x1] %vm505, %v699
      %743 = vst.msk [vmem:[#allocation3 + $0x29] sm:$0x1] %vm505, %v701
      %744 = vst.msk [vmem:[#allocation3 + $0x31] sm:$0x1] %vm505, %v703
      %745 = vst.msk [vmem:[#allocation3 + $0x39] sm:$0x1] %vm505, %v705
      %746 = vst.msk [vmem:[#allocation3 + $0x41] sm:$0x1] %vm505, %v707
      %747 = vst.msk [vmem:[#allocation3 + $0x49] sm:$0x1] %vm505, %v709
      %748 = vst.msk [vmem:[#allocation3 + $0x51] sm:$0x1] %vm505, %v711
      %749 = vst.msk [vmem:[#allocation3 + $0x59] sm:$0x1] %vm505, %v713
      %750 = vst.msk [vmem:[#allocation3 + $0x61] sm:$0x1] %vm505, %v715
      %751 = vst.msk [vmem:[#allocation3 + $0x69] sm:$0x1] %vm505, %v717
      %752 = vst.msk [vmem:[#allocation3 + $0x71] sm:$0x1] %vm505, %v719
      %753 = vst.msk [vmem:[#allocation3 + $0x79] sm:$0x1] %vm505, %v721
      %s754 = scalar_lea.vmem [#allocation4], 8
      %755 = vst.msk [vmem:[%s754] sm:$0xff] %vm522, %v372
      %v756 = vld [vmem:[#allocation2] sm:$0xff]
      %v757 = vld [vmem:[#allocation2 + $0x8] sm:$0xff]
      %v760 = vcombine.high %v756, %v756
      %v762 = vunpack.c.l.s4 1966171168
      %v763 = vunpack.c.0.s8 %v762
      %v764 = vlaneseq
      %v765 = vshrl.u32 %v764, 7
      %v766 = vsub.s32 %v763, %v765
      %v767 = vrot.slane %v756, %v766
      %v769 = vunpack.c.l.s4 1966171168
      %v770 = vunpack.c.0.s8 %v769
      %v771 = vlaneseq
      %v772 = vshrl.u32 %v771, 7
      %v773 = vsub.s32 %v770, %v772
      %v774 = vrot.slane %v760, %v773
      %v775 = vcombine.high %v767, %v767
      %v776 = vcombine.high %v774, %v774
      %v778 = vunpack.c.l.s4 1966171168
      %v779 = vunpack.c.0.s8 %v778
      %v780 = vlaneseq
      %v781 = vshrl.u32 %v780, 7
      %v782 = vsub.s32 %v779, %v781
      %v783 = vrot.slane %v767, %v782
      %v785 = vunpack.c.l.s4 1966171168
      %v786 = vunpack.c.0.s8 %v785
      %v787 = vlaneseq
      %v788 = vshrl.u32 %v787, 7
      %v789 = vsub.s32 %v786, %v788
      %v790 = vrot.slane %v774, %v789
      %v792 = vunpack.c.l.s4 1966171168
      %v793 = vunpack.c.0.s8 %v792
      %v794 = vlaneseq
      %v795 = vshrl.u32 %v794, 7
      %v796 = vsub.s32 %v793, %v795
      %v797 = vrot.slane %v775, %v796
      %v799 = vunpack.c.l.s4 1966171168
      %v800 = vunpack.c.0.s8 %v799
      %v801 = vlaneseq
      %v802 = vshrl.u32 %v801, 7
      %v803 = vsub.s32 %v800, %v802
      %v804 = vrot.slane %v776, %v803
      %v805 = vcombine.high %v783, %v783
      %v806 = vcombine.high %v790, %v790
      %v807 = vcombine.high %v797, %v797
      %v808 = vcombine.high %v804, %v804
      %v809 = vcombine.high %v757, %v757
      %v811 = vunpack.c.l.s4 1966171168
      %v812 = vunpack.c.0.s8 %v811
      %v813 = vlaneseq
      %v814 = vshrl.u32 %v813, 7
      %v815 = vsub.s32 %v812, %v814
      %v816 = vrot.slane %v757, %v815
      %v818 = vunpack.c.l.s4 1966171168
      %v819 = vunpack.c.0.s8 %v818
      %v820 = vlaneseq
      %v821 = vshrl.u32 %v820, 7
      %v822 = vsub.s32 %v819, %v821
      %v823 = vrot.slane %v809, %v822
      %v824 = vcombine.high %v816, %v816
      %v825 = vcombine.high %v823, %v823
      %v827 = vunpack.c.l.s4 1966171168
      %v828 = vunpack.c.0.s8 %v827
      %v829 = vlaneseq
      %v830 = vshrl.u32 %v829, 7
      %v831 = vsub.s32 %v828, %v830
      %v832 = vrot.slane %v816, %v831
      %v834 = vunpack.c.l.s4 1966171168
      %v835 = vunpack.c.0.s8 %v834
      %v836 = vlaneseq
      %v837 = vshrl.u32 %v836, 7
      %v838 = vsub.s32 %v835, %v837
      %v839 = vrot.slane %v823, %v838
      %v841 = vunpack.c.l.s4 1966171168
      %v842 = vunpack.c.0.s8 %v841
      %v843 = vlaneseq
      %v844 = vshrl.u32 %v843, 7
      %v845 = vsub.s32 %v842, %v844
      %v846 = vrot.slane %v824, %v845
      %v848 = vunpack.c.l.s4 1966171168
      %v849 = vunpack.c.0.s8 %v848
      %v850 = vlaneseq
      %v851 = vshrl.u32 %v850, 7
      %v852 = vsub.s32 %v849, %v851
      %v853 = vrot.slane %v825, %v852
      %v854 = vcombine.high %v832, %v832
      %v855 = vcombine.high %v839, %v839
      %v856 = vcombine.high %v846, %v846
      %v857 = vcombine.high %v853, %v853
      %v858 = vlaneseq
      %v859 = vshrl.u32 %v858, 7
      %v860 = vsub.s32 0, %v859
      %v861 = vrot.slane %v783, %v860
      %v862 = vlaneseq
      %v863 = vshrl.u32 %v862, 7
      %v864 = vsub.s32 0, %v863
      %v865 = vrot.slane %v797, %v864
      %v866 = vlaneseq
      %v867 = vshrl.u32 %v866, 7
      %v868 = vsub.s32 0, %v867
      %v869 = vrot.slane %v805, %v868
      %v870 = vlaneseq
      %v871 = vshrl.u32 %v870, 7
      %v872 = vsub.s32 0, %v871
      %v873 = vrot.slane %v807, %v872
      %v874 = vlaneseq
      %v875 = vshrl.u32 %v874, 7
      %v876 = vsub.s32 0, %v875
      %v877 = vrot.slane %v790, %v876
      %v878 = vlaneseq
      %v879 = vshrl.u32 %v878, 7
      %v880 = vsub.s32 0, %v879
      %v881 = vrot.slane %v804, %v880
      %v882 = vlaneseq
      %v883 = vshrl.u32 %v882, 7
      %v884 = vsub.s32 0, %v883
      %v885 = vrot.slane %v806, %v884
      %v886 = vlaneseq
      %v887 = vshrl.u32 %v886, 7
      %v888 = vsub.s32 0, %v887
      %v889 = vrot.slane %v808, %v888
      %v890 = vlaneseq
      %v891 = vshrl.u32 %v890, 7
      %v892 = vsub.s32 0, %v891
      %v893 = vrot.slane %v832, %v892
      %v894 = vlaneseq
      %v895 = vshrl.u32 %v894, 7
      %v896 = vsub.s32 0, %v895
      %v897 = vrot.slane %v846, %v896
      %v898 = vlaneseq
      %v899 = vshrl.u32 %v898, 7
      %v900 = vsub.s32 0, %v899
      %v901 = vrot.slane %v854, %v900
      %v902 = vlaneseq
      %v903 = vshrl.u32 %v902, 7
      %v904 = vsub.s32 0, %v903
      %v905 = vrot.slane %v856, %v904
      %v906 = vlaneseq
      %v907 = vshrl.u32 %v906, 7
      %v908 = vsub.s32 0, %v907
      %v909 = vrot.slane %v839, %v908
      %v910 = vlaneseq
      %v911 = vshrl.u32 %v910, 7
      %v912 = vsub.s32 0, %v911
      %v913 = vrot.slane %v853, %v912
      %v914 = vlaneseq
      %v915 = vshrl.u32 %v914, 7
      %v916 = vsub.s32 0, %v915
      %v917 = vrot.slane %v855, %v916
      %v918 = vlaneseq
      %v919 = vshrl.u32 %v918, 7
      %v920 = vsub.s32 0, %v919
      %v921 = vrot.slane %v857, %v920
      %922 = vrot.lane.b32.xlu0 %v861, 112
      %v923 = vpop.permute.xlu0 %922
      %924 = vrot.lane.b32.xlu0 %v865, 112
      %v925 = vpop.permute.xlu0 %924
      %926 = vrot.lane.b32.xlu0 %v869, 112
      %v927 = vpop.permute.xlu0 %926
      %928 = vrot.lane.b32.xlu0 %v873, 112
      %v929 = vpop.permute.xlu0 %928
      %930 = vrot.lane.b32.xlu0 %v877, 112
      %v931 = vpop.permute.xlu0 %930
      %932 = vrot.lane.b32.xlu0 %v881, 112
      %v933 = vpop.permute.xlu0 %932
      %934 = vrot.lane.b32.xlu0 %v885, 112
      %v935 = vpop.permute.xlu0 %934
      %936 = vrot.lane.b32.xlu0 %v889, 112
      %v937 = vpop.permute.xlu0 %936
      %938 = vrot.lane.b32.xlu0 %v893, 112
      %v939 = vpop.permute.xlu0 %938
      %940 = vrot.lane.b32.xlu0 %v897, 112
      %v941 = vpop.permute.xlu0 %940
      %942 = vrot.lane.b32.xlu0 %v901, 112
      %v943 = vpop.permute.xlu0 %942
      %944 = vrot.lane.b32.xlu0 %v905, 112
      %v945 = vpop.permute.xlu0 %944
      %946 = vrot.lane.b32.xlu0 %v909, 112
      %v947 = vpop.permute.xlu0 %946
      %948 = vrot.lane.b32.xlu0 %v913, 112
      %v949 = vpop.permute.xlu0 %948
      %950 = vrot.lane.b32.xlu0 %v917, 112
      %v951 = vpop.permute.xlu0 %950
      %952 = vrot.lane.b32.xlu0 %v921, 112
      %v953 = vpop.permute.xlu0 %952
      %970 = vst.msk [vmem:[#allocation3 + $0x2] sm:$0x1] %vm505, %v923
      %971 = vst.msk [vmem:[#allocation3 + $0xa] sm:$0x1] %vm505, %v925
      %972 = vst.msk [vmem:[#allocation3 + $0x12] sm:$0x1] %vm505, %v927
      %973 = vst.msk [vmem:[#allocation3 + $0x1a] sm:$0x1] %vm505, %v929
      %974 = vst.msk [vmem:[#allocation3 + $0x22] sm:$0x1] %vm505, %v931
      %975 = vst.msk [vmem:[#allocation3 + $0x2a] sm:$0x1] %vm505, %v933
      %976 = vst.msk [vmem:[#allocation3 + $0x32] sm:$0x1] %vm505, %v935
      %977 = vst.msk [vmem:[#allocation3 + $0x3a] sm:$0x1] %vm505, %v937
      %978 = vst.msk [vmem:[#allocation3 + $0x42] sm:$0x1] %vm505, %v939
      %979 = vst.msk [vmem:[#allocation3 + $0x4a] sm:$0x1] %vm505, %v941
      %980 = vst.msk [vmem:[#allocation3 + $0x52] sm:$0x1] %vm505, %v943
      %981 = vst.msk [vmem:[#allocation3 + $0x5a] sm:$0x1] %vm505, %v945
      %982 = vst.msk [vmem:[#allocation3 + $0x62] sm:$0x1] %vm505, %v947
      %983 = vst.msk [vmem:[#allocation3 + $0x6a] sm:$0x1] %vm505, %v949
      %984 = vst.msk [vmem:[#allocation3 + $0x72] sm:$0x1] %vm505, %v951
      %985 = vst.msk [vmem:[#allocation3 + $0x7a] sm:$0x1] %vm505, %v953
      %s986 = scalar_lea.vmem [#allocation4], 16
      %987 = vst.msk [vmem:[%s986] sm:$0xff] %vm522, %v373
      %v988 = vld [vmem:[#allocation2] sm:$0xff]
      %v989 = vld [vmem:[#allocation2 + $0x8] sm:$0xff]
      %v992 = vcombine.high %v988, %v988
      %v994 = vunpack.c.l.s4 1966171168
      %v995 = vunpack.c.0.s8 %v994
      %v996 = vlaneseq
      %v997 = vshrl.u32 %v996, 7
      %v998 = vsub.s32 %v995, %v997
      %v999 = vrot.slane %v988, %v998
      %v1001 = vunpack.c.l.s4 1966171168
      %v1002 = vunpack.c.0.s8 %v1001
      %v1003 = vlaneseq
      %v1004 = vshrl.u32 %v1003, 7
      %v1005 = vsub.s32 %v1002, %v1004
      %v1006 = vrot.slane %v992, %v1005
      %v1007 = vcombine.high %v999, %v999
      %v1008 = vcombine.high %v1006, %v1006
      %v1010 = vunpack.c.l.s4 1966171168
      %v1011 = vunpack.c.0.s8 %v1010
      %v1012 = vlaneseq
      %v1013 = vshrl.u32 %v1012, 7
      %v1014 = vsub.s32 %v1011, %v1013
      %v1015 = vrot.slane %v999, %v1014
      %v1017 = vunpack.c.l.s4 1966171168
      %v1018 = vunpack.c.0.s8 %v1017
      %v1019 = vlaneseq
      %v1020 = vshrl.u32 %v1019, 7
      %v1021 = vsub.s32 %v1018, %v1020
      %v1022 = vrot.slane %v1006, %v1021
      %v1024 = vunpack.c.l.s4 1966171168
      %v1025 = vunpack.c.0.s8 %v1024
      %v1026 = vlaneseq
      %v1027 = vshrl.u32 %v1026, 7
      %v1028 = vsub.s32 %v1025, %v1027
      %v1029 = vrot.slane %v1007, %v1028
      %v1031 = vunpack.c.l.s4 1966171168
      %v1032 = vunpack.c.0.s8 %v1031
      %v1033 = vlaneseq
      %v1034 = vshrl.u32 %v1033, 7
      %v1035 = vsub.s32 %v1032, %v1034
      %v1036 = vrot.slane %v1008, %v1035
      %v1037 = vcombine.high %v1015, %v1015
      %v1038 = vcombine.high %v1022, %v1022
      %v1039 = vcombine.high %v1029, %v1029
      %v1040 = vcombine.high %v1036, %v1036
      %v1041 = vcombine.high %v989, %v989
      %v1043 = vunpack.c.l.s4 1966171168
      %v1044 = vunpack.c.0.s8 %v1043
      %v1045 = vlaneseq
      %v1046 = vshrl.u32 %v1045, 7
      %v1047 = vsub.s32 %v1044, %v1046
      %v1048 = vrot.slane %v989, %v1047
      %v1050 = vunpack.c.l.s4 1966171168
      %v1051 = vunpack.c.0.s8 %v1050
      %v1052 = vlaneseq
      %v1053 = vshrl.u32 %v1052, 7
      %v1054 = vsub.s32 %v1051, %v1053
      %v1055 = vrot.slane %v1041, %v1054
      %v1056 = vcombine.high %v1048, %v1048
      %v1057 = vcombine.high %v1055, %v1055
      %v1059 = vunpack.c.l.s4 1966171168
      %v1060 = vunpack.c.0.s8 %v1059
      %v1061 = vlaneseq
      %v1062 = vshrl.u32 %v1061, 7
      %v1063 = vsub.s32 %v1060, %v1062
      %v1064 = vrot.slane %v1048, %v1063
      %v1066 = vunpack.c.l.s4 1966171168
      %v1067 = vunpack.c.0.s8 %v1066
      %v1068 = vlaneseq
      %v1069 = vshrl.u32 %v1068, 7
      %v1070 = vsub.s32 %v1067, %v1069
      %v1071 = vrot.slane %v1055, %v1070
      %v1073 = vunpack.c.l.s4 1966171168
      %v1074 = vunpack.c.0.s8 %v1073
      %v1075 = vlaneseq
      %v1076 = vshrl.u32 %v1075, 7
      %v1077 = vsub.s32 %v1074, %v1076
      %v1078 = vrot.slane %v1056, %v1077
      %v1080 = vunpack.c.l.s4 1966171168
      %v1081 = vunpack.c.0.s8 %v1080
      %v1082 = vlaneseq
      %v1083 = vshrl.u32 %v1082, 7
      %v1084 = vsub.s32 %v1081, %v1083
      %v1085 = vrot.slane %v1057, %v1084
      %v1086 = vcombine.high %v1064, %v1064
      %v1087 = vcombine.high %v1071, %v1071
      %v1088 = vcombine.high %v1078, %v1078
      %v1089 = vcombine.high %v1085, %v1085
      %v1090 = vlaneseq
      %v1091 = vshrl.u32 %v1090, 7
      %v1092 = vsub.s32 0, %v1091
      %v1093 = vrot.slane %v1015, %v1092
      %v1094 = vlaneseq
      %v1095 = vshrl.u32 %v1094, 7
      %v1096 = vsub.s32 0, %v1095
      %v1097 = vrot.slane %v1029, %v1096
      %v1098 = vlaneseq
      %v1099 = vshrl.u32 %v1098, 7
      %v1100 = vsub.s32 0, %v1099
      %v1101 = vrot.slane %v1037, %v1100
      %v1102 = vlaneseq
      %v1103 = vshrl.u32 %v1102, 7
      %v1104 = vsub.s32 0, %v1103
      %v1105 = vrot.slane %v1039, %v1104
      %v1106 = vlaneseq
      %v1107 = vshrl.u32 %v1106, 7
      %v1108 = vsub.s32 0, %v1107
      %v1109 = vrot.slane %v1022, %v1108
      %v1110 = vlaneseq
      %v1111 = vshrl.u32 %v1110, 7
      %v1112 = vsub.s32 0, %v1111
      %v1113 = vrot.slane %v1036, %v1112
      %v1114 = vlaneseq
      %v1115 = vshrl.u32 %v1114, 7
      %v1116 = vsub.s32 0, %v1115
      %v1117 = vrot.slane %v1038, %v1116
      %v1118 = vlaneseq
      %v1119 = vshrl.u32 %v1118, 7
      %v1120 = vsub.s32 0, %v1119
      %v1121 = vrot.slane %v1040, %v1120
      %v1122 = vlaneseq
      %v1123 = vshrl.u32 %v1122, 7
      %v1124 = vsub.s32 0, %v1123
      %v1125 = vrot.slane %v1064, %v1124
      %v1126 = vlaneseq
      %v1127 = vshrl.u32 %v1126, 7
      %v1128 = vsub.s32 0, %v1127
      %v1129 = vrot.slane %v1078, %v1128
      %v1130 = vlaneseq
      %v1131 = vshrl.u32 %v1130, 7
      %v1132 = vsub.s32 0, %v1131
      %v1133 = vrot.slane %v1086, %v1132
      %v1134 = vlaneseq
      %v1135 = vshrl.u32 %v1134, 7
      %v1136 = vsub.s32 0, %v1135
      %v1137 = vrot.slane %v1088, %v1136
      %v1138 = vlaneseq
      %v1139 = vshrl.u32 %v1138, 7
      %v1140 = vsub.s32 0, %v1139
      %v1141 = vrot.slane %v1071, %v1140
      %v1142 = vlaneseq
      %v1143 = vshrl.u32 %v1142, 7
      %v1144 = vsub.s32 0, %v1143
      %v1145 = vrot.slane %v1085, %v1144
      %v1146 = vlaneseq
      %v1147 = vshrl.u32 %v1146, 7
      %v1148 = vsub.s32 0, %v1147
      %v1149 = vrot.slane %v1087, %v1148
      %v1150 = vlaneseq
      %v1151 = vshrl.u32 %v1150, 7
      %v1152 = vsub.s32 0, %v1151
      %v1153 = vrot.slane %v1089, %v1152
      %1154 = vrot.lane.b32.xlu0 %v1093, 104
      %v1155 = vpop.permute.xlu0 %1154
      %1156 = vrot.lane.b32.xlu0 %v1097, 104
      %v1157 = vpop.permute.xlu0 %1156
      %1158 = vrot.lane.b32.xlu0 %v1101, 104
      %v1159 = vpop.permute.xlu0 %1158
      %1160 = vrot.lane.b32.xlu0 %v1105, 104
      %v1161 = vpop.permute.xlu0 %1160
      %1162 = vrot.lane.b32.xlu0 %v1109, 104
      %v1163 = vpop.permute.xlu0 %1162
      %1164 = vrot.lane.b32.xlu0 %v1113, 104
      %v1165 = vpop.permute.xlu0 %1164
      %1166 = vrot.lane.b32.xlu0 %v1117, 104
      %v1167 = vpop.permute.xlu0 %1166
      %1168 = vrot.lane.b32.xlu0 %v1121, 104
      %v1169 = vpop.permute.xlu0 %1168
      %1170 = vrot.lane.b32.xlu0 %v1125, 104
      %v1171 = vpop.permute.xlu0 %1170
      %1172 = vrot.lane.b32.xlu0 %v1129, 104
      %v1173 = vpop.permute.xlu0 %1172
      %1174 = vrot.lane.b32.xlu0 %v1133, 104
      %v1175 = vpop.permute.xlu0 %1174
      %1176 = vrot.lane.b32.xlu0 %v1137, 104
      %v1177 = vpop.permute.xlu0 %1176
      %1178 = vrot.lane.b32.xlu0 %v1141, 104
      %v1179 = vpop.permute.xlu0 %1178
      %1180 = vrot.lane.b32.xlu0 %v1145, 104
      %v1181 = vpop.permute.xlu0 %1180
      %1182 = vrot.lane.b32.xlu0 %v1149, 104
      %v1183 = vpop.permute.xlu0 %1182
      %1184 = vrot.lane.b32.xlu0 %v1153, 104
      %v1185 = vpop.permute.xlu0 %1184
      %1202 = vst.msk [vmem:[#allocation3 + $0x3] sm:$0x1] %vm505, %v1155
      %1203 = vst.msk [vmem:[#allocation3 + $0xb] sm:$0x1] %vm505, %v1157
      %1204 = vst.msk [vmem:[#allocation3 + $0x13] sm:$0x1] %vm505, %v1159
      %1205 = vst.msk [vmem:[#allocation3 + $0x1b] sm:$0x1] %vm505, %v1161
      %1206 = vst.msk [vmem:[#allocation3 + $0x23] sm:$0x1] %vm505, %v1163
      %1207 = vst.msk [vmem:[#allocation3 + $0x2b] sm:$0x1] %vm505, %v1165
      %1208 = vst.msk [vmem:[#allocation3 + $0x33] sm:$0x1] %vm505, %v1167
      %1209 = vst.msk [vmem:[#allocation3 + $0x3b] sm:$0x1] %vm505, %v1169
      %1210 = vst.msk [vmem:[#allocation3 + $0x43] sm:$0x1] %vm505, %v1171
      %1211 = vst.msk [vmem:[#allocation3 + $0x4b] sm:$0x1] %vm505, %v1173
      %1212 = vst.msk [vmem:[#allocation3 + $0x53] sm:$0x1] %vm505, %v1175
      %1213 = vst.msk [vmem:[#allocation3 + $0x5b] sm:$0x1] %vm505, %v1177
      %1214 = vst.msk [vmem:[#allocation3 + $0x63] sm:$0x1] %vm505, %v1179
      %1215 = vst.msk [vmem:[#allocation3 + $0x6b] sm:$0x1] %vm505, %v1181
      %1216 = vst.msk [vmem:[#allocation3 + $0x73] sm:$0x1] %vm505, %v1183
      %1217 = vst.msk [vmem:[#allocation3 + $0x7b] sm:$0x1] %vm505, %v1185
      %s1218 = scalar_lea.vmem [#allocation4], 24
      %1219 = vst.msk [vmem:[%s1218] sm:$0xff] %vm522, %v374
      %v1220 = vld [vmem:[#allocation2] sm:$0xff]
      %v1221 = vld [vmem:[#allocation2 + $0x8] sm:$0xff]
      %v1224 = vcombine.high %v1220, %v1220
      %v1226 = vunpack.c.l.s4 1966171168
      %v1227 = vunpack.c.0.s8 %v1226
      %v1228 = vlaneseq
      %v1229 = vshrl.u32 %v1228, 7
      %v1230 = vsub.s32 %v1227, %v1229
      %v1231 = vrot.slane %v1220, %v1230
      %v1233 = vunpack.c.l.s4 1966171168
      %v1234 = vunpack.c.0.s8 %v1233
      %v1235 = vlaneseq
      %v1236 = vshrl.u32 %v1235, 7
      %v1237 = vsub.s32 %v1234, %v1236
      %v1238 = vrot.slane %v1224, %v1237
      %v1239 = vcombine.high %v1231, %v1231
      %v1240 = vcombine.high %v1238, %v1238
      %v1242 = vunpack.c.l.s4 1966171168
      %v1243 = vunpack.c.0.s8 %v1242
      %v1244 = vlaneseq
      %v1245 = vshrl.u32 %v1244, 7
      %v1246 = vsub.s32 %v1243, %v1245
      %v1247 = vrot.slane %v1231, %v1246
      %v1249 = vunpack.c.l.s4 1966171168
      %v1250 = vunpack.c.0.s8 %v1249
      %v1251 = vlaneseq
      %v1252 = vshrl.u32 %v1251, 7
      %v1253 = vsub.s32 %v1250, %v1252
      %v1254 = vrot.slane %v1238, %v1253
      %v1256 = vunpack.c.l.s4 1966171168
      %v1257 = vunpack.c.0.s8 %v1256
      %v1258 = vlaneseq
      %v1259 = vshrl.u32 %v1258, 7
      %v1260 = vsub.s32 %v1257, %v1259
      %v1261 = vrot.slane %v1239, %v1260
      %v1263 = vunpack.c.l.s4 1966171168
      %v1264 = vunpack.c.0.s8 %v1263
      %v1265 = vlaneseq
      %v1266 = vshrl.u32 %v1265, 7
      %v1267 = vsub.s32 %v1264, %v1266
      %v1268 = vrot.slane %v1240, %v1267
      %v1269 = vcombine.high %v1247, %v1247
      %v1270 = vcombine.high %v1254, %v1254
      %v1271 = vcombine.high %v1261, %v1261
      %v1272 = vcombine.high %v1268, %v1268
      %v1273 = vcombine.high %v1221, %v1221
      %v1275 = vunpack.c.l.s4 1966171168
      %v1276 = vunpack.c.0.s8 %v1275
      %v1277 = vlaneseq
      %v1278 = vshrl.u32 %v1277, 7
      %v1279 = vsub.s32 %v1276, %v1278
      %v1280 = vrot.slane %v1221, %v1279
      %v1282 = vunpack.c.l.s4 1966171168
      %v1283 = vunpack.c.0.s8 %v1282
      %v1284 = vlaneseq
      %v1285 = vshrl.u32 %v1284, 7
      %v1286 = vsub.s32 %v1283, %v1285
      %v1287 = vrot.slane %v1273, %v1286
      %v1288 = vcombine.high %v1280, %v1280
      %v1289 = vcombine.high %v1287, %v1287
      %v1291 = vunpack.c.l.s4 1966171168
      %v1292 = vunpack.c.0.s8 %v1291
      %v1293 = vlaneseq
      %v1294 = vshrl.u32 %v1293, 7
      %v1295 = vsub.s32 %v1292, %v1294
      %v1296 = vrot.slane %v1280, %v1295
      %v1298 = vunpack.c.l.s4 1966171168
      %v1299 = vunpack.c.0.s8 %v1298
      %v1300 = vlaneseq
      %v1301 = vshrl.u32 %v1300, 7
      %v1302 = vsub.s32 %v1299, %v1301
      %v1303 = vrot.slane %v1287, %v1302
      %v1305 = vunpack.c.l.s4 1966171168
      %v1306 = vunpack.c.0.s8 %v1305
      %v1307 = vlaneseq
      %v1308 = vshrl.u32 %v1307, 7
      %v1309 = vsub.s32 %v1306, %v1308
      %v1310 = vrot.slane %v1288, %v1309
      %v1312 = vunpack.c.l.s4 1966171168
      %v1313 = vunpack.c.0.s8 %v1312
      %v1314 = vlaneseq
      %v1315 = vshrl.u32 %v1314, 7
      %v1316 = vsub.s32 %v1313, %v1315
      %v1317 = vrot.slane %v1289, %v1316
      %v1318 = vcombine.high %v1296, %v1296
      %v1319 = vcombine.high %v1303, %v1303
      %v1320 = vcombine.high %v1310, %v1310
      %v1321 = vcombine.high %v1317, %v1317
      %v1322 = vlaneseq
      %v1323 = vshrl.u32 %v1322, 7
      %v1324 = vsub.s32 0, %v1323
      %v1325 = vrot.slane %v1247, %v1324
      %v1326 = vlaneseq
      %v1327 = vshrl.u32 %v1326, 7
      %v1328 = vsub.s32 0, %v1327
      %v1329 = vrot.slane %v1261, %v1328
      %v1330 = vlaneseq
      %v1331 = vshrl.u32 %v1330, 7
      %v1332 = vsub.s32 0, %v1331
      %v1333 = vrot.slane %v1269, %v1332
      %v1334 = vlaneseq
      %v1335 = vshrl.u32 %v1334, 7
      %v1336 = vsub.s32 0, %v1335
      %v1337 = vrot.slane %v1271, %v1336
      %v1338 = vlaneseq
      %v1339 = vshrl.u32 %v1338, 7
      %v1340 = vsub.s32 0, %v1339
      %v1341 = vrot.slane %v1254, %v1340
      %v1342 = vlaneseq
      %v1343 = vshrl.u32 %v1342, 7
      %v1344 = vsub.s32 0, %v1343
      %v1345 = vrot.slane %v1268, %v1344
      %v1346 = vlaneseq
      %v1347 = vshrl.u32 %v1346, 7
      %v1348 = vsub.s32 0, %v1347
      %v1349 = vrot.slane %v1270, %v1348
      %v1350 = vlaneseq
      %v1351 = vshrl.u32 %v1350, 7
      %v1352 = vsub.s32 0, %v1351
      %v1353 = vrot.slane %v1272, %v1352
      %v1354 = vlaneseq
      %v1355 = vshrl.u32 %v1354, 7
      %v1356 = vsub.s32 0, %v1355
      %v1357 = vrot.slane %v1296, %v1356
      %v1358 = vlaneseq
      %v1359 = vshrl.u32 %v1358, 7
      %v1360 = vsub.s32 0, %v1359
      %v1361 = vrot.slane %v1310, %v1360
      %v1362 = vlaneseq
      %v1363 = vshrl.u32 %v1362, 7
      %v1364 = vsub.s32 0, %v1363
      %v1365 = vrot.slane %v1318, %v1364
      %v1366 = vlaneseq
      %v1367 = vshrl.u32 %v1366, 7
      %v1368 = vsub.s32 0, %v1367
      %v1369 = vrot.slane %v1320, %v1368
      %v1370 = vlaneseq
      %v1371 = vshrl.u32 %v1370, 7
      %v1372 = vsub.s32 0, %v1371
      %v1373 = vrot.slane %v1303, %v1372
      %v1374 = vlaneseq
      %v1375 = vshrl.u32 %v1374, 7
      %v1376 = vsub.s32 0, %v1375
      %v1377 = vrot.slane %v1317, %v1376
      %v1378 = vlaneseq
      %v1379 = vshrl.u32 %v1378, 7
      %v1380 = vsub.s32 0, %v1379
      %v1381 = vrot.slane %v1319, %v1380
      %v1382 = vlaneseq
      %v1383 = vshrl.u32 %v1382, 7
      %v1384 = vsub.s32 0, %v1383
      %v1385 = vrot.slane %v1321, %v1384
      %1386 = vrot.lane.b32.xlu0 %v1325, 96
      %v1387 = vpop.permute.xlu0 %1386
      %1388 = vrot.lane.b32.xlu0 %v1329, 96
      %v1389 = vpop.permute.xlu0 %1388
      %1390 = vrot.lane.b32.xlu0 %v1333, 96
      %v1391 = vpop.permute.xlu0 %1390
      %1392 = vrot.lane.b32.xlu0 %v1337, 96
      %v1393 = vpop.permute.xlu0 %1392
      %1394 = vrot.lane.b32.xlu0 %v1341, 96
      %v1395 = vpop.permute.xlu0 %1394
      %1396 = vrot.lane.b32.xlu0 %v1345, 96
      %v1397 = vpop.permute.xlu0 %1396
      %1398 = vrot.lane.b32.xlu0 %v1349, 96
      %v1399 = vpop.permute.xlu0 %1398
      %1400 = vrot.lane.b32.xlu0 %v1353, 96
      %v1401 = vpop.permute.xlu0 %1400
      %1402 = vrot.lane.b32.xlu0 %v1357, 96
      %v1403 = vpop.permute.xlu0 %1402
      %1404 = vrot.lane.b32.xlu0 %v1361, 96
      %v1405 = vpop.permute.xlu0 %1404
      %1406 = vrot.lane.b32.xlu0 %v1365, 96
      %v1407 = vpop.permute.xlu0 %1406
      %1408 = vrot.lane.b32.xlu0 %v1369, 96
      %v1409 = vpop.permute.xlu0 %1408
      %1410 = vrot.lane.b32.xlu0 %v1373, 96
      %v1411 = vpop.permute.xlu0 %1410
      %1412 = vrot.lane.b32.xlu0 %v1377, 96
      %v1413 = vpop.permute.xlu0 %1412
      %1414 = vrot.lane.b32.xlu0 %v1381, 96
      %v1415 = vpop.permute.xlu0 %1414
      %1416 = vrot.lane.b32.xlu0 %v1385, 96
      %v1417 = vpop.permute.xlu0 %1416
      %1434 = vst.msk [vmem:[#allocation3 + $0x4] sm:$0x1] %vm505, %v1387
      %1435 = vst.msk [vmem:[#allocation3 + $0xc] sm:$0x1] %vm505, %v1389
      %1436 = vst.msk [vmem:[#allocation3 + $0x14] sm:$0x1] %vm505, %v1391
      %1437 = vst.msk [vmem:[#allocation3 + $0x1c] sm:$0x1] %vm505, %v1393
      %1438 = vst.msk [vmem:[#allocation3 + $0x24] sm:$0x1] %vm505, %v1395
      %1439 = vst.msk [vmem:[#allocation3 + $0x2c] sm:$0x1] %vm505, %v1397
      %1440 = vst.msk [vmem:[#allocation3 + $0x34] sm:$0x1] %vm505, %v1399
      %1441 = vst.msk [vmem:[#allocation3 + $0x3c] sm:$0x1] %vm505, %v1401
      %1442 = vst.msk [vmem:[#allocation3 + $0x44] sm:$0x1] %vm505, %v1403
      %1443 = vst.msk [vmem:[#allocation3 + $0x4c] sm:$0x1] %vm505, %v1405
      %1444 = vst.msk [vmem:[#allocation3 + $0x54] sm:$0x1] %vm505, %v1407
      %1445 = vst.msk [vmem:[#allocation3 + $0x5c] sm:$0x1] %vm505, %v1409
      %1446 = vst.msk [vmem:[#allocation3 + $0x64] sm:$0x1] %vm505, %v1411
      %1447 = vst.msk [vmem:[#allocation3 + $0x6c] sm:$0x1] %vm505, %v1413
      %1448 = vst.msk [vmem:[#allocation3 + $0x74] sm:$0x1] %vm505, %v1415
      %1449 = vst.msk [vmem:[#allocation3 + $0x7c] sm:$0x1] %vm505, %v1417
      %s1450 = scalar_lea.vmem [#allocation4], 32
      %1451 = vst.msk [vmem:[%s1450] sm:$0xff] %vm522, %v375
      %v1452 = vld [vmem:[#allocation2] sm:$0xff]
      %v1453 = vld [vmem:[#allocation2 + $0x8] sm:$0xff]
      %v1456 = vcombine.high %v1452, %v1452
      %v1458 = vunpack.c.l.s4 1966171168
      %v1459 = vunpack.c.0.s8 %v1458
      %v1460 = vlaneseq
      %v1461 = vshrl.u32 %v1460, 7
      %v1462 = vsub.s32 %v1459, %v1461
      %v1463 = vrot.slane %v1452, %v1462
      %v1465 = vunpack.c.l.s4 1966171168
      %v1466 = vunpack.c.0.s8 %v1465
      %v1467 = vlaneseq
      %v1468 = vshrl.u32 %v1467, 7
      %v1469 = vsub.s32 %v1466, %v1468
      %v1470 = vrot.slane %v1456, %v1469
      %v1471 = vcombine.high %v1463, %v1463
      %v1472 = vcombine.high %v1470, %v1470
      %v1474 = vunpack.c.l.s4 1966171168
      %v1475 = vunpack.c.0.s8 %v1474
      %v1476 = vlaneseq
      %v1477 = vshrl.u32 %v1476, 7
      %v1478 = vsub.s32 %v1475, %v1477
      %v1479 = vrot.slane %v1463, %v1478
      %v1481 = vunpack.c.l.s4 1966171168
      %v1482 = vunpack.c.0.s8 %v1481
      %v1483 = vlaneseq
      %v1484 = vshrl.u32 %v1483, 7
      %v1485 = vsub.s32 %v1482, %v1484
      %v1486 = vrot.slane %v1470, %v1485
      %v1488 = vunpack.c.l.s4 1966171168
      %v1489 = vunpack.c.0.s8 %v1488
      %v1490 = vlaneseq
      %v1491 = vshrl.u32 %v1490, 7
      %v1492 = vsub.s32 %v1489, %v1491
      %v1493 = vrot.slane %v1471, %v1492
      %v1495 = vunpack.c.l.s4 1966171168
      %v1496 = vunpack.c.0.s8 %v1495
      %v1497 = vlaneseq
      %v1498 = vshrl.u32 %v1497, 7
      %v1499 = vsub.s32 %v1496, %v1498
      %v1500 = vrot.slane %v1472, %v1499
      %v1501 = vcombine.high %v1479, %v1479
      %v1502 = vcombine.high %v1486, %v1486
      %v1503 = vcombine.high %v1493, %v1493
      %v1504 = vcombine.high %v1500, %v1500
      %v1505 = vcombine.high %v1453, %v1453
      %v1507 = vunpack.c.l.s4 1966171168
      %v1508 = vunpack.c.0.s8 %v1507
      %v1509 = vlaneseq
      %v1510 = vshrl.u32 %v1509, 7
      %v1511 = vsub.s32 %v1508, %v1510
      %v1512 = vrot.slane %v1453, %v1511
      %v1514 = vunpack.c.l.s4 1966171168
      %v1515 = vunpack.c.0.s8 %v1514
      %v1516 = vlaneseq
      %v1517 = vshrl.u32 %v1516, 7
      %v1518 = vsub.s32 %v1515, %v1517
      %v1519 = vrot.slane %v1505, %v1518
      %v1520 = vcombine.high %v1512, %v1512
      %v1521 = vcombine.high %v1519, %v1519
      %v1523 = vunpack.c.l.s4 1966171168
      %v1524 = vunpack.c.0.s8 %v1523
      %v1525 = vlaneseq
      %v1526 = vshrl.u32 %v1525, 7
      %v1527 = vsub.s32 %v1524, %v1526
      %v1528 = vrot.slane %v1512, %v1527
      %v1530 = vunpack.c.l.s4 1966171168
      %v1531 = vunpack.c.0.s8 %v1530
      %v1532 = vlaneseq
      %v1533 = vshrl.u32 %v1532, 7
      %v1534 = vsub.s32 %v1531, %v1533
      %v1535 = vrot.slane %v1519, %v1534
      %v1537 = vunpack.c.l.s4 1966171168
      %v1538 = vunpack.c.0.s8 %v1537
      %v1539 = vlaneseq
      %v1540 = vshrl.u32 %v1539, 7
      %v1541 = vsub.s32 %v1538, %v1540
      %v1542 = vrot.slane %v1520, %v1541
      %v1544 = vunpack.c.l.s4 1966171168
      %v1545 = vunpack.c.0.s8 %v1544
      %v1546 = vlaneseq
      %v1547 = vshrl.u32 %v1546, 7
      %v1548 = vsub.s32 %v1545, %v1547
      %v1549 = vrot.slane %v1521, %v1548
      %v1550 = vcombine.high %v1528, %v1528
      %v1551 = vcombine.high %v1535, %v1535
      %v1552 = vcombine.high %v1542, %v1542
      %v1553 = vcombine.high %v1549, %v1549
      %v1554 = vlaneseq
      %v1555 = vshrl.u32 %v1554, 7
      %v1556 = vsub.s32 0, %v1555
      %v1557 = vrot.slane %v1479, %v1556
      %v1558 = vlaneseq
      %v1559 = vshrl.u32 %v1558, 7
      %v1560 = vsub.s32 0, %v1559
      %v1561 = vrot.slane %v1493, %v1560
      %v1562 = vlaneseq
      %v1563 = vshrl.u32 %v1562, 7
      %v1564 = vsub.s32 0, %v1563
      %v1565 = vrot.slane %v1501, %v1564
      %v1566 = vlaneseq
      %v1567 = vshrl.u32 %v1566, 7
      %v1568 = vsub.s32 0, %v1567
      %v1569 = vrot.slane %v1503, %v1568
      %v1570 = vlaneseq
      %v1571 = vshrl.u32 %v1570, 7
      %v1572 = vsub.s32 0, %v1571
      %v1573 = vrot.slane %v1486, %v1572
      %v1574 = vlaneseq
      %v1575 = vshrl.u32 %v1574, 7
      %v1576 = vsub.s32 0, %v1575
      %v1577 = vrot.slane %v1500, %v1576
      %v1578 = vlaneseq
      %v1579 = vshrl.u32 %v1578, 7
      %v1580 = vsub.s32 0, %v1579
      %v1581 = vrot.slane %v1502, %v1580
      %v1582 = vlaneseq
      %v1583 = vshrl.u32 %v1582, 7
      %v1584 = vsub.s32 0, %v1583
      %v1585 = vrot.slane %v1504, %v1584
      %v1586 = vlaneseq
      %v1587 = vshrl.u32 %v1586, 7
      %v1588 = vsub.s32 0, %v1587
      %v1589 = vrot.slane %v1528, %v1588
      %v1590 = vlaneseq
      %v1591 = vshrl.u32 %v1590, 7
      %v1592 = vsub.s32 0, %v1591
      %v1593 = vrot.slane %v1542, %v1592
      %v1594 = vlaneseq
      %v1595 = vshrl.u32 %v1594, 7
      %v1596 = vsub.s32 0, %v1595
      %v1597 = vrot.slane %v1550, %v1596
      %v1598 = vlaneseq
      %v1599 = vshrl.u32 %v1598, 7
      %v1600 = vsub.s32 0, %v1599
      %v1601 = vrot.slane %v1552, %v1600
      %v1602 = vlaneseq
      %v1603 = vshrl.u32 %v1602, 7
      %v1604 = vsub.s32 0, %v1603
      %v1605 = vrot.slane %v1535, %v1604
      %v1606 = vlaneseq
      %v1607 = vshrl.u32 %v1606, 7
      %v1608 = vsub.s32 0, %v1607
      %v1609 = vrot.slane %v1549, %v1608
      %v1610 = vlaneseq
      %v1611 = vshrl.u32 %v1610, 7
      %v1612 = vsub.s32 0, %v1611
      %v1613 = vrot.slane %v1551, %v1612
      %v1614 = vlaneseq
      %v1615 = vshrl.u32 %v1614, 7
      %v1616 = vsub.s32 0, %v1615
      %v1617 = vrot.slane %v1553, %v1616
      %1618 = vrot.lane.b32.xlu0 %v1557, 88
      %v1619 = vpop.permute.xlu0 %1618
      %1620 = vrot.lane.b32.xlu0 %v1561, 88
      %v1621 = vpop.permute.xlu0 %1620
      %1622 = vrot.lane.b32.xlu0 %v1565, 88
      %v1623 = vpop.permute.xlu0 %1622
      %1624 = vrot.lane.b32.xlu0 %v1569, 88
      %v1625 = vpop.permute.xlu0 %1624
      %1626 = vrot.lane.b32.xlu0 %v1573, 88
      %v1627 = vpop.permute.xlu0 %1626
      %1628 = vrot.lane.b32.xlu0 %v1577, 88
      %v1629 = vpop.permute.xlu0 %1628
      %1630 = vrot.lane.b32.xlu0 %v1581, 88
      %v1631 = vpop.permute.xlu0 %1630
      %1632 = vrot.lane.b32.xlu0 %v1585, 88
      %v1633 = vpop.permute.xlu0 %1632
      %1634 = vrot.lane.b32.xlu0 %v1589, 88
      %v1635 = vpop.permute.xlu0 %1634
      %1636 = vrot.lane.b32.xlu0 %v1593, 88
      %v1637 = vpop.permute.xlu0 %1636
      %1638 = vrot.lane.b32.xlu0 %v1597, 88
      %v1639 = vpop.permute.xlu0 %1638
      %1640 = vrot.lane.b32.xlu0 %v1601, 88
      %v1641 = vpop.permute.xlu0 %1640
      %1642 = vrot.lane.b32.xlu0 %v1605, 88
      %v1643 = vpop.permute.xlu0 %1642
      %1644 = vrot.lane.b32.xlu0 %v1609, 88
      %v1645 = vpop.permute.xlu0 %1644
      %1646 = vrot.lane.b32.xlu0 %v1613, 88
      %v1647 = vpop.permute.xlu0 %1646
      %1648 = vrot.lane.b32.xlu0 %v1617, 88
      %v1649 = vpop.permute.xlu0 %1648
      %1666 = vst.msk [vmem:[#allocation3 + $0x5] sm:$0x1] %vm505, %v1619
      %1667 = vst.msk [vmem:[#allocation3 + $0xd] sm:$0x1] %vm505, %v1621
      %1668 = vst.msk [vmem:[#allocation3 + $0x15] sm:$0x1] %vm505, %v1623
      %1669 = vst.msk [vmem:[#allocation3 + $0x1d] sm:$0x1] %vm505, %v1625
      %1670 = vst.msk [vmem:[#allocation3 + $0x25] sm:$0x1] %vm505, %v1627
      %1671 = vst.msk [vmem:[#allocation3 + $0x2d] sm:$0x1] %vm505, %v1629
      %1672 = vst.msk [vmem:[#allocation3 + $0x35] sm:$0x1] %vm505, %v1631
      %1673 = vst.msk [vmem:[#allocation3 + $0x3d] sm:$0x1] %vm505, %v1633
      %1674 = vst.msk [vmem:[#allocation3 + $0x45] sm:$0x1] %vm505, %v1635
      %1675 = vst.msk [vmem:[#allocation3 + $0x4d] sm:$0x1] %vm505, %v1637
      %1676 = vst.msk [vmem:[#allocation3 + $0x55] sm:$0x1] %vm505, %v1639
      %1677 = vst.msk [vmem:[#allocation3 + $0x5d] sm:$0x1] %vm505, %v1641
      %1678 = vst.msk [vmem:[#allocation3 + $0x65] sm:$0x1] %vm505, %v1643
      %1679 = vst.msk [vmem:[#allocation3 + $0x6d] sm:$0x1] %vm505, %v1645
      %1680 = vst.msk [vmem:[#allocation3 + $0x75] sm:$0x1] %vm505, %v1647
      %1681 = vst.msk [vmem:[#allocation3 + $0x7d] sm:$0x1] %vm505, %v1649
      %s1682 = scalar_lea.vmem [#allocation4], 40
      %1683 = vst.msk [vmem:[%s1682] sm:$0xff] %vm522, %v376
      %v1684 = vld [vmem:[#allocation2] sm:$0xff]
      %v1685 = vld [vmem:[#allocation2 + $0x8] sm:$0xff]
      %v1688 = vcombine.high %v1684, %v1684
      %v1690 = vunpack.c.l.s4 1966171168
      %v1691 = vunpack.c.0.s8 %v1690
      %v1692 = vlaneseq
      %v1693 = vshrl.u32 %v1692, 7
      %v1694 = vsub.s32 %v1691, %v1693
      %v1695 = vrot.slane %v1684, %v1694
      %v1697 = vunpack.c.l.s4 1966171168
      %v1698 = vunpack.c.0.s8 %v1697
      %v1699 = vlaneseq
      %v1700 = vshrl.u32 %v1699, 7
      %v1701 = vsub.s32 %v1698, %v1700
      %v1702 = vrot.slane %v1688, %v1701
      %v1703 = vcombine.high %v1695, %v1695
      %v1704 = vcombine.high %v1702, %v1702
      %v1706 = vunpack.c.l.s4 1966171168
      %v1707 = vunpack.c.0.s8 %v1706
      %v1708 = vlaneseq
      %v1709 = vshrl.u32 %v1708, 7
      %v1710 = vsub.s32 %v1707, %v1709
      %v1711 = vrot.slane %v1695, %v1710
      %v1713 = vunpack.c.l.s4 1966171168
      %v1714 = vunpack.c.0.s8 %v1713
      %v1715 = vlaneseq
      %v1716 = vshrl.u32 %v1715, 7
      %v1717 = vsub.s32 %v1714, %v1716
      %v1718 = vrot.slane %v1702, %v1717
      %v1720 = vunpack.c.l.s4 1966171168
      %v1721 = vunpack.c.0.s8 %v1720
      %v1722 = vlaneseq
      %v1723 = vshrl.u32 %v1722, 7
      %v1724 = vsub.s32 %v1721, %v1723
      %v1725 = vrot.slane %v1703, %v1724
      %v1727 = vunpack.c.l.s4 1966171168
      %v1728 = vunpack.c.0.s8 %v1727
      %v1729 = vlaneseq
      %v1730 = vshrl.u32 %v1729, 7
      %v1731 = vsub.s32 %v1728, %v1730
      %v1732 = vrot.slane %v1704, %v1731
      %v1733 = vcombine.high %v1711, %v1711
      %v1734 = vcombine.high %v1718, %v1718
      %v1735 = vcombine.high %v1725, %v1725
      %v1736 = vcombine.high %v1732, %v1732
      %v1737 = vcombine.high %v1685, %v1685
      %v1739 = vunpack.c.l.s4 1966171168
      %v1740 = vunpack.c.0.s8 %v1739
      %v1741 = vlaneseq
      %v1742 = vshrl.u32 %v1741, 7
      %v1743 = vsub.s32 %v1740, %v1742
      %v1744 = vrot.slane %v1685, %v1743
      %v1746 = vunpack.c.l.s4 1966171168
      %v1747 = vunpack.c.0.s8 %v1746
      %v1748 = vlaneseq
      %v1749 = vshrl.u32 %v1748, 7
      %v1750 = vsub.s32 %v1747, %v1749
      %v1751 = vrot.slane %v1737, %v1750
      %v1752 = vcombine.high %v1744, %v1744
      %v1753 = vcombine.high %v1751, %v1751
      %v1755 = vunpack.c.l.s4 1966171168
      %v1756 = vunpack.c.0.s8 %v1755
      %v1757 = vlaneseq
      %v1758 = vshrl.u32 %v1757, 7
      %v1759 = vsub.s32 %v1756, %v1758
      %v1760 = vrot.slane %v1744, %v1759
      %v1762 = vunpack.c.l.s4 1966171168
      %v1763 = vunpack.c.0.s8 %v1762
      %v1764 = vlaneseq
      %v1765 = vshrl.u32 %v1764, 7
      %v1766 = vsub.s32 %v1763, %v1765
      %v1767 = vrot.slane %v1751, %v1766
      %v1769 = vunpack.c.l.s4 1966171168
      %v1770 = vunpack.c.0.s8 %v1769
      %v1771 = vlaneseq
      %v1772 = vshrl.u32 %v1771, 7
      %v1773 = vsub.s32 %v1770, %v1772
      %v1774 = vrot.slane %v1752, %v1773
      %v1776 = vunpack.c.l.s4 1966171168
      %v1777 = vunpack.c.0.s8 %v1776
      %v1778 = vlaneseq
      %v1779 = vshrl.u32 %v1778, 7
      %v1780 = vsub.s32 %v1777, %v1779
      %v1781 = vrot.slane %v1753, %v1780
      %v1782 = vcombine.high %v1760, %v1760
      %v1783 = vcombine.high %v1767, %v1767
      %v1784 = vcombine.high %v1774, %v1774
      %v1785 = vcombine.high %v1781, %v1781
      %v1786 = vlaneseq
      %v1787 = vshrl.u32 %v1786, 7
      %v1788 = vsub.s32 0, %v1787
      %v1789 = vrot.slane %v1711, %v1788
      %v1790 = vlaneseq
      %v1791 = vshrl.u32 %v1790, 7
      %v1792 = vsub.s32 0, %v1791
      %v1793 = vrot.slane %v1725, %v1792
      %v1794 = vlaneseq
      %v1795 = vshrl.u32 %v1794, 7
      %v1796 = vsub.s32 0, %v1795
      %v1797 = vrot.slane %v1733, %v1796
      %v1798 = vlaneseq
      %v1799 = vshrl.u32 %v1798, 7
      %v1800 = vsub.s32 0, %v1799
      %v1801 = vrot.slane %v1735, %v1800
      %v1802 = vlaneseq
      %v1803 = vshrl.u32 %v1802, 7
      %v1804 = vsub.s32 0, %v1803
      %v1805 = vrot.slane %v1718, %v1804
      %v1806 = vlaneseq
      %v1807 = vshrl.u32 %v1806, 7
      %v1808 = vsub.s32 0, %v1807
      %v1809 = vrot.slane %v1732, %v1808
      %v1810 = vlaneseq
      %v1811 = vshrl.u32 %v1810, 7
      %v1812 = vsub.s32 0, %v1811
      %v1813 = vrot.slane %v1734, %v1812
      %v1814 = vlaneseq
      %v1815 = vshrl.u32 %v1814, 7
      %v1816 = vsub.s32 0, %v1815
      %v1817 = vrot.slane %v1736, %v1816
      %v1818 = vlaneseq
      %v1819 = vshrl.u32 %v1818, 7
      %v1820 = vsub.s32 0, %v1819
      %v1821 = vrot.slane %v1760, %v1820
      %v1822 = vlaneseq
      %v1823 = vshrl.u32 %v1822, 7
      %v1824 = vsub.s32 0, %v1823
      %v1825 = vrot.slane %v1774, %v1824
      %v1826 = vlaneseq
      %v1827 = vshrl.u32 %v1826, 7
      %v1828 = vsub.s32 0, %v1827
      %v1829 = vrot.slane %v1782, %v1828
      %v1830 = vlaneseq
      %v1831 = vshrl.u32 %v1830, 7
      %v1832 = vsub.s32 0, %v1831
      %v1833 = vrot.slane %v1784, %v1832
      %v1834 = vlaneseq
      %v1835 = vshrl.u32 %v1834, 7
      %v1836 = vsub.s32 0, %v1835
      %v1837 = vrot.slane %v1767, %v1836
      %v1838 = vlaneseq
      %v1839 = vshrl.u32 %v1838, 7
      %v1840 = vsub.s32 0, %v1839
      %v1841 = vrot.slane %v1781, %v1840
      %v1842 = vlaneseq
      %v1843 = vshrl.u32 %v1842, 7
      %v1844 = vsub.s32 0, %v1843
      %v1845 = vrot.slane %v1783, %v1844
      %v1846 = vlaneseq
      %v1847 = vshrl.u32 %v1846, 7
      %v1848 = vsub.s32 0, %v1847
      %v1849 = vrot.slane %v1785, %v1848
      %1850 = vrot.lane.b32.xlu0 %v1789, 80
      %v1851 = vpop.permute.xlu0 %1850
      %1852 = vrot.lane.b32.xlu0 %v1793, 80
      %v1853 = vpop.permute.xlu0 %1852
      %1854 = vrot.lane.b32.xlu0 %v1797, 80
      %v1855 = vpop.permute.xlu0 %1854
      %1856 = vrot.lane.b32.xlu0 %v1801, 80
      %v1857 = vpop.permute.xlu0 %1856
      %1858 = vrot.lane.b32.xlu0 %v1805, 80
      %v1859 = vpop.permute.xlu0 %1858
      %1860 = vrot.lane.b32.xlu0 %v1809, 80
      %v1861 = vpop.permute.xlu0 %1860
      %1862 = vrot.lane.b32.xlu0 %v1813, 80
      %v1863 = vpop.permute.xlu0 %1862
      %1864 = vrot.lane.b32.xlu0 %v1817, 80
      %v1865 = vpop.permute.xlu0 %1864
      %1866 = vrot.lane.b32.xlu0 %v1821, 80
      %v1867 = vpop.permute.xlu0 %1866
      %1868 = vrot.lane.b32.xlu0 %v1825, 80
      %v1869 = vpop.permute.xlu0 %1868
      %1870 = vrot.lane.b32.xlu0 %v1829, 80
      %v1871 = vpop.permute.xlu0 %1870
      %1872 = vrot.lane.b32.xlu0 %v1833, 80
      %v1873 = vpop.permute.xlu0 %1872
      %1874 = vrot.lane.b32.xlu0 %v1837, 80
      %v1875 = vpop.permute.xlu0 %1874
      %1876 = vrot.lane.b32.xlu0 %v1841, 80
      %v1877 = vpop.permute.xlu0 %1876
      %1878 = vrot.lane.b32.xlu0 %v1845, 80
      %v1879 = vpop.permute.xlu0 %1878
      %1880 = vrot.lane.b32.xlu0 %v1849, 80
      %v1881 = vpop.permute.xlu0 %1880
      %1898 = vst.msk [vmem:[#allocation3 + $0x6] sm:$0x1] %vm505, %v1851
      %1899 = vst.msk [vmem:[#allocation3 + $0xe] sm:$0x1] %vm505, %v1853
      %1900 = vst.msk [vmem:[#allocation3 + $0x16] sm:$0x1] %vm505, %v1855
      %1901 = vst.msk [vmem:[#allocation3 + $0x1e] sm:$0x1] %vm505, %v1857
      %1902 = vst.msk [vmem:[#allocation3 + $0x26] sm:$0x1] %vm505, %v1859
      %1903 = vst.msk [vmem:[#allocation3 + $0x2e] sm:$0x1] %vm505, %v1861
      %1904 = vst.msk [vmem:[#allocation3 + $0x36] sm:$0x1] %vm505, %v1863
      %1905 = vst.msk [vmem:[#allocation3 + $0x3e] sm:$0x1] %vm505, %v1865
      %1906 = vst.msk [vmem:[#allocation3 + $0x46] sm:$0x1] %vm505, %v1867
      %1907 = vst.msk [vmem:[#allocation3 + $0x4e] sm:$0x1] %vm505, %v1869
      %1908 = vst.msk [vmem:[#allocation3 + $0x56] sm:$0x1] %vm505, %v1871
      %1909 = vst.msk [vmem:[#allocation3 + $0x5e] sm:$0x1] %vm505, %v1873
      %1910 = vst.msk [vmem:[#allocation3 + $0x66] sm:$0x1] %vm505, %v1875
      %1911 = vst.msk [vmem:[#allocation3 + $0x6e] sm:$0x1] %vm505, %v1877
      %1912 = vst.msk [vmem:[#allocation3 + $0x76] sm:$0x1] %vm505, %v1879
      %1913 = vst.msk [vmem:[#allocation3 + $0x7e] sm:$0x1] %vm505, %v1881
      %s1914 = scalar_lea.vmem [#allocation4], 48
      %1915 = vst.msk [vmem:[%s1914] sm:$0xff] %vm522, %v377
      %v1916 = vld [vmem:[#allocation2] sm:$0xff]
      %v1917 = vld [vmem:[#allocation2 + $0x8] sm:$0xff]
      %v1920 = vcombine.high %v1916, %v1916
      %v1922 = vunpack.c.l.s4 1966171168
      %v1923 = vunpack.c.0.s8 %v1922
      %v1924 = vlaneseq
      %v1925 = vshrl.u32 %v1924, 7
      %v1926 = vsub.s32 %v1923, %v1925
      %v1927 = vrot.slane %v1916, %v1926
      %v1929 = vunpack.c.l.s4 1966171168
      %v1930 = vunpack.c.0.s8 %v1929
      %v1931 = vlaneseq
      %v1932 = vshrl.u32 %v1931, 7
      %v1933 = vsub.s32 %v1930, %v1932
      %v1934 = vrot.slane %v1920, %v1933
      %v1935 = vcombine.high %v1927, %v1927
      %v1936 = vcombine.high %v1934, %v1934
      %v1938 = vunpack.c.l.s4 1966171168
      %v1939 = vunpack.c.0.s8 %v1938
      %v1940 = vlaneseq
      %v1941 = vshrl.u32 %v1940, 7
      %v1942 = vsub.s32 %v1939, %v1941
      %v1943 = vrot.slane %v1927, %v1942
      %v1945 = vunpack.c.l.s4 1966171168
      %v1946 = vunpack.c.0.s8 %v1945
      %v1947 = vlaneseq
      %v1948 = vshrl.u32 %v1947, 7
      %v1949 = vsub.s32 %v1946, %v1948
      %v1950 = vrot.slane %v1934, %v1949
      %v1952 = vunpack.c.l.s4 1966171168
      %v1953 = vunpack.c.0.s8 %v1952
      %v1954 = vlaneseq
      %v1955 = vshrl.u32 %v1954, 7
      %v1956 = vsub.s32 %v1953, %v1955
      %v1957 = vrot.slane %v1935, %v1956
      %v1959 = vunpack.c.l.s4 1966171168
      %v1960 = vunpack.c.0.s8 %v1959
      %v1961 = vlaneseq
      %v1962 = vshrl.u32 %v1961, 7
      %v1963 = vsub.s32 %v1960, %v1962
      %v1964 = vrot.slane %v1936, %v1963
      %v1965 = vcombine.high %v1943, %v1943
      %v1966 = vcombine.high %v1950, %v1950
      %v1967 = vcombine.high %v1957, %v1957
      %v1968 = vcombine.high %v1964, %v1964
      %v1969 = vcombine.high %v1917, %v1917
      %v1971 = vunpack.c.l.s4 1966171168
      %v1972 = vunpack.c.0.s8 %v1971
      %v1973 = vlaneseq
      %v1974 = vshrl.u32 %v1973, 7
      %v1975 = vsub.s32 %v1972, %v1974
      %v1976 = vrot.slane %v1917, %v1975
      %v1978 = vunpack.c.l.s4 1966171168
      %v1979 = vunpack.c.0.s8 %v1978
      %v1980 = vlaneseq
      %v1981 = vshrl.u32 %v1980, 7
      %v1982 = vsub.s32 %v1979, %v1981
      %v1983 = vrot.slane %v1969, %v1982
      %v1984 = vcombine.high %v1976, %v1976
      %v1985 = vcombine.high %v1983, %v1983
      %v1987 = vunpack.c.l.s4 1966171168
      %v1988 = vunpack.c.0.s8 %v1987
      %v1989 = vlaneseq
      %v1990 = vshrl.u32 %v1989, 7
      %v1991 = vsub.s32 %v1988, %v1990
      %v1992 = vrot.slane %v1976, %v1991
      %v1994 = vunpack.c.l.s4 1966171168
      %v1995 = vunpack.c.0.s8 %v1994
      %v1996 = vlaneseq
      %v1997 = vshrl.u32 %v1996, 7
      %v1998 = vsub.s32 %v1995, %v1997
      %v1999 = vrot.slane %v1983, %v1998
      %v2001 = vunpack.c.l.s4 1966171168
      %v2002 = vunpack.c.0.s8 %v2001
      %v2003 = vlaneseq
      %v2004 = vshrl.u32 %v2003, 7
      %v2005 = vsub.s32 %v2002, %v2004
      %v2006 = vrot.slane %v1984, %v2005
      %v2008 = vunpack.c.l.s4 1966171168
      %v2009 = vunpack.c.0.s8 %v2008
      %v2010 = vlaneseq
      %v2011 = vshrl.u32 %v2010, 7
      %v2012 = vsub.s32 %v2009, %v2011
      %v2013 = vrot.slane %v1985, %v2012
      %v2014 = vcombine.high %v1992, %v1992
      %v2015 = vcombine.high %v1999, %v1999
      %v2016 = vcombine.high %v2006, %v2006
      %v2017 = vcombine.high %v2013, %v2013
      %v2018 = vlaneseq
      %v2019 = vshrl.u32 %v2018, 7
      %v2020 = vsub.s32 0, %v2019
      %v2021 = vrot.slane %v1943, %v2020
      %v2022 = vlaneseq
      %v2023 = vshrl.u32 %v2022, 7
      %v2024 = vsub.s32 0, %v2023
      %v2025 = vrot.slane %v1957, %v2024
      %v2026 = vlaneseq
      %v2027 = vshrl.u32 %v2026, 7
      %v2028 = vsub.s32 0, %v2027
      %v2029 = vrot.slane %v1965, %v2028
      %v2030 = vlaneseq
      %v2031 = vshrl.u32 %v2030, 7
      %v2032 = vsub.s32 0, %v2031
      %v2033 = vrot.slane %v1967, %v2032
      %v2034 = vlaneseq
      %v2035 = vshrl.u32 %v2034, 7
      %v2036 = vsub.s32 0, %v2035
      %v2037 = vrot.slane %v1950, %v2036
      %v2038 = vlaneseq
      %v2039 = vshrl.u32 %v2038, 7
      %v2040 = vsub.s32 0, %v2039
      %v2041 = vrot.slane %v1964, %v2040
      %v2042 = vlaneseq
      %v2043 = vshrl.u32 %v2042, 7
      %v2044 = vsub.s32 0, %v2043
      %v2045 = vrot.slane %v1966, %v2044
      %v2046 = vlaneseq
      %v2047 = vshrl.u32 %v2046, 7
      %v2048 = vsub.s32 0, %v2047
      %v2049 = vrot.slane %v1968, %v2048
      %v2050 = vlaneseq
      %v2051 = vshrl.u32 %v2050, 7
      %v2052 = vsub.s32 0, %v2051
      %v2053 = vrot.slane %v1992, %v2052
      %v2054 = vlaneseq
      %v2055 = vshrl.u32 %v2054, 7
      %v2056 = vsub.s32 0, %v2055
      %v2057 = vrot.slane %v2006, %v2056
      %v2058 = vlaneseq
      %v2059 = vshrl.u32 %v2058, 7
      %v2060 = vsub.s32 0, %v2059
      %v2061 = vrot.slane %v2014, %v2060
      %v2062 = vlaneseq
      %v2063 = vshrl.u32 %v2062, 7
      %v2064 = vsub.s32 0, %v2063
      %v2065 = vrot.slane %v2016, %v2064
      %v2066 = vlaneseq
      %v2067 = vshrl.u32 %v2066, 7
      %v2068 = vsub.s32 0, %v2067
      %v2069 = vrot.slane %v1999, %v2068
      %v2070 = vlaneseq
      %v2071 = vshrl.u32 %v2070, 7
      %v2072 = vsub.s32 0, %v2071
      %v2073 = vrot.slane %v2013, %v2072
      %v2074 = vlaneseq
      %v2075 = vshrl.u32 %v2074, 7
      %v2076 = vsub.s32 0, %v2075
      %v2077 = vrot.slane %v2015, %v2076
      %v2078 = vlaneseq
      %v2079 = vshrl.u32 %v2078, 7
      %v2080 = vsub.s32 0, %v2079
      %v2081 = vrot.slane %v2017, %v2080
      %2082 = vrot.lane.b32.xlu0 %v2021, 72
      %v2083 = vpop.permute.xlu0 %2082
      %2084 = vrot.lane.b32.xlu0 %v2025, 72
      %v2085 = vpop.permute.xlu0 %2084
      %2086 = vrot.lane.b32.xlu0 %v2029, 72
      %v2087 = vpop.permute.xlu0 %2086
      %2088 = vrot.lane.b32.xlu0 %v2033, 72
      %v2089 = vpop.permute.xlu0 %2088
      %2090 = vrot.lane.b32.xlu0 %v2037, 72
      %v2091 = vpop.permute.xlu0 %2090
      %2092 = vrot.lane.b32.xlu0 %v2041, 72
      %v2093 = vpop.permute.xlu0 %2092
      %2094 = vrot.lane.b32.xlu0 %v2045, 72
      %v2095 = vpop.permute.xlu0 %2094
      %2096 = vrot.lane.b32.xlu0 %v2049, 72
      %v2097 = vpop.permute.xlu0 %2096
      %2098 = vrot.lane.b32.xlu0 %v2053, 72
      %v2099 = vpop.permute.xlu0 %2098
      %2100 = vrot.lane.b32.xlu0 %v2057, 72
      %v2101 = vpop.permute.xlu0 %2100
      %2102 = vrot.lane.b32.xlu0 %v2061, 72
      %v2103 = vpop.permute.xlu0 %2102
      %2104 = vrot.lane.b32.xlu0 %v2065, 72
      %v2105 = vpop.permute.xlu0 %2104
      %2106 = vrot.lane.b32.xlu0 %v2069, 72
      %v2107 = vpop.permute.xlu0 %2106
      %2108 = vrot.lane.b32.xlu0 %v2073, 72
      %v2109 = vpop.permute.xlu0 %2108
      %2110 = vrot.lane.b32.xlu0 %v2077, 72
      %v2111 = vpop.permute.xlu0 %2110
      %2112 = vrot.lane.b32.xlu0 %v2081, 72
      %v2113 = vpop.permute.xlu0 %2112
      %2130 = vst.msk [vmem:[#allocation3 + $0x7] sm:$0x1] %vm505, %v2083
      %2131 = vst.msk [vmem:[#allocation3 + $0xf] sm:$0x1] %vm505, %v2085
      %2132 = vst.msk [vmem:[#allocation3 + $0x17] sm:$0x1] %vm505, %v2087
      %2133 = vst.msk [vmem:[#allocation3 + $0x1f] sm:$0x1] %vm505, %v2089
      %2134 = vst.msk [vmem:[#allocation3 + $0x27] sm:$0x1] %vm505, %v2091
      %2135 = vst.msk [vmem:[#allocation3 + $0x2f] sm:$0x1] %vm505, %v2093
      %2136 = vst.msk [vmem:[#allocation3 + $0x37] sm:$0x1] %vm505, %v2095
      %2137 = vst.msk [vmem:[#allocation3 + $0x3f] sm:$0x1] %vm505, %v2097
      %2138 = vst.msk [vmem:[#allocation3 + $0x47] sm:$0x1] %vm505, %v2099
      %2139 = vst.msk [vmem:[#allocation3 + $0x4f] sm:$0x1] %vm505, %v2101
      %2140 = vst.msk [vmem:[#allocation3 + $0x57] sm:$0x1] %vm505, %v2103
      %2141 = vst.msk [vmem:[#allocation3 + $0x5f] sm:$0x1] %vm505, %v2105
      %2142 = vst.msk [vmem:[#allocation3 + $0x67] sm:$0x1] %vm505, %v2107
      %2143 = vst.msk [vmem:[#allocation3 + $0x6f] sm:$0x1] %vm505, %v2109
      %2144 = vst.msk [vmem:[#allocation3 + $0x77] sm:$0x1] %vm505, %v2111
      %2145 = vst.msk [vmem:[#allocation3 + $0x7f] sm:$0x1] %vm505, %v2113
      %s2146 = scalar_lea.vmem [#allocation4], 56
      %2147 = vst.msk [vmem:[%s2146] sm:$0xff] %vm522, %v378
      %v2148 = vld [vmem:[#allocation3] sm:$0xff]
      %v2149 = vld [vmem:[#allocation3 + $0x8] sm:$0xff]
      %v2150 = vld [vmem:[#allocation3 + $0x10] sm:$0xff]
      %v2151 = vld [vmem:[#allocation3 + $0x18] sm:$0xff]
      %v2152 = vld [vmem:[#allocation3 + $0x20] sm:$0xff]
      %v2153 = vld [vmem:[#allocation3 + $0x28] sm:$0xff]
      %v2154 = vld [vmem:[#allocation3 + $0x30] sm:$0xff]
      %v2155 = vld [vmem:[#allocation3 + $0x38] sm:$0xff]
      %v2156 = vld [vmem:[#allocation3 + $0x40] sm:$0xff]
      %v2157 = vld [vmem:[#allocation3 + $0x48] sm:$0xff]
      %v2158 = vld [vmem:[#allocation3 + $0x50] sm:$0xff]
      %v2159 = vld [vmem:[#allocation3 + $0x58] sm:$0xff]
      %v2160 = vld [vmem:[#allocation3 + $0x60] sm:$0xff]
      %v2161 = vld [vmem:[#allocation3 + $0x68] sm:$0xff]
      %v2162 = vld [vmem:[#allocation3 + $0x70] sm:$0xff]
      %v2163 = vld [vmem:[#allocation3 + $0x78] sm:$0xff]
      %v2164 = vld [vmem:[#allocation4] sm:$0xff]
      %v2165 = vld [vmem:[#allocation4 + $0x8] sm:$0xff]
      %v2166 = vld [vmem:[#allocation4 + $0x10] sm:$0xff]
      %v2167 = vld [vmem:[#allocation4 + $0x18] sm:$0xff]
      %v2168 = vld [vmem:[#allocation4 + $0x20] sm:$0xff]
      %v2169 = vld [vmem:[#allocation4 + $0x28] sm:$0xff]
      %v2170 = vld [vmem:[#allocation4 + $0x30] sm:$0xff]
      %v2171 = vld [vmem:[#allocation4 + $0x38] sm:$0xff]
      %v2173 = vsel %vm522, %v2148, 0
      %v2176 = vsel %vm522, %v2164, 0
      %2178 = vmatprep.subr.mxu0 0.0
      %2179 = vmatpush1.xpose.msra.mxu0 %v2176
      %2180 = vmatprep.subr.mxu0 0.0
      %2181 = vmatpush1.xpose.msra.mxu0 0.0
      %2182 = vmatprep.subr.mxu0 0.0
      %2183 = vmatpush1.xpose.msra.mxu0 0.0
      %2184 = vmatprep.subr.mxu0 0.0
      %2185 = vmatpush1.xpose.msra.mxu0 0.0
      %2186 = vmatprep.subr.mxu0 0.0
      %2187 = vmatpush1.xpose.msra.mxu0 0.0
      %2188 = vmatprep.subr.mxu0 0.0
      %2189 = vmatpush1.xpose.msra.mxu0 0.0
      %2190 = vmatprep.subr.mxu0 0.0
      %2191 = vmatpush1.xpose.msra.mxu0 0.0
      %2192 = vmatprep.subr.mxu0 0.0
      %2193 = vmatpush1.xpose.msra.mxu0 0.0
      %2194 = vmatprep.subr.mxu0 0.0
      %2195 = vmatpush1.xpose.msra.mxu0 0.0
      %2196 = vmatprep.subr.mxu0 0.0
      %2197 = vmatpush1.xpose.msra.mxu0 0.0
      %2198 = vmatprep.subr.mxu0 0.0
      %2199 = vmatpush1.xpose.msra.mxu0 0.0
      %2200 = vmatprep.subr.mxu0 0.0
      %2201 = vmatpush1.xpose.msra.mxu0 0.0
      %2202 = vmatprep.subr.mxu0 0.0
      %2203 = vmatpush1.xpose.msra.mxu0 0.0
      %2204 = vmatprep.subr.mxu0 0.0
      %2205 = vmatpush1.xpose.msra.mxu0 0.0
      %2206 = vmatprep.subr.mxu0 0.0
      %2207 = vmatpush1.xpose.msra.mxu0 0.0
      %2208 = vmatprep.subr.mxu0 0.0
      %2209 = vmatpush1.xpose.msra.mxu0 0.0
      %2210 = vmatprep.subr.mxu0 0.0
      %2211 = vmatpush1.xpose.msra.mxu0 0.0
      %2212 = vmatprep.subr.mxu0 0.0
      %2213 = vmatpush1.xpose.msra.mxu0 0.0
      %2214 = vmatprep.subr.mxu0 0.0
      %2215 = vmatpush1.xpose.msra.mxu0 0.0
      %2216 = vmatprep.subr.mxu0 0.0
      %2217 = vmatpush1.xpose.msra.mxu0 0.0
      %2218 = vmatprep.subr.mxu0 0.0
      %2219 = vmatpush1.xpose.msra.mxu0 0.0
      %2220 = vmatprep.subr.mxu0 0.0
      %2221 = vmatpush1.xpose.msra.mxu0 0.0
      %2222 = vmatprep.subr.mxu0 0.0
      %2223 = vmatpush1.xpose.msra.mxu0 0.0
      %2224 = vmatprep.subr.mxu0 0.0
      %2225 = vmatpush1.xpose.msra.mxu0 0.0
      %2226 = vmatprep.subr.mxu0 0.0
      %2227 = vmatpush1.xpose.msra.mxu0 0.0
      %2228 = vmatprep.subr.mxu0 0.0
      %2229 = vmatpush1.xpose.msra.mxu0 0.0
      %2230 = vmatprep.subr.mxu0 0.0
      %2231 = vmatpush1.xpose.msra.mxu0 0.0
      %2232 = vmatprep.subr.mxu0 0.0
      %2233 = vmatpush1.xpose.msra.mxu0 0.0
      %2234 = vmatprep.subr.mxu0 0.0
      %2235 = vmatpush1.xpose.msra.mxu0 0.0
      %2236 = vmatprep.subr.mxu0 0.0
      %2237 = vmatpush1.xpose.msra.mxu0 0.0
      %2238 = vmatprep.subr.mxu0 0.0
      %2239 = vmatpush1.xpose.msra.mxu0 0.0
      %2240 = vmatprep.subr.mxu0 0.0
      %2241 = vmatpush1.xpose.msra.mxu0 0.0
      %2242 = vmatprep.mubr.f32.mxu0 0.0
      %2243 = vmatmul.mubr.f32.gmra.mrb[0].mxu0 %v2173
      %v2244 = vpop.f32.mrb[0].mxu0
      %v2245 = vadd.f32 0.0, %v2244
      %v2246 = vpop.f32.mrb[0].mxu0
      %2247 = vdwg.mxu0
      %v2249 = vsel %vm522, %v2149, 0
      %v2252 = vsel %vm522, %v2165, 0
      %2254 = vmatprep.subr.mxu0 0.0
      %2255 = vmatpush1.xpose.msra.mxu0 %v2252
      %2256 = vmatprep.subr.mxu0 0.0
      %2257 = vmatpush1.xpose.msra.mxu0 0.0
      %2258 = vmatprep.subr.mxu0 0.0
      %2259 = vmatpush1.xpose.msra.mxu0 0.0
      %2260 = vmatprep.subr.mxu0 0.0
      %2261 = vmatpush1.xpose.msra.mxu0 0.0
      %2262 = vmatprep.subr.mxu0 0.0
      %2263 = vmatpush1.xpose.msra.mxu0 0.0
      %2264 = vmatprep.subr.mxu0 0.0
      %2265 = vmatpush1.xpose.msra.mxu0 0.0
      %2266 = vmatprep.subr.mxu0 0.0
      %2267 = vmatpush1.xpose.msra.mxu0 0.0
      %2268 = vmatprep.subr.mxu0 0.0
      %2269 = vmatpush1.xpose.msra.mxu0 0.0
      %2270 = vmatprep.subr.mxu0 0.0
      %2271 = vmatpush1.xpose.msra.mxu0 0.0
      %2272 = vmatprep.subr.mxu0 0.0
      %2273 = vmatpush1.xpose.msra.mxu0 0.0
      %2274 = vmatprep.subr.mxu0 0.0
      %2275 = vmatpush1.xpose.msra.mxu0 0.0
      %2276 = vmatprep.subr.mxu0 0.0
      %2277 = vmatpush1.xpose.msra.mxu0 0.0
      %2278 = vmatprep.subr.mxu0 0.0
      %2279 = vmatpush1.xpose.msra.mxu0 0.0
      %2280 = vmatprep.subr.mxu0 0.0
      %2281 = vmatpush1.xpose.msra.mxu0 0.0
      %2282 = vmatprep.subr.mxu0 0.0
      %2283 = vmatpush1.xpose.msra.mxu0 0.0
      %2284 = vmatprep.subr.mxu0 0.0
      %2285 = vmatpush1.xpose.msra.mxu0 0.0
      %2286 = vmatprep.subr.mxu0 0.0
      %2287 = vmatpush1.xpose.msra.mxu0 0.0
      %2288 = vmatprep.subr.mxu0 0.0
      %2289 = vmatpush1.xpose.msra.mxu0 0.0
      %2290 = vmatprep.subr.mxu0 0.0
      %2291 = vmatpush1.xpose.msra.mxu0 0.0
      %2292 = vmatprep.subr.mxu0 0.0
      %2293 = vmatpush1.xpose.msra.mxu0 0.0
      %2294 = vmatprep.subr.mxu0 0.0
      %2295 = vmatpush1.xpose.msra.mxu0 0.0
      %2296 = vmatprep.subr.mxu0 0.0
      %2297 = vmatpush1.xpose.msra.mxu0 0.0
      %2298 = vmatprep.subr.mxu0 0.0
      %2299 = vmatpush1.xpose.msra.mxu0 0.0
      %2300 = vmatprep.subr.mxu0 0.0
      %2301 = vmatpush1.xpose.msra.mxu0 0.0
      %2302 = vmatprep.subr.mxu0 0.0
      %2303 = vmatpush1.xpose.msra.mxu0 0.0
      %2304 = vmatprep.subr.mxu0 0.0
      %2305 = vmatpush1.xpose.msra.mxu0 0.0
      %2306 = vmatprep.subr.mxu0 0.0
      %2307 = vmatpush1.xpose.msra.mxu0 0.0
      %2308 = vmatprep.subr.mxu0 0.0
      %2309 = vmatpush1.xpose.msra.mxu0 0.0
      %2310 = vmatprep.subr.mxu0 0.0
      %2311 = vmatpush1.xpose.msra.mxu0 0.0
      %2312 = vmatprep.subr.mxu0 0.0
      %2313 = vmatpush1.xpose.msra.mxu0 0.0
      %2314 = vmatprep.subr.mxu0 0.0
      %2315 = vmatpush1.xpose.msra.mxu0 0.0
      %2316 = vmatprep.subr.mxu0 0.0
      %2317 = vmatpush1.xpose.msra.mxu0 0.0
      %2318 = vmatprep.mubr.f32.mxu0 0.0
      %2319 = vmatmul.mubr.f32.gmra.mrb[0].mxu0 %v2249
      %v2320 = vpop.f32.mrb[0].mxu0
      %v2321 = vadd.f32 0.0, %v2320
      %v2322 = vpop.f32.mrb[0].mxu0
      %2323 = vdwg.mxu0
      %v2325 = vsel %vm522, %v2150, 0
      %v2328 = vsel %vm522, %v2166, 0
      %2330 = vmatprep.subr.mxu0 0.0
      %2331 = vmatpush1.xpose.msra.mxu0 %v2328
      %2332 = vmatprep.subr.mxu0 0.0
      %2333 = vmatpush1.xpose.msra.mxu0 0.0
      %2334 = vmatprep.subr.mxu0 0.0
      %2335 = vmatpush1.xpose.msra.mxu0 0.0
      %2336 = vmatprep.subr.mxu0 0.0
      %2337 = vmatpush1.xpose.msra.mxu0 0.0
      %2338 = vmatprep.subr.mxu0 0.0
      %2339 = vmatpush1.xpose.msra.mxu0 0.0
      %2340 = vmatprep.subr.mxu0 0.0
      %2341 = vmatpush1.xpose.msra.mxu0 0.0
      %2342 = vmatprep.subr.mxu0 0.0
      %2343 = vmatpush1.xpose.msra.mxu0 0.0
      %2344 = vmatprep.subr.mxu0 0.0
      %2345 = vmatpush1.xpose.msra.mxu0 0.0
      %2346 = vmatprep.subr.mxu0 0.0
      %2347 = vmatpush1.xpose.msra.mxu0 0.0
      %2348 = vmatprep.subr.mxu0 0.0
      %2349 = vmatpush1.xpose.msra.mxu0 0.0
      %2350 = vmatprep.subr.mxu0 0.0
      %2351 = vmatpush1.xpose.msra.mxu0 0.0
      %2352 = vmatprep.subr.mxu0 0.0
      %2353 = vmatpush1.xpose.msra.mxu0 0.0
      %2354 = vmatprep.subr.mxu0 0.0
      %2355 = vmatpush1.xpose.msra.mxu0 0.0
      %2356 = vmatprep.subr.mxu0 0.0
      %2357 = vmatpush1.xpose.msra.mxu0 0.0
      %2358 = vmatprep.subr.mxu0 0.0
      %2359 = vmatpush1.xpose.msra.mxu0 0.0
      %2360 = vmatprep.subr.mxu0 0.0
      %2361 = vmatpush1.xpose.msra.mxu0 0.0
      %2362 = vmatprep.subr.mxu0 0.0
      %2363 = vmatpush1.xpose.msra.mxu0 0.0
      %2364 = vmatprep.subr.mxu0 0.0
      %2365 = vmatpush1.xpose.msra.mxu0 0.0
      %2366 = vmatprep.subr.mxu0 0.0
      %2367 = vmatpush1.xpose.msra.mxu0 0.0
      %2368 = vmatprep.subr.mxu0 0.0
      %2369 = vmatpush1.xpose.msra.mxu0 0.0
      %2370 = vmatprep.subr.mxu0 0.0
      %2371 = vmatpush1.xpose.msra.mxu0 0.0
      %2372 = vmatprep.subr.mxu0 0.0
      %2373 = vmatpush1.xpose.msra.mxu0 0.0
      %2374 = vmatprep.subr.mxu0 0.0
      %2375 = vmatpush1.xpose.msra.mxu0 0.0
      %2376 = vmatprep.subr.mxu0 0.0
      %2377 = vmatpush1.xpose.msra.mxu0 0.0
      %2378 = vmatprep.subr.mxu0 0.0
      %2379 = vmatpush1.xpose.msra.mxu0 0.0
      %2380 = vmatprep.subr.mxu0 0.0
      %2381 = vmatpush1.xpose.msra.mxu0 0.0
      %2382 = vmatprep.subr.mxu0 0.0
      %2383 = vmatpush1.xpose.msra.mxu0 0.0
      %2384 = vmatprep.subr.mxu0 0.0
      %2385 = vmatpush1.xpose.msra.mxu0 0.0
      %2386 = vmatprep.subr.mxu0 0.0
      %2387 = vmatpush1.xpose.msra.mxu0 0.0
      %2388 = vmatprep.subr.mxu0 0.0
      %2389 = vmatpush1.xpose.msra.mxu0 0.0
      %2390 = vmatprep.subr.mxu0 0.0
      %2391 = vmatpush1.xpose.msra.mxu0 0.0
      %2392 = vmatprep.subr.mxu0 0.0
      %2393 = vmatpush1.xpose.msra.mxu0 0.0
      %2394 = vmatprep.mubr.f32.mxu0 0.0
      %2395 = vmatmul.mubr.f32.gmra.mrb[0].mxu0 %v2325
      %v2396 = vpop.f32.mrb[0].mxu0
      %v2397 = vadd.f32 0.0, %v2396
      %v2398 = vpop.f32.mrb[0].mxu0
      %2399 = vdwg.mxu0
      %v2401 = vsel %vm522, %v2151, 0
      %v2404 = vsel %vm522, %v2167, 0
      %2406 = vmatprep.subr.mxu0 0.0
      %2407 = vmatpush1.xpose.msra.mxu0 %v2404
      %2408 = vmatprep.subr.mxu0 0.0
      %2409 = vmatpush1.xpose.msra.mxu0 0.0
      %2410 = vmatprep.subr.mxu0 0.0
      %2411 = vmatpush1.xpose.msra.mxu0 0.0
      %2412 = vmatprep.subr.mxu0 0.0
      %2413 = vmatpush1.xpose.msra.mxu0 0.0
      %2414 = vmatprep.subr.mxu0 0.0
      %2415 = vmatpush1.xpose.msra.mxu0 0.0
      %2416 = vmatprep.subr.mxu0 0.0
      %2417 = vmatpush1.xpose.msra.mxu0 0.0
      %2418 = vmatprep.subr.mxu0 0.0
      %2419 = vmatpush1.xpose.msra.mxu0 0.0
      %2420 = vmatprep.subr.mxu0 0.0
      %2421 = vmatpush1.xpose.msra.mxu0 0.0
      %2422 = vmatprep.subr.mxu0 0.0
      %2423 = vmatpush1.xpose.msra.mxu0 0.0
      %2424 = vmatprep.subr.mxu0 0.0
      %2425 = vmatpush1.xpose.msra.mxu0 0.0
      %2426 = vmatprep.subr.mxu0 0.0
      %2427 = vmatpush1.xpose.msra.mxu0 0.0
      %2428 = vmatprep.subr.mxu0 0.0
      %2429 = vmatpush1.xpose.msra.mxu0 0.0
      %2430 = vmatprep.subr.mxu0 0.0
      %2431 = vmatpush1.xpose.msra.mxu0 0.0
      %2432 = vmatprep.subr.mxu0 0.0
      %2433 = vmatpush1.xpose.msra.mxu0 0.0
      %2434 = vmatprep.subr.mxu0 0.0
      %2435 = vmatpush1.xpose.msra.mxu0 0.0
      %2436 = vmatprep.subr.mxu0 0.0
      %2437 = vmatpush1.xpose.msra.mxu0 0.0
      %2438 = vmatprep.subr.mxu0 0.0
      %2439 = vmatpush1.xpose.msra.mxu0 0.0
      %2440 = vmatprep.subr.mxu0 0.0
      %2441 = vmatpush1.xpose.msra.mxu0 0.0
      %2442 = vmatprep.subr.mxu0 0.0
      %2443 = vmatpush1.xpose.msra.mxu0 0.0
      %2444 = vmatprep.subr.mxu0 0.0
      %2445 = vmatpush1.xpose.msra.mxu0 0.0
      %2446 = vmatprep.subr.mxu0 0.0
      %2447 = vmatpush1.xpose.msra.mxu0 0.0
      %2448 = vmatprep.subr.mxu0 0.0
      %2449 = vmatpush1.xpose.msra.mxu0 0.0
      %2450 = vmatprep.subr.mxu0 0.0
      %2451 = vmatpush1.xpose.msra.mxu0 0.0
      %2452 = vmatprep.subr.mxu0 0.0
      %2453 = vmatpush1.xpose.msra.mxu0 0.0
      %2454 = vmatprep.subr.mxu0 0.0
      %2455 = vmatpush1.xpose.msra.mxu0 0.0
      %2456 = vmatprep.subr.mxu0 0.0
      %2457 = vmatpush1.xpose.msra.mxu0 0.0
      %2458 = vmatprep.subr.mxu0 0.0
      %2459 = vmatpush1.xpose.msra.mxu0 0.0
      %2460 = vmatprep.subr.mxu0 0.0
      %2461 = vmatpush1.xpose.msra.mxu0 0.0
      %2462 = vmatprep.subr.mxu0 0.0
      %2463 = vmatpush1.xpose.msra.mxu0 0.0
      %2464 = vmatprep.subr.mxu0 0.0
      %2465 = vmatpush1.xpose.msra.mxu0 0.0
      %2466 = vmatprep.subr.mxu0 0.0
      %2467 = vmatpush1.xpose.msra.mxu0 0.0
      %2468 = vmatprep.subr.mxu0 0.0
      %2469 = vmatpush1.xpose.msra.mxu0 0.0
      %2470 = vmatprep.mubr.f32.mxu0 0.0
      %2471 = vmatmul.mubr.f32.gmra.mrb[0].mxu0 %v2401
      %v2472 = vpop.f32.mrb[0].mxu0
      %v2473 = vadd.f32 0.0, %v2472
      %v2474 = vpop.f32.mrb[0].mxu0
      %2475 = vdwg.mxu0
      %v2477 = vsel %vm522, %v2152, 0
      %v2480 = vsel %vm522, %v2168, 0
      %2482 = vmatprep.subr.mxu0 0.0
      %2483 = vmatpush1.xpose.msra.mxu0 %v2480
      %2484 = vmatprep.subr.mxu0 0.0
      %2485 = vmatpush1.xpose.msra.mxu0 0.0
      %2486 = vmatprep.subr.mxu0 0.0
      %2487 = vmatpush1.xpose.msra.mxu0 0.0
      %2488 = vmatprep.subr.mxu0 0.0
      %2489 = vmatpush1.xpose.msra.mxu0 0.0
      %2490 = vmatprep.subr.mxu0 0.0
      %2491 = vmatpush1.xpose.msra.mxu0 0.0
      %2492 = vmatprep.subr.mxu0 0.0
      %2493 = vmatpush1.xpose.msra.mxu0 0.0
      %2494 = vmatprep.subr.mxu0 0.0
      %2495 = vmatpush1.xpose.msra.mxu0 0.0
      %2496 = vmatprep.subr.mxu0 0.0
      %2497 = vmatpush1.xpose.msra.mxu0 0.0
      %2498 = vmatprep.subr.mxu0 0.0
      %2499 = vmatpush1.xpose.msra.mxu0 0.0
      %2500 = vmatprep.subr.mxu0 0.0
      %2501 = vmatpush1.xpose.msra.mxu0 0.0
      %2502 = vmatprep.subr.mxu0 0.0
      %2503 = vmatpush1.xpose.msra.mxu0 0.0
      %2504 = vmatprep.subr.mxu0 0.0
      %2505 = vmatpush1.xpose.msra.mxu0 0.0
      %2506 = vmatprep.subr.mxu0 0.0
      %2507 = vmatpush1.xpose.msra.mxu0 0.0
      %2508 = vmatprep.subr.mxu0 0.0
      %2509 = vmatpush1.xpose.msra.mxu0 0.0
      %2510 = vmatprep.subr.mxu0 0.0
      %2511 = vmatpush1.xpose.msra.mxu0 0.0
      %2512 = vmatprep.subr.mxu0 0.0
      %2513 = vmatpush1.xpose.msra.mxu0 0.0
      %2514 = vmatprep.subr.mxu0 0.0
      %2515 = vmatpush1.xpose.msra.mxu0 0.0
      %2516 = vmatprep.subr.mxu0 0.0
      %2517 = vmatpush1.xpose.msra.mxu0 0.0
      %2518 = vmatprep.subr.mxu0 0.0
      %2519 = vmatpush1.xpose.msra.mxu0 0.0
      %2520 = vmatprep.subr.mxu0 0.0
      %2521 = vmatpush1.xpose.msra.mxu0 0.0
      %2522 = vmatprep.subr.mxu0 0.0
      %2523 = vmatpush1.xpose.msra.mxu0 0.0
      %2524 = vmatprep.subr.mxu0 0.0
      %2525 = vmatpush1.xpose.msra.mxu0 0.0
      %2526 = vmatprep.subr.mxu0 0.0
      %2527 = vmatpush1.xpose.msra.mxu0 0.0
      %2528 = vmatprep.subr.mxu0 0.0
      %2529 = vmatpush1.xpose.msra.mxu0 0.0
      %2530 = vmatprep.subr.mxu0 0.0
      %2531 = vmatpush1.xpose.msra.mxu0 0.0
      %2532 = vmatprep.subr.mxu0 0.0
      %2533 = vmatpush1.xpose.msra.mxu0 0.0
      %2534 = vmatprep.subr.mxu0 0.0
      %2535 = vmatpush1.xpose.msra.mxu0 0.0
      %2536 = vmatprep.subr.mxu0 0.0
      %2537 = vmatpush1.xpose.msra.mxu0 0.0
      %2538 = vmatprep.subr.mxu0 0.0
      %2539 = vmatpush1.xpose.msra.mxu0 0.0
      %2540 = vmatprep.subr.mxu0 0.0
      %2541 = vmatpush1.xpose.msra.mxu0 0.0
      %2542 = vmatprep.subr.mxu0 0.0
      %2543 = vmatpush1.xpose.msra.mxu0 0.0
      %2544 = vmatprep.subr.mxu0 0.0
      %2545 = vmatpush1.xpose.msra.mxu0 0.0
      %2546 = vmatprep.mubr.f32.mxu0 0.0
      %2547 = vmatmul.mubr.f32.gmra.mrb[0].mxu0 %v2477
      %v2548 = vpop.f32.mrb[0].mxu0
      %v2549 = vadd.f32 0.0, %v2548
      %v2550 = vpop.f32.mrb[0].mxu0
      %2551 = vdwg.mxu0
      %v2553 = vsel %vm522, %v2153, 0
      %v2556 = vsel %vm522, %v2169, 0
      %2558 = vmatprep.subr.mxu0 0.0
      %2559 = vmatpush1.xpose.msra.mxu0 %v2556
      %2560 = vmatprep.subr.mxu0 0.0
      %2561 = vmatpush1.xpose.msra.mxu0 0.0
      %2562 = vmatprep.subr.mxu0 0.0
      %2563 = vmatpush1.xpose.msra.mxu0 0.0
      %2564 = vmatprep.subr.mxu0 0.0
      %2565 = vmatpush1.xpose.msra.mxu0 0.0
      %2566 = vmatprep.subr.mxu0 0.0
      %2567 = vmatpush1.xpose.msra.mxu0 0.0
      %2568 = vmatprep.subr.mxu0 0.0
      %2569 = vmatpush1.xpose.msra.mxu0 0.0
      %2570 = vmatprep.subr.mxu0 0.0
      %2571 = vmatpush1.xpose.msra.mxu0 0.0
      %2572 = vmatprep.subr.mxu0 0.0
      %2573 = vmatpush1.xpose.msra.mxu0 0.0
      %2574 = vmatprep.subr.mxu0 0.0
      %2575 = vmatpush1.xpose.msra.mxu0 0.0
      %2576 = vmatprep.subr.mxu0 0.0
      %2577 = vmatpush1.xpose.msra.mxu0 0.0
      %2578 = vmatprep.subr.mxu0 0.0
      %2579 = vmatpush1.xpose.msra.mxu0 0.0
      %2580 = vmatprep.subr.mxu0 0.0
      %2581 = vmatpush1.xpose.msra.mxu0 0.0
      %2582 = vmatprep.subr.mxu0 0.0
      %2583 = vmatpush1.xpose.msra.mxu0 0.0
      %2584 = vmatprep.subr.mxu0 0.0
      %2585 = vmatpush1.xpose.msra.mxu0 0.0
      %2586 = vmatprep.subr.mxu0 0.0
      %2587 = vmatpush1.xpose.msra.mxu0 0.0
      %2588 = vmatprep.subr.mxu0 0.0
      %2589 = vmatpush1.xpose.msra.mxu0 0.0
      %2590 = vmatprep.subr.mxu0 0.0
      %2591 = vmatpush1.xpose.msra.mxu0 0.0
      %2592 = vmatprep.subr.mxu0 0.0
      %2593 = vmatpush1.xpose.msra.mxu0 0.0
      %2594 = vmatprep.subr.mxu0 0.0
      %2595 = vmatpush1.xpose.msra.mxu0 0.0
      %2596 = vmatprep.subr.mxu0 0.0
      %2597 = vmatpush1.xpose.msra.mxu0 0.0
      %2598 = vmatprep.subr.mxu0 0.0
      %2599 = vmatpush1.xpose.msra.mxu0 0.0
      %2600 = vmatprep.subr.mxu0 0.0
      %2601 = vmatpush1.xpose.msra.mxu0 0.0
      %2602 = vmatprep.subr.mxu0 0.0
      %2603 = vmatpush1.xpose.msra.mxu0 0.0
      %2604 = vmatprep.subr.mxu0 0.0
      %2605 = vmatpush1.xpose.msra.mxu0 0.0
      %2606 = vmatprep.subr.mxu0 0.0
      %2607 = vmatpush1.xpose.msra.mxu0 0.0
      %2608 = vmatprep.subr.mxu0 0.0
      %2609 = vmatpush1.xpose.msra.mxu0 0.0
      %2610 = vmatprep.subr.mxu0 0.0
      %2611 = vmatpush1.xpose.msra.mxu0 0.0
      %2612 = vmatprep.subr.mxu0 0.0
      %2613 = vmatpush1.xpose.msra.mxu0 0.0
      %2614 = vmatprep.subr.mxu0 0.0
      %2615 = vmatpush1.xpose.msra.mxu0 0.0
      %2616 = vmatprep.subr.mxu0 0.0
      %2617 = vmatpush1.xpose.msra.mxu0 0.0
      %2618 = vmatprep.subr.mxu0 0.0
      %2619 = vmatpush1.xpose.msra.mxu0 0.0
      %2620 = vmatprep.subr.mxu0 0.0
      %2621 = vmatpush1.xpose.msra.mxu0 0.0
      %2622 = vmatprep.mubr.f32.mxu0 0.0
      %2623 = vmatmul.mubr.f32.gmra.mrb[0].mxu0 %v2553
      %v2624 = vpop.f32.mrb[0].mxu0
      %v2625 = vadd.f32 0.0, %v2624
      %v2626 = vpop.f32.mrb[0].mxu0
      %2627 = vdwg.mxu0
      %v2629 = vsel %vm522, %v2154, 0
      %v2632 = vsel %vm522, %v2170, 0
      %2634 = vmatprep.subr.mxu0 0.0
      %2635 = vmatpush1.xpose.msra.mxu0 %v2632
      %2636 = vmatprep.subr.mxu0 0.0
      %2637 = vmatpush1.xpose.msra.mxu0 0.0
      %2638 = vmatprep.subr.mxu0 0.0
      %2639 = vmatpush1.xpose.msra.mxu0 0.0
      %2640 = vmatprep.subr.mxu0 0.0
      %2641 = vmatpush1.xpose.msra.mxu0 0.0
      %2642 = vmatprep.subr.mxu0 0.0
      %2643 = vmatpush1.xpose.msra.mxu0 0.0
      %2644 = vmatprep.subr.mxu0 0.0
      %2645 = vmatpush1.xpose.msra.mxu0 0.0
      %2646 = vmatprep.subr.mxu0 0.0
      %2647 = vmatpush1.xpose.msra.mxu0 0.0
      %2648 = vmatprep.subr.mxu0 0.0
      %2649 = vmatpush1.xpose.msra.mxu0 0.0
      %2650 = vmatprep.subr.mxu0 0.0
      %2651 = vmatpush1.xpose.msra.mxu0 0.0
      %2652 = vmatprep.subr.mxu0 0.0
      %2653 = vmatpush1.xpose.msra.mxu0 0.0
      %2654 = vmatprep.subr.mxu0 0.0
      %2655 = vmatpush1.xpose.msra.mxu0 0.0
      %2656 = vmatprep.subr.mxu0 0.0
      %2657 = vmatpush1.xpose.msra.mxu0 0.0
      %2658 = vmatprep.subr.mxu0 0.0
      %2659 = vmatpush1.xpose.msra.mxu0 0.0
      %2660 = vmatprep.subr.mxu0 0.0
      %2661 = vmatpush1.xpose.msra.mxu0 0.0
      %2662 = vmatprep.subr.mxu0 0.0
      %2663 = vmatpush1.xpose.msra.mxu0 0.0
      %2664 = vmatprep.subr.mxu0 0.0
      %2665 = vmatpush1.xpose.msra.mxu0 0.0
      %2666 = vmatprep.subr.mxu0 0.0
      %2667 = vmatpush1.xpose.msra.mxu0 0.0
      %2668 = vmatprep.subr.mxu0 0.0
      %2669 = vmatpush1.xpose.msra.mxu0 0.0
      %2670 = vmatprep.subr.mxu0 0.0
      %2671 = vmatpush1.xpose.msra.mxu0 0.0
      %2672 = vmatprep.subr.mxu0 0.0
      %2673 = vmatpush1.xpose.msra.mxu0 0.0
      %2674 = vmatprep.subr.mxu0 0.0
      %2675 = vmatpush1.xpose.msra.mxu0 0.0
      %2676 = vmatprep.subr.mxu0 0.0
      %2677 = vmatpush1.xpose.msra.mxu0 0.0
      %2678 = vmatprep.subr.mxu0 0.0
      %2679 = vmatpush1.xpose.msra.mxu0 0.0
      %2680 = vmatprep.subr.mxu0 0.0
      %2681 = vmatpush1.xpose.msra.mxu0 0.0
      %2682 = vmatprep.subr.mxu0 0.0
      %2683 = vmatpush1.xpose.msra.mxu0 0.0
      %2684 = vmatprep.subr.mxu0 0.0
      %2685 = vmatpush1.xpose.msra.mxu0 0.0
      %2686 = vmatprep.subr.mxu0 0.0
      %2687 = vmatpush1.xpose.msra.mxu0 0.0
      %2688 = vmatprep.subr.mxu0 0.0
      %2689 = vmatpush1.xpose.msra.mxu0 0.0
      %2690 = vmatprep.subr.mxu0 0.0
      %2691 = vmatpush1.xpose.msra.mxu0 0.0
      %2692 = vmatprep.subr.mxu0 0.0
      %2693 = vmatpush1.xpose.msra.mxu0 0.0
      %2694 = vmatprep.subr.mxu0 0.0
      %2695 = vmatpush1.xpose.msra.mxu0 0.0
      %2696 = vmatprep.subr.mxu0 0.0
      %2697 = vmatpush1.xpose.msra.mxu0 0.0
      %2698 = vmatprep.mubr.f32.mxu0 0.0
      %2699 = vmatmul.mubr.f32.gmra.mrb[0].mxu0 %v2629
      %v2700 = vpop.f32.mrb[0].mxu0
      %v2701 = vadd.f32 0.0, %v2700
      %v2702 = vpop.f32.mrb[0].mxu0
      %2703 = vdwg.mxu0
      %v2705 = vsel %vm522, %v2155, 0
      %v2708 = vsel %vm522, %v2171, 0
      %2710 = vmatprep.subr.mxu0 0.0
      %2711 = vmatpush1.xpose.msra.mxu0 %v2708
      %2712 = vmatprep.subr.mxu0 0.0
      %2713 = vmatpush1.xpose.msra.mxu0 0.0
      %2714 = vmatprep.subr.mxu0 0.0
      %2715 = vmatpush1.xpose.msra.mxu0 0.0
      %2716 = vmatprep.subr.mxu0 0.0
      %2717 = vmatpush1.xpose.msra.mxu0 0.0
      %2718 = vmatprep.subr.mxu0 0.0
      %2719 = vmatpush1.xpose.msra.mxu0 0.0
      %2720 = vmatprep.subr.mxu0 0.0
      %2721 = vmatpush1.xpose.msra.mxu0 0.0
      %2722 = vmatprep.subr.mxu0 0.0
      %2723 = vmatpush1.xpose.msra.mxu0 0.0
      %2724 = vmatprep.subr.mxu0 0.0
      %2725 = vmatpush1.xpose.msra.mxu0 0.0
      %2726 = vmatprep.subr.mxu0 0.0
      %2727 = vmatpush1.xpose.msra.mxu0 0.0
      %2728 = vmatprep.subr.mxu0 0.0
      %2729 = vmatpush1.xpose.msra.mxu0 0.0
      %2730 = vmatprep.subr.mxu0 0.0
      %2731 = vmatpush1.xpose.msra.mxu0 0.0
      %2732 = vmatprep.subr.mxu0 0.0
      %2733 = vmatpush1.xpose.msra.mxu0 0.0
      %2734 = vmatprep.subr.mxu0 0.0
      %2735 = vmatpush1.xpose.msra.mxu0 0.0
      %2736 = vmatprep.subr.mxu0 0.0
      %2737 = vmatpush1.xpose.msra.mxu0 0.0
      %2738 = vmatprep.subr.mxu0 0.0
      %2739 = vmatpush1.xpose.msra.mxu0 0.0
      %2740 = vmatprep.subr.mxu0 0.0
      %2741 = vmatpush1.xpose.msra.mxu0 0.0
      %2742 = vmatprep.subr.mxu0 0.0
      %2743 = vmatpush1.xpose.msra.mxu0 0.0
      %2744 = vmatprep.subr.mxu0 0.0
      %2745 = vmatpush1.xpose.msra.mxu0 0.0
      %2746 = vmatprep.subr.mxu0 0.0
      %2747 = vmatpush1.xpose.msra.mxu0 0.0
      %2748 = vmatprep.subr.mxu0 0.0
      %2749 = vmatpush1.xpose.msra.mxu0 0.0
      %2750 = vmatprep.subr.mxu0 0.0
      %2751 = vmatpush1.xpose.msra.mxu0 0.0
      %2752 = vmatprep.subr.mxu0 0.0
      %2753 = vmatpush1.xpose.msra.mxu0 0.0
      %2754 = vmatprep.subr.mxu0 0.0
      %2755 = vmatpush1.xpose.msra.mxu0 0.0
      %2756 = vmatprep.subr.mxu0 0.0
      %2757 = vmatpush1.xpose.msra.mxu0 0.0
      %2758 = vmatprep.subr.mxu0 0.0
      %2759 = vmatpush1.xpose.msra.mxu0 0.0
      %2760 = vmatprep.subr.mxu0 0.0
      %2761 = vmatpush1.xpose.msra.mxu0 0.0
      %2762 = vmatprep.subr.mxu0 0.0
      %2763 = vmatpush1.xpose.msra.mxu0 0.0
      %2764 = vmatprep.subr.mxu0 0.0
      %2765 = vmatpush1.xpose.msra.mxu0 0.0
      %2766 = vmatprep.subr.mxu0 0.0
      %2767 = vmatpush1.xpose.msra.mxu0 0.0
      %2768 = vmatprep.subr.mxu0 0.0
      %2769 = vmatpush1.xpose.msra.mxu0 0.0
      %2770 = vmatprep.subr.mxu0 0.0
      %2771 = vmatpush1.xpose.msra.mxu0 0.0
      %2772 = vmatprep.subr.mxu0 0.0
      %2773 = vmatpush1.xpose.msra.mxu0 0.0
      %2774 = vmatprep.mubr.f32.mxu0 0.0
      %2775 = vmatmul.mubr.f32.gmra.mrb[0].mxu0 %v2705
      %v2776 = vpop.f32.mrb[0].mxu0
      %v2777 = vadd.f32 0.0, %v2776
      %v2778 = vpop.f32.mrb[0].mxu0
      %2779 = vdwg.mxu0
      %v2780 = vsel %vm522, %v2245, -inf
      %2781 = vmax.xlane.f32.xlu0 %v2780
      %v2782 = vpop.xlane.xlu0 %2781
      %v2783 = vsel %vm522, %v2321, -inf
      %2784 = vmax.xlane.f32.xlu0 %v2783
      %v2785 = vpop.xlane.xlu0 %2784
      %v2786 = vsel %vm522, %v2397, -inf
      %2787 = vmax.xlane.f32.xlu0 %v2786
      %v2788 = vpop.xlane.xlu0 %2787
      %v2789 = vsel %vm522, %v2473, -inf
      %2790 = vmax.xlane.f32.xlu0 %v2789
      %v2791 = vpop.xlane.xlu0 %2790
      %v2792 = vsel %vm522, %v2549, -inf
      %2793 = vmax.xlane.f32.xlu0 %v2792
      %v2794 = vpop.xlane.xlu0 %2793
      %v2795 = vsel %vm522, %v2625, -inf
      %2796 = vmax.xlane.f32.xlu0 %v2795
      %v2797 = vpop.xlane.xlu0 %2796
      %v2798 = vsel %vm522, %v2701, -inf
      %2799 = vmax.xlane.f32.xlu0 %v2798
      %v2800 = vpop.xlane.xlu0 %2799
      %v2801 = vsel %vm522, %v2777, -inf
      %2802 = vmax.xlane.f32.xlu0 %v2801
      %v2803 = vpop.xlane.xlu0 %2802
      %v2804 = vsub.f32 %v2245, %v2782
      %v2805 = vsub.f32 %v2321, %v2785
      %v2806 = vsub.f32 %v2397, %v2788
      %v2807 = vsub.f32 %v2473, %v2791
      %v2808 = vsub.f32 %v2549, %v2794
      %v2809 = vsub.f32 %v2625, %v2797
      %v2810 = vsub.f32 %v2701, %v2800
      %v2811 = vsub.f32 %v2777, %v2803
      %v2812 = vmul.f32 %v2804, 1.442695
      %v2813 = vpow.pop %v2812
      %v2814 = vmul.f32 %v2805, 1.442695
      %v2815 = vpow.pop %v2814
      %v2816 = vmul.f32 %v2806, 1.442695
      %v2817 = vpow.pop %v2816
      %v2818 = vmul.f32 %v2807, 1.442695
      %v2819 = vpow.pop %v2818
      %v2820 = vmul.f32 %v2808, 1.442695
      %v2821 = vpow.pop %v2820
      %v2822 = vmul.f32 %v2809, 1.442695
      %v2823 = vpow.pop %v2822
      %v2824 = vmul.f32 %v2810, 1.442695
      %v2825 = vpow.pop %v2824
      %v2826 = vmul.f32 %v2811, 1.442695
      %v2827 = vpow.pop %v2826
      %v2828 = vsel %vm522, %v2813, 0.0
      %2829 = vadd.xlane.f32.xlu0 %v2828
      %v2830 = vpop.xlane.xlu0 %2829
      %v2831 = vsel %vm522, %v2815, 0.0
      %2832 = vadd.xlane.f32.xlu0 %v2831
      %v2833 = vpop.xlane.xlu0 %2832
      %v2834 = vsel %vm522, %v2817, 0.0
      %2835 = vadd.xlane.f32.xlu0 %v2834
      %v2836 = vpop.xlane.xlu0 %2835
      %v2837 = vsel %vm522, %v2819, 0.0
      %2838 = vadd.xlane.f32.xlu0 %v2837
      %v2839 = vpop.xlane.xlu0 %2838
      %v2840 = vsel %vm522, %v2821, 0.0
      %2841 = vadd.xlane.f32.xlu0 %v2840
      %v2842 = vpop.xlane.xlu0 %2841
      %v2843 = vsel %vm522, %v2823, 0.0
      %2844 = vadd.xlane.f32.xlu0 %v2843
      %v2845 = vpop.xlane.xlu0 %2844
      %v2846 = vsel %vm522, %v2825, 0.0
      %2847 = vadd.xlane.f32.xlu0 %v2846
      %v2848 = vpop.xlane.xlu0 %2847
      %v2849 = vsel %vm522, %v2827, 0.0
      %2850 = vadd.xlane.f32.xlu0 %v2849
      %v2851 = vpop.xlane.xlu0 %2850
      %v2852 = vrcp.pop %v2830
      %v2853 = vrcp.pop %v2833
      %v2854 = vrcp.pop %v2836
      %v2855 = vrcp.pop %v2839
      %v2856 = vrcp.pop %v2842
      %v2857 = vrcp.pop %v2845
      %v2858 = vrcp.pop %v2848
      %v2859 = vrcp.pop %v2851
      %v2860 = vmul.f32 %v2813, %v2852
      %v2861 = vmul.f32 %v2815, %v2853
      %v2862 = vmul.f32 %v2817, %v2854
      %v2863 = vmul.f32 %v2819, %v2855
      %v2864 = vmul.f32 %v2821, %v2856
      %v2865 = vmul.f32 %v2823, %v2857
      %v2866 = vmul.f32 %v2825, %v2858
      %v2867 = vmul.f32 %v2827, %v2859
      %v2869 = vsel %vm522, %v2860, 0
      %2871 = vmatprep.subr.mxu0 0.0
      %2872 = vmatpush1.msra.mxu0 %v2156
      %2873 = vmatprep.subr.mxu0 0.0
      %2874 = vmatpush1.msra.mxu0 0.0
      %2875 = vmatprep.subr.mxu0 0.0
      %2876 = vmatpush1.msra.mxu0 0.0
      %2877 = vmatprep.subr.mxu0 0.0
      %2878 = vmatpush1.msra.mxu0 0.0
      %2879 = vmatprep.subr.mxu0 0.0
      %2880 = vmatpush1.msra.mxu0 0.0
      %2881 = vmatprep.subr.mxu0 0.0
      %2882 = vmatpush1.msra.mxu0 0.0
      %2883 = vmatprep.subr.mxu0 0.0
      %2884 = vmatpush1.msra.mxu0 0.0
      %2885 = vmatprep.subr.mxu0 0.0
      %2886 = vmatpush1.msra.mxu0 0.0
      %2887 = vmatprep.subr.mxu0 0.0
      %2888 = vmatpush1.msra.mxu0 0.0
      %2889 = vmatprep.subr.mxu0 0.0
      %2890 = vmatpush1.msra.mxu0 0.0
      %2891 = vmatprep.subr.mxu0 0.0
      %2892 = vmatpush1.msra.mxu0 0.0
      %2893 = vmatprep.subr.mxu0 0.0
      %2894 = vmatpush1.msra.mxu0 0.0
      %2895 = vmatprep.subr.mxu0 0.0
      %2896 = vmatpush1.msra.mxu0 0.0
      %2897 = vmatprep.subr.mxu0 0.0
      %2898 = vmatpush1.msra.mxu0 0.0
      %2899 = vmatprep.subr.mxu0 0.0
      %2900 = vmatpush1.msra.mxu0 0.0
      %2901 = vmatprep.subr.mxu0 0.0
      %2902 = vmatpush1.msra.mxu0 0.0
      %2903 = vmatprep.subr.mxu0 0.0
      %2904 = vmatpush1.msra.mxu0 0.0
      %2905 = vmatprep.subr.mxu0 0.0
      %2906 = vmatpush1.msra.mxu0 0.0
      %2907 = vmatprep.subr.mxu0 0.0
      %2908 = vmatpush1.msra.mxu0 0.0
      %2909 = vmatprep.subr.mxu0 0.0
      %2910 = vmatpush1.msra.mxu0 0.0
      %2911 = vmatprep.subr.mxu0 0.0
      %2912 = vmatpush1.msra.mxu0 0.0
      %2913 = vmatprep.subr.mxu0 0.0
      %2914 = vmatpush1.msra.mxu0 0.0
      %2915 = vmatprep.subr.mxu0 0.0
      %2916 = vmatpush1.msra.mxu0 0.0
      %2917 = vmatprep.subr.mxu0 0.0
      %2918 = vmatpush1.msra.mxu0 0.0
      %2919 = vmatprep.subr.mxu0 0.0
      %2920 = vmatpush1.msra.mxu0 0.0
      %2921 = vmatprep.subr.mxu0 0.0
      %2922 = vmatpush1.msra.mxu0 0.0
      %2923 = vmatprep.subr.mxu0 0.0
      %2924 = vmatpush1.msra.mxu0 0.0
      %2925 = vmatprep.subr.mxu0 0.0
      %2926 = vmatpush1.msra.mxu0 0.0
      %2927 = vmatprep.subr.mxu0 0.0
      %2928 = vmatpush1.msra.mxu0 0.0
      %2929 = vmatprep.subr.mxu0 0.0
      %2930 = vmatpush1.msra.mxu0 0.0
      %2931 = vmatprep.subr.mxu0 0.0
      %2932 = vmatpush1.msra.mxu0 0.0
      %2933 = vmatprep.subr.mxu0 0.0
      %2934 = vmatpush1.msra.mxu0 0.0
      %2935 = vmatprep.mubr.f32.mxu0 0.0
      %2936 = vmatmul.mubr.f32.gmra.mrb[0].mxu0 %v2869
      %v2937 = vpop.f32.mrb[0].mxu0
      %v2938 = vadd.f32 0.0, %v2937
      %v2939 = vpop.f32.mrb[0].mxu0
      %2940 = vdwg.mxu0
      %v2942 = vsel %vm522, %v2861, 0
      %2944 = vmatprep.subr.mxu0 0.0
      %2945 = vmatpush1.msra.mxu0 %v2157
      %2946 = vmatprep.subr.mxu0 0.0
      %2947 = vmatpush1.msra.mxu0 0.0
      %2948 = vmatprep.subr.mxu0 0.0
      %2949 = vmatpush1.msra.mxu0 0.0
      %2950 = vmatprep.subr.mxu0 0.0
      %2951 = vmatpush1.msra.mxu0 0.0
      %2952 = vmatprep.subr.mxu0 0.0
      %2953 = vmatpush1.msra.mxu0 0.0
      %2954 = vmatprep.subr.mxu0 0.0
      %2955 = vmatpush1.msra.mxu0 0.0
      %2956 = vmatprep.subr.mxu0 0.0
      %2957 = vmatpush1.msra.mxu0 0.0
      %2958 = vmatprep.subr.mxu0 0.0
      %2959 = vmatpush1.msra.mxu0 0.0
      %2960 = vmatprep.subr.mxu0 0.0
      %2961 = vmatpush1.msra.mxu0 0.0
      %2962 = vmatprep.subr.mxu0 0.0
      %2963 = vmatpush1.msra.mxu0 0.0
      %2964 = vmatprep.subr.mxu0 0.0
      %2965 = vmatpush1.msra.mxu0 0.0
      %2966 = vmatprep.subr.mxu0 0.0
      %2967 = vmatpush1.msra.mxu0 0.0
      %2968 = vmatprep.subr.mxu0 0.0
      %2969 = vmatpush1.msra.mxu0 0.0
      %2970 = vmatprep.subr.mxu0 0.0
      %2971 = vmatpush1.msra.mxu0 0.0
      %2972 = vmatprep.subr.mxu0 0.0
      %2973 = vmatpush1.msra.mxu0 0.0
      %2974 = vmatprep.subr.mxu0 0.0
      %2975 = vmatpush1.msra.mxu0 0.0
      %2976 = vmatprep.subr.mxu0 0.0
      %2977 = vmatpush1.msra.mxu0 0.0
      %2978 = vmatprep.subr.mxu0 0.0
      %2979 = vmatpush1.msra.mxu0 0.0
      %2980 = vmatprep.subr.mxu0 0.0
      %2981 = vmatpush1.msra.mxu0 0.0
      %2982 = vmatprep.subr.mxu0 0.0
      %2983 = vmatpush1.msra.mxu0 0.0
      %2984 = vmatprep.subr.mxu0 0.0
      %2985 = vmatpush1.msra.mxu0 0.0
      %2986 = vmatprep.subr.mxu0 0.0
      %2987 = vmatpush1.msra.mxu0 0.0
      %2988 = vmatprep.subr.mxu0 0.0
      %2989 = vmatpush1.msra.mxu0 0.0
      %2990 = vmatprep.subr.mxu0 0.0
      %2991 = vmatpush1.msra.mxu0 0.0
      %2992 = vmatprep.subr.mxu0 0.0
      %2993 = vmatpush1.msra.mxu0 0.0
      %2994 = vmatprep.subr.mxu0 0.0
      %2995 = vmatpush1.msra.mxu0 0.0
      %2996 = vmatprep.subr.mxu0 0.0
      %2997 = vmatpush1.msra.mxu0 0.0
      %2998 = vmatprep.subr.mxu0 0.0
      %2999 = vmatpush1.msra.mxu0 0.0
      %3000 = vmatprep.subr.mxu0 0.0
      %3001 = vmatpush1.msra.mxu0 0.0
      %3002 = vmatprep.subr.mxu0 0.0
      %3003 = vmatpush1.msra.mxu0 0.0
      %3004 = vmatprep.subr.mxu0 0.0
      %3005 = vmatpush1.msra.mxu0 0.0
      %3006 = vmatprep.subr.mxu0 0.0
      %3007 = vmatpush1.msra.mxu0 0.0
      %3008 = vmatprep.mubr.f32.mxu0 0.0
      %3009 = vmatmul.mubr.f32.gmra.mrb[0].mxu0 %v2942
      %v3010 = vpop.f32.mrb[0].mxu0
      %v3011 = vadd.f32 0.0, %v3010
      %v3012 = vpop.f32.mrb[0].mxu0
      %3013 = vdwg.mxu0
      %v3015 = vsel %vm522, %v2862, 0
      %3017 = vmatprep.subr.mxu0 0.0
      %3018 = vmatpush1.msra.mxu0 %v2158
      %3019 = vmatprep.subr.mxu0 0.0
      %3020 = vmatpush1.msra.mxu0 0.0
      %3021 = vmatprep.subr.mxu0 0.0
      %3022 = vmatpush1.msra.mxu0 0.0
      %3023 = vmatprep.subr.mxu0 0.0
      %3024 = vmatpush1.msra.mxu0 0.0
      %3025 = vmatprep.subr.mxu0 0.0
      %3026 = vmatpush1.msra.mxu0 0.0
      %3027 = vmatprep.subr.mxu0 0.0
      %3028 = vmatpush1.msra.mxu0 0.0
      %3029 = vmatprep.subr.mxu0 0.0
      %3030 = vmatpush1.msra.mxu0 0.0
      %3031 = vmatprep.subr.mxu0 0.0
      %3032 = vmatpush1.msra.mxu0 0.0
      %3033 = vmatprep.subr.mxu0 0.0
      %3034 = vmatpush1.msra.mxu0 0.0
      %3035 = vmatprep.subr.mxu0 0.0
      %3036 = vmatpush1.msra.mxu0 0.0
      %3037 = vmatprep.subr.mxu0 0.0
      %3038 = vmatpush1.msra.mxu0 0.0
      %3039 = vmatprep.subr.mxu0 0.0
      %3040 = vmatpush1.msra.mxu0 0.0
      %3041 = vmatprep.subr.mxu0 0.0
      %3042 = vmatpush1.msra.mxu0 0.0
      %3043 = vmatprep.subr.mxu0 0.0
      %3044 = vmatpush1.msra.mxu0 0.0
      %3045 = vmatprep.subr.mxu0 0.0
      %3046 = vmatpush1.msra.mxu0 0.0
      %3047 = vmatprep.subr.mxu0 0.0
      %3048 = vmatpush1.msra.mxu0 0.0
      %3049 = vmatprep.subr.mxu0 0.0
      %3050 = vmatpush1.msra.mxu0 0.0
      %3051 = vmatprep.subr.mxu0 0.0
      %3052 = vmatpush1.msra.mxu0 0.0
      %3053 = vmatprep.subr.mxu0 0.0
      %3054 = vmatpush1.msra.mxu0 0.0
      %3055 = vmatprep.subr.mxu0 0.0
      %3056 = vmatpush1.msra.mxu0 0.0
      %3057 = vmatprep.subr.mxu0 0.0
      %3058 = vmatpush1.msra.mxu0 0.0
      %3059 = vmatprep.subr.mxu0 0.0
      %3060 = vmatpush1.msra.mxu0 0.0
      %3061 = vmatprep.subr.mxu0 0.0
      %3062 = vmatpush1.msra.mxu0 0.0
      %3063 = vmatprep.subr.mxu0 0.0
      %3064 = vmatpush1.msra.mxu0 0.0
      %3065 = vmatprep.subr.mxu0 0.0
      %3066 = vmatpush1.msra.mxu0 0.0
      %3067 = vmatprep.subr.mxu0 0.0
      %3068 = vmatpush1.msra.mxu0 0.0
      %3069 = vmatprep.subr.mxu0 0.0
      %3070 = vmatpush1.msra.mxu0 0.0
      %3071 = vmatprep.subr.mxu0 0.0
      %3072 = vmatpush1.msra.mxu0 0.0
      %3073 = vmatprep.subr.mxu0 0.0
      %3074 = vmatpush1.msra.mxu0 0.0
      %3075 = vmatprep.subr.mxu0 0.0
      %3076 = vmatpush1.msra.mxu0 0.0
      %3077 = vmatprep.subr.mxu0 0.0
      %3078 = vmatpush1.msra.mxu0 0.0
      %3079 = vmatprep.subr.mxu0 0.0
      %3080 = vmatpush1.msra.mxu0 0.0
      %3081 = vmatprep.mubr.f32.mxu0 0.0
      %3082 = vmatmul.mubr.f32.gmra.mrb[0].mxu0 %v3015
      %v3083 = vpop.f32.mrb[0].mxu0
      %v3084 = vadd.f32 0.0, %v3083
      %v3085 = vpop.f32.mrb[0].mxu0
      %3086 = vdwg.mxu0
      %v3088 = vsel %vm522, %v2863, 0
      %3090 = vmatprep.subr.mxu0 0.0
      %3091 = vmatpush1.msra.mxu0 %v2159
      %3092 = vmatprep.subr.mxu0 0.0
      %3093 = vmatpush1.msra.mxu0 0.0
      %3094 = vmatprep.subr.mxu0 0.0
      %3095 = vmatpush1.msra.mxu0 0.0
      %3096 = vmatprep.subr.mxu0 0.0
      %3097 = vmatpush1.msra.mxu0 0.0
      %3098 = vmatprep.subr.mxu0 0.0
      %3099 = vmatpush1.msra.mxu0 0.0
      %3100 = vmatprep.subr.mxu0 0.0
      %3101 = vmatpush1.msra.mxu0 0.0
      %3102 = vmatprep.subr.mxu0 0.0
      %3103 = vmatpush1.msra.mxu0 0.0
      %3104 = vmatprep.subr.mxu0 0.0
      %3105 = vmatpush1.msra.mxu0 0.0
      %3106 = vmatprep.subr.mxu0 0.0
      %3107 = vmatpush1.msra.mxu0 0.0
      %3108 = vmatprep.subr.mxu0 0.0
      %3109 = vmatpush1.msra.mxu0 0.0
      %3110 = vmatprep.subr.mxu0 0.0
      %3111 = vmatpush1.msra.mxu0 0.0
      %3112 = vmatprep.subr.mxu0 0.0
      %3113 = vmatpush1.msra.mxu0 0.0
      %3114 = vmatprep.subr.mxu0 0.0
      %3115 = vmatpush1.msra.mxu0 0.0
      %3116 = vmatprep.subr.mxu0 0.0
      %3117 = vmatpush1.msra.mxu0 0.0
      %3118 = vmatprep.subr.mxu0 0.0
      %3119 = vmatpush1.msra.mxu0 0.0
      %3120 = vmatprep.subr.mxu0 0.0
      %3121 = vmatpush1.msra.mxu0 0.0
      %3122 = vmatprep.subr.mxu0 0.0
      %3123 = vmatpush1.msra.mxu0 0.0
      %3124 = vmatprep.subr.mxu0 0.0
      %3125 = vmatpush1.msra.mxu0 0.0
      %3126 = vmatprep.subr.mxu0 0.0
      %3127 = vmatpush1.msra.mxu0 0.0
      %3128 = vmatprep.subr.mxu0 0.0
      %3129 = vmatpush1.msra.mxu0 0.0
      %3130 = vmatprep.subr.mxu0 0.0
      %3131 = vmatpush1.msra.mxu0 0.0
      %3132 = vmatprep.subr.mxu0 0.0
      %3133 = vmatpush1.msra.mxu0 0.0
      %3134 = vmatprep.subr.mxu0 0.0
      %3135 = vmatpush1.msra.mxu0 0.0
      %3136 = vmatprep.subr.mxu0 0.0
      %3137 = vmatpush1.msra.mxu0 0.0
      %3138 = vmatprep.subr.mxu0 0.0
      %3139 = vmatpush1.msra.mxu0 0.0
      %3140 = vmatprep.subr.mxu0 0.0
      %3141 = vmatpush1.msra.mxu0 0.0
      %3142 = vmatprep.subr.mxu0 0.0
      %3143 = vmatpush1.msra.mxu0 0.0
      %3144 = vmatprep.subr.mxu0 0.0
      %3145 = vmatpush1.msra.mxu0 0.0
      %3146 = vmatprep.subr.mxu0 0.0
      %3147 = vmatpush1.msra.mxu0 0.0
      %3148 = vmatprep.subr.mxu0 0.0
      %3149 = vmatpush1.msra.mxu0 0.0
      %3150 = vmatprep.subr.mxu0 0.0
      %3151 = vmatpush1.msra.mxu0 0.0
      %3152 = vmatprep.subr.mxu0 0.0
      %3153 = vmatpush1.msra.mxu0 0.0
      %3154 = vmatprep.mubr.f32.mxu0 0.0
      %3155 = vmatmul.mubr.f32.gmra.mrb[0].mxu0 %v3088
      %v3156 = vpop.f32.mrb[0].mxu0
      %v3157 = vadd.f32 0.0, %v3156
      %v3158 = vpop.f32.mrb[0].mxu0
      %3159 = vdwg.mxu0
      %v3161 = vsel %vm522, %v2864, 0
      %3163 = vmatprep.subr.mxu0 0.0
      %3164 = vmatpush1.msra.mxu0 %v2160
      %3165 = vmatprep.subr.mxu0 0.0
      %3166 = vmatpush1.msra.mxu0 0.0
      %3167 = vmatprep.subr.mxu0 0.0
      %3168 = vmatpush1.msra.mxu0 0.0
      %3169 = vmatprep.subr.mxu0 0.0
      %3170 = vmatpush1.msra.mxu0 0.0
      %3171 = vmatprep.subr.mxu0 0.0
      %3172 = vmatpush1.msra.mxu0 0.0
      %3173 = vmatprep.subr.mxu0 0.0
      %3174 = vmatpush1.msra.mxu0 0.0
      %3175 = vmatprep.subr.mxu0 0.0
      %3176 = vmatpush1.msra.mxu0 0.0
      %3177 = vmatprep.subr.mxu0 0.0
      %3178 = vmatpush1.msra.mxu0 0.0
      %3179 = vmatprep.subr.mxu0 0.0
      %3180 = vmatpush1.msra.mxu0 0.0
      %3181 = vmatprep.subr.mxu0 0.0
      %3182 = vmatpush1.msra.mxu0 0.0
      %3183 = vmatprep.subr.mxu0 0.0
      %3184 = vmatpush1.msra.mxu0 0.0
      %3185 = vmatprep.subr.mxu0 0.0
      %3186 = vmatpush1.msra.mxu0 0.0
      %3187 = vmatprep.subr.mxu0 0.0
      %3188 = vmatpush1.msra.mxu0 0.0
      %3189 = vmatprep.subr.mxu0 0.0
      %3190 = vmatpush1.msra.mxu0 0.0
      %3191 = vmatprep.subr.mxu0 0.0
      %3192 = vmatpush1.msra.mxu0 0.0
      %3193 = vmatprep.subr.mxu0 0.0
      %3194 = vmatpush1.msra.mxu0 0.0
      %3195 = vmatprep.subr.mxu0 0.0
      %3196 = vmatpush1.msra.mxu0 0.0
      %3197 = vmatprep.subr.mxu0 0.0
      %3198 = vmatpush1.msra.mxu0 0.0
      %3199 = vmatprep.subr.mxu0 0.0
      %3200 = vmatpush1.msra.mxu0 0.0
      %3201 = vmatprep.subr.mxu0 0.0
      %3202 = vmatpush1.msra.mxu0 0.0
      %3203 = vmatprep.subr.mxu0 0.0
      %3204 = vmatpush1.msra.mxu0 0.0
      %3205 = vmatprep.subr.mxu0 0.0
      %3206 = vmatpush1.msra.mxu0 0.0
      %3207 = vmatprep.subr.mxu0 0.0
      %3208 = vmatpush1.msra.mxu0 0.0
      %3209 = vmatprep.subr.mxu0 0.0
      %3210 = vmatpush1.msra.mxu0 0.0
      %3211 = vmatprep.subr.mxu0 0.0
      %3212 = vmatpush1.msra.mxu0 0.0
      %3213 = vmatprep.subr.mxu0 0.0
      %3214 = vmatpush1.msra.mxu0 0.0
      %3215 = vmatprep.subr.mxu0 0.0
      %3216 = vmatpush1.msra.mxu0 0.0
      %3217 = vmatprep.subr.mxu0 0.0
      %3218 = vmatpush1.msra.mxu0 0.0
      %3219 = vmatprep.subr.mxu0 0.0
      %3220 = vmatpush1.msra.mxu0 0.0
      %3221 = vmatprep.subr.mxu0 0.0
      %3222 = vmatpush1.msra.mxu0 0.0
      %3223 = vmatprep.subr.mxu0 0.0
      %3224 = vmatpush1.msra.mxu0 0.0
      %3225 = vmatprep.subr.mxu0 0.0
      %3226 = vmatpush1.msra.mxu0 0.0
      %3227 = vmatprep.mubr.f32.mxu0 0.0
      %3228 = vmatmul.mubr.f32.gmra.mrb[0].mxu0 %v3161
      %v3229 = vpop.f32.mrb[0].mxu0
      %v3230 = vadd.f32 0.0, %v3229
      %v3231 = vpop.f32.mrb[0].mxu0
      %3232 = vdwg.mxu0
      %v3234 = vsel %vm522, %v2865, 0
      %3236 = vmatprep.subr.mxu0 0.0
      %3237 = vmatpush1.msra.mxu0 %v2161
      %3238 = vmatprep.subr.mxu0 0.0
      %3239 = vmatpush1.msra.mxu0 0.0
      %3240 = vmatprep.subr.mxu0 0.0
      %3241 = vmatpush1.msra.mxu0 0.0
      %3242 = vmatprep.subr.mxu0 0.0
      %3243 = vmatpush1.msra.mxu0 0.0
      %3244 = vmatprep.subr.mxu0 0.0
      %3245 = vmatpush1.msra.mxu0 0.0
      %3246 = vmatprep.subr.mxu0 0.0
      %3247 = vmatpush1.msra.mxu0 0.0
      %3248 = vmatprep.subr.mxu0 0.0
      %3249 = vmatpush1.msra.mxu0 0.0
      %3250 = vmatprep.subr.mxu0 0.0
      %3251 = vmatpush1.msra.mxu0 0.0
      %3252 = vmatprep.subr.mxu0 0.0
      %3253 = vmatpush1.msra.mxu0 0.0
      %3254 = vmatprep.subr.mxu0 0.0
      %3255 = vmatpush1.msra.mxu0 0.0
      %3256 = vmatprep.subr.mxu0 0.0
      %3257 = vmatpush1.msra.mxu0 0.0
      %3258 = vmatprep.subr.mxu0 0.0
      %3259 = vmatpush1.msra.mxu0 0.0
      %3260 = vmatprep.subr.mxu0 0.0
      %3261 = vmatpush1.msra.mxu0 0.0
      %3262 = vmatprep.subr.mxu0 0.0
      %3263 = vmatpush1.msra.mxu0 0.0
      %3264 = vmatprep.subr.mxu0 0.0
      %3265 = vmatpush1.msra.mxu0 0.0
      %3266 = vmatprep.subr.mxu0 0.0
      %3267 = vmatpush1.msra.mxu0 0.0
      %3268 = vmatprep.subr.mxu0 0.0
      %3269 = vmatpush1.msra.mxu0 0.0
      %3270 = vmatprep.subr.mxu0 0.0
      %3271 = vmatpush1.msra.mxu0 0.0
      %3272 = vmatprep.subr.mxu0 0.0
      %3273 = vmatpush1.msra.mxu0 0.0
      %3274 = vmatprep.subr.mxu0 0.0
      %3275 = vmatpush1.msra.mxu0 0.0
      %3276 = vmatprep.subr.mxu0 0.0
      %3277 = vmatpush1.msra.mxu0 0.0
      %3278 = vmatprep.subr.mxu0 0.0
      %3279 = vmatpush1.msra.mxu0 0.0
      %3280 = vmatprep.subr.mxu0 0.0
      %3281 = vmatpush1.msra.mxu0 0.0
      %3282 = vmatprep.subr.mxu0 0.0
      %3283 = vmatpush1.msra.mxu0 0.0
      %3284 = vmatprep.subr.mxu0 0.0
      %3285 = vmatpush1.msra.mxu0 0.0
      %3286 = vmatprep.subr.mxu0 0.0
      %3287 = vmatpush1.msra.mxu0 0.0
      %3288 = vmatprep.subr.mxu0 0.0
      %3289 = vmatpush1.msra.mxu0 0.0
      %3290 = vmatprep.subr.mxu0 0.0
      %3291 = vmatpush1.msra.mxu0 0.0
      %3292 = vmatprep.subr.mxu0 0.0
      %3293 = vmatpush1.msra.mxu0 0.0
      %3294 = vmatprep.subr.mxu0 0.0
      %3295 = vmatpush1.msra.mxu0 0.0
      %3296 = vmatprep.subr.mxu0 0.0
      %3297 = vmatpush1.msra.mxu0 0.0
      %3298 = vmatprep.subr.mxu0 0.0
      %3299 = vmatpush1.msra.mxu0 0.0
      %3300 = vmatprep.mubr.f32.mxu0 0.0
      %3301 = vmatmul.mubr.f32.gmra.mrb[0].mxu0 %v3234
      %v3302 = vpop.f32.mrb[0].mxu0
      %v3303 = vadd.f32 0.0, %v3302
      %v3304 = vpop.f32.mrb[0].mxu0
      %3305 = vdwg.mxu0
      %v3307 = vsel %vm522, %v2866, 0
      %3309 = vmatprep.subr.mxu0 0.0
      %3310 = vmatpush1.msra.mxu0 %v2162
      %3311 = vmatprep.subr.mxu0 0.0
      %3312 = vmatpush1.msra.mxu0 0.0
      %3313 = vmatprep.subr.mxu0 0.0
      %3314 = vmatpush1.msra.mxu0 0.0
      %3315 = vmatprep.subr.mxu0 0.0
      %3316 = vmatpush1.msra.mxu0 0.0
      %3317 = vmatprep.subr.mxu0 0.0
      %3318 = vmatpush1.msra.mxu0 0.0
      %3319 = vmatprep.subr.mxu0 0.0
      %3320 = vmatpush1.msra.mxu0 0.0
      %3321 = vmatprep.subr.mxu0 0.0
      %3322 = vmatpush1.msra.mxu0 0.0
      %3323 = vmatprep.subr.mxu0 0.0
      %3324 = vmatpush1.msra.mxu0 0.0
      %3325 = vmatprep.subr.mxu0 0.0
      %3326 = vmatpush1.msra.mxu0 0.0
      %3327 = vmatprep.subr.mxu0 0.0
      %3328 = vmatpush1.msra.mxu0 0.0
      %3329 = vmatprep.subr.mxu0 0.0
      %3330 = vmatpush1.msra.mxu0 0.0
      %3331 = vmatprep.subr.mxu0 0.0
      %3332 = vmatpush1.msra.mxu0 0.0
      %3333 = vmatprep.subr.mxu0 0.0
      %3334 = vmatpush1.msra.mxu0 0.0
      %3335 = vmatprep.subr.mxu0 0.0
      %3336 = vmatpush1.msra.mxu0 0.0
      %3337 = vmatprep.subr.mxu0 0.0
      %3338 = vmatpush1.msra.mxu0 0.0
      %3339 = vmatprep.subr.mxu0 0.0
      %3340 = vmatpush1.msra.mxu0 0.0
      %3341 = vmatprep.subr.mxu0 0.0
      %3342 = vmatpush1.msra.mxu0 0.0
      %3343 = vmatprep.subr.mxu0 0.0
      %3344 = vmatpush1.msra.mxu0 0.0
      %3345 = vmatprep.subr.mxu0 0.0
      %3346 = vmatpush1.msra.mxu0 0.0
      %3347 = vmatprep.subr.mxu0 0.0
      %3348 = vmatpush1.msra.mxu0 0.0
      %3349 = vmatprep.subr.mxu0 0.0
      %3350 = vmatpush1.msra.mxu0 0.0
      %3351 = vmatprep.subr.mxu0 0.0
      %3352 = vmatpush1.msra.mxu0 0.0
      %3353 = vmatprep.subr.mxu0 0.0
      %3354 = vmatpush1.msra.mxu0 0.0
      %3355 = vmatprep.subr.mxu0 0.0
      %3356 = vmatpush1.msra.mxu0 0.0
      %3357 = vmatprep.subr.mxu0 0.0
      %3358 = vmatpush1.msra.mxu0 0.0
      %3359 = vmatprep.subr.mxu0 0.0
      %3360 = vmatpush1.msra.mxu0 0.0
      %3361 = vmatprep.subr.mxu0 0.0
      %3362 = vmatpush1.msra.mxu0 0.0
      %3363 = vmatprep.subr.mxu0 0.0
      %3364 = vmatpush1.msra.mxu0 0.0
      %3365 = vmatprep.subr.mxu0 0.0
      %3366 = vmatpush1.msra.mxu0 0.0
      %3367 = vmatprep.subr.mxu0 0.0
      %3368 = vmatpush1.msra.mxu0 0.0
      %3369 = vmatprep.subr.mxu0 0.0
      %3370 = vmatpush1.msra.mxu0 0.0
      %3371 = vmatprep.subr.mxu0 0.0
      %3372 = vmatpush1.msra.mxu0 0.0
      %3373 = vmatprep.mubr.f32.mxu0 0.0
      %3374 = vmatmul.mubr.f32.gmra.mrb[0].mxu0 %v3307
      %v3375 = vpop.f32.mrb[0].mxu0
      %v3376 = vadd.f32 0.0, %v3375
      %v3377 = vpop.f32.mrb[0].mxu0
      %3378 = vdwg.mxu0
      %v3380 = vsel %vm522, %v2867, 0
      %3382 = vmatprep.subr.mxu0 0.0
      %3383 = vmatpush1.msra.mxu0 %v2163
      %3384 = vmatprep.subr.mxu0 0.0
      %3385 = vmatpush1.msra.mxu0 0.0
      %3386 = vmatprep.subr.mxu0 0.0
      %3387 = vmatpush1.msra.mxu0 0.0
      %3388 = vmatprep.subr.mxu0 0.0
      %3389 = vmatpush1.msra.mxu0 0.0
      %3390 = vmatprep.subr.mxu0 0.0
      %3391 = vmatpush1.msra.mxu0 0.0
      %3392 = vmatprep.subr.mxu0 0.0
      %3393 = vmatpush1.msra.mxu0 0.0
      %3394 = vmatprep.subr.mxu0 0.0
      %3395 = vmatpush1.msra.mxu0 0.0
      %3396 = vmatprep.subr.mxu0 0.0
      %3397 = vmatpush1.msra.mxu0 0.0
      %3398 = vmatprep.subr.mxu0 0.0
      %3399 = vmatpush1.msra.mxu0 0.0
      %3400 = vmatprep.subr.mxu0 0.0
      %3401 = vmatpush1.msra.mxu0 0.0
      %3402 = vmatprep.subr.mxu0 0.0
      %3403 = vmatpush1.msra.mxu0 0.0
      %3404 = vmatprep.subr.mxu0 0.0
      %3405 = vmatpush1.msra.mxu0 0.0
      %3406 = vmatprep.subr.mxu0 0.0
      %3407 = vmatpush1.msra.mxu0 0.0
      %3408 = vmatprep.subr.mxu0 0.0
      %3409 = vmatpush1.msra.mxu0 0.0
      %3410 = vmatprep.subr.mxu0 0.0
      %3411 = vmatpush1.msra.mxu0 0.0
      %3412 = vmatprep.subr.mxu0 0.0
      %3413 = vmatpush1.msra.mxu0 0.0
      %3414 = vmatprep.subr.mxu0 0.0
      %3415 = vmatpush1.msra.mxu0 0.0
      %3416 = vmatprep.subr.mxu0 0.0
      %3417 = vmatpush1.msra.mxu0 0.0
      %3418 = vmatprep.subr.mxu0 0.0
      %3419 = vmatpush1.msra.mxu0 0.0
      %3420 = vmatprep.subr.mxu0 0.0
      %3421 = vmatpush1.msra.mxu0 0.0
      %3422 = vmatprep.subr.mxu0 0.0
      %3423 = vmatpush1.msra.mxu0 0.0
      %3424 = vmatprep.subr.mxu0 0.0
      %3425 = vmatpush1.msra.mxu0 0.0
      %3426 = vmatprep.subr.mxu0 0.0
      %3427 = vmatpush1.msra.mxu0 0.0
      %3428 = vmatprep.subr.mxu0 0.0
      %3429 = vmatpush1.msra.mxu0 0.0
      %3430 = vmatprep.subr.mxu0 0.0
      %3431 = vmatpush1.msra.mxu0 0.0
      %3432 = vmatprep.subr.mxu0 0.0
      %3433 = vmatpush1.msra.mxu0 0.0
      %3434 = vmatprep.subr.mxu0 0.0
      %3435 = vmatpush1.msra.mxu0 0.0
      %3436 = vmatprep.subr.mxu0 0.0
      %3437 = vmatpush1.msra.mxu0 0.0
      %3438 = vmatprep.subr.mxu0 0.0
      %3439 = vmatpush1.msra.mxu0 0.0
      %3440 = vmatprep.subr.mxu0 0.0
      %3441 = vmatpush1.msra.mxu0 0.0
      %3442 = vmatprep.subr.mxu0 0.0
      %3443 = vmatpush1.msra.mxu0 0.0
      %3444 = vmatprep.subr.mxu0 0.0
      %3445 = vmatpush1.msra.mxu0 0.0
      %3446 = vmatprep.mubr.f32.mxu0 0.0
      %3447 = vmatmul.mubr.f32.gmra.mrb[0].mxu0 %v3380
      %v3448 = vpop.f32.mrb[0].mxu0
      %v3449 = vadd.f32 0.0, %v3448
      %v3450 = vpop.f32.mrb[0].mxu0
      %3451 = vdwg.mxu0
      %3452 = vst.msk [vmem:[#allocation5] sm:$0xff] %vm522, %v2938
      %3454 = vrot.lane.b32.xlu0 %v3011, 8
      %v3455 = vpop.permute.xlu0 %3454
      %vm3457 = vcmask 130112
      %3458 = vst.msk [vmem:[#allocation5] sm:$0xff] %vm3457, %v3455
      %3460 = vrot.lane.b32.xlu0 %v3084, 16
      %v3461 = vpop.permute.xlu0 %3460
      %vm3463 = vcmask 195712
      %3464 = vst.msk [vmem:[#allocation5] sm:$0xff] %vm3463, %v3461
      %3466 = vrot.lane.b32.xlu0 %v3157, 24
      %v3467 = vpop.permute.xlu0 %3466
      %vm3469 = vcmask 261312
      %3470 = vst.msk [vmem:[#allocation5] sm:$0xff] %vm3469, %v3467
      %3472 = vrot.lane.b32.xlu0 %v3230, 32
      %v3473 = vpop.permute.xlu0 %3472
      %vm3475 = vcmask 326912
      %3476 = vst.msk [vmem:[#allocation5] sm:$0xff] %vm3475, %v3473
      %3478 = vrot.lane.b32.xlu0 %v3303, 40
      %v3479 = vpop.permute.xlu0 %3478
      %vm3481 = vcmask 392512
      %3482 = vst.msk [vmem:[#allocation5] sm:$0xff] %vm3481, %v3479
      %3484 = vrot.lane.b32.xlu0 %v3376, 48
      %v3485 = vpop.permute.xlu0 %3484
      %vm3487 = vcmask 458112
      %3488 = vst.msk [vmem:[#allocation5] sm:$0xff] %vm3487, %v3485
      %3490 = vrot.lane.b32.xlu0 %v3449, 56
      %v3491 = vpop.permute.xlu0 %3490
      %vm3493 = vcmask 523712
      %3494 = vst.msk [vmem:[#allocation5] sm:$0xff] %vm3493, %v3491
      %v3495 = vld [vmem:[%s3] sm:$0xff]
      %v3496 = vld [vmem:[%s3 + $0x8] sm:$0xff]
      %v3497 = vld [vmem:[#allocation5] sm:$0xff]
      %v3498 = vld [vmem:[%s4] sm:$0xff]
      %v3499 = vld [vmem:[%s4 + $0x8] sm:$0xff]
      %3501 = vset.pattern.permute.xlu0 0
      %3502 = vperm.xlu0 %3501, %v3498
      %v3503 = vpop.permute.xlu0 %3502
      %3506 = vset.pattern.permute.xlu0 0
      %3507 = vperm.xlu0 %3506, %v3499
      %v3508 = vpop.permute.xlu0 %3507
      %v3511 = vsel %vm522, %v3495, 0
      %v3514 = vsel %vm522, %v3496, 0
      %3516 = vmatprep.subr.mxu0 0.0
      %3517 = vmatpush1.msra.mxu0 %v3497
      %3518 = vmatprep.subr.mxu0 0.0
      %3519 = vmatpush1.msra.mxu0 0.0
      %3520 = vmatprep.subr.mxu0 0.0
      %3521 = vmatpush1.msra.mxu0 0.0
      %3522 = vmatprep.subr.mxu0 0.0
      %3523 = vmatpush1.msra.mxu0 0.0
      %3524 = vmatprep.subr.mxu0 0.0
      %3525 = vmatpush1.msra.mxu0 0.0
      %3526 = vmatprep.subr.mxu0 0.0
      %3527 = vmatpush1.msra.mxu0 0.0
      %3528 = vmatprep.subr.mxu0 0.0
      %3529 = vmatpush1.msra.mxu0 0.0
      %3530 = vmatprep.subr.mxu0 0.0
      %3531 = vmatpush1.msra.mxu0 0.0
      %3532 = vmatprep.subr.mxu0 0.0
      %3533 = vmatpush1.msra.mxu0 0.0
      %3534 = vmatprep.subr.mxu0 0.0
      %3535 = vmatpush1.msra.mxu0 0.0
      %3536 = vmatprep.subr.mxu0 0.0
      %3537 = vmatpush1.msra.mxu0 0.0
      %3538 = vmatprep.subr.mxu0 0.0
      %3539 = vmatpush1.msra.mxu0 0.0
      %3540 = vmatprep.subr.mxu0 0.0
      %3541 = vmatpush1.msra.mxu0 0.0
      %3542 = vmatprep.subr.mxu0 0.0
      %3543 = vmatpush1.msra.mxu0 0.0
      %3544 = vmatprep.subr.mxu0 0.0
      %3545 = vmatpush1.msra.mxu0 0.0
      %3546 = vmatprep.subr.mxu0 0.0
      %3547 = vmatpush1.msra.mxu0 0.0
      %3548 = vmatprep.subr.mxu0 0.0
      %3549 = vmatpush1.msra.mxu0 0.0
      %3550 = vmatprep.subr.mxu0 0.0
      %3551 = vmatpush1.msra.mxu0 0.0
      %3552 = vmatprep.subr.mxu0 0.0
      %3553 = vmatpush1.msra.mxu0 0.0
      %3554 = vmatprep.subr.mxu0 0.0
      %3555 = vmatpush1.msra.mxu0 0.0
      %3556 = vmatprep.subr.mxu0 0.0
      %3557 = vmatpush1.msra.mxu0 0.0
      %3558 = vmatprep.subr.mxu0 0.0
      %3559 = vmatpush1.msra.mxu0 0.0
      %3560 = vmatprep.subr.mxu0 0.0
      %3561 = vmatpush1.msra.mxu0 0.0
      %3562 = vmatprep.subr.mxu0 0.0
      %3563 = vmatpush1.msra.mxu0 0.0
      %3564 = vmatprep.subr.mxu0 0.0
      %3565 = vmatpush1.msra.mxu0 0.0
      %3566 = vmatprep.subr.mxu0 0.0
      %3567 = vmatpush1.msra.mxu0 0.0
      %3568 = vmatprep.subr.mxu0 0.0
      %3569 = vmatpush1.msra.mxu0 0.0
      %3570 = vmatprep.subr.mxu0 0.0
      %3571 = vmatpush1.msra.mxu0 0.0
      %3572 = vmatprep.subr.mxu0 0.0
      %3573 = vmatpush1.msra.mxu0 0.0
      %3574 = vmatprep.subr.mxu0 0.0
      %3575 = vmatpush1.msra.mxu0 0.0
      %3576 = vmatprep.subr.mxu0 0.0
      %3577 = vmatpush1.msra.mxu0 0.0
      %3578 = vmatprep.subr.mxu0 0.0
      %3579 = vmatpush1.msra.mxu0 0.0
      %3580 = vmatprep.mubr.f32.mxu0 0.0
      %3581 = vmatmul.mubr.f32.gmra.mrb[0].mxu0 %v3511
      %v3582 = vpop.f32.mrb[0].mxu0
      %v3583 = vadd.f32 %v3503, %v3582
      %v3584 = vpop.f32.mrb[0].mxu0
      %3585 = vmatprep.mubr.f32.mxu0 0.0
      %3586 = vmatmul.mubr.f32.gmra.mrb[0].mxu0 %v3514
      %v3587 = vpop.f32.mrb[0].mxu0
      %v3588 = vadd.f32 %v3508, %v3587
      %v3589 = vpop.f32.mrb[0].mxu0
      %3590 = vdwg.mxu0
      %v3591 = vmax.f32 %v3583, 0.0
      %v3592 = vmax.f32 %v3588, 0.0
      %v3593 = vmin.f32 %v3583, 0.0
      %v3594 = vmin.f32 %v3588, 0.0
      %v3595 = vmul.f32 %v3593, 0.25
      %v3596 = vmul.f32 %v3594, 0.25
      %v3597 = vadd.f32 %v3591, %v3595
      %v3598 = vadd.f32 %v3592, %v3596
      %v3599 = vadd.f32 %v3597, %v225
      %v3600 = vadd.f32 %v3598, %v226
      %3601 = vst.msk [vmem:[%s224] sm:$0xff] %vm350, %v3599
      %3602 = vst.msk [vmem:[%s224 + $0x8] sm:$0xff] %vm350, %v3600
      %p3603 = scmp.lt.s32.totalorder %s16, 1
      %s3604 = scalar_select %p3603, %s16, 1
      %s3605 = smul.addr %s3604, 2
      %s3606 = smul.addr %s3605, 8
      %s3607 = scalar_lea.vmem %s5, %s3606
      // Predicated region
      $region41: #{temporal_self_attention.1} parent=39 // pred_check
        %p3608 = pneg %p144
      $region42: #{temporal_self_attention.1} parent=39 // pred_check_branch
        %3610 = sbr.rel (%p3608) target = $region44
      $region43: #{temporal_self_attention.1} parent=39 // pred_region
        _
      $region44: #{temporal_self_attention.1} parent=39 // pred_fallthru
        _
    $region40: #{temporal_self_attention.1} parent=5 // pred_fallthru
      _
    %p3611 = scmp.le.s32.totalorder 2, %s11
    // Predicated region
    $region45: #{temporal_self_attention.1} parent=5 // pred_check
      %p3612 = pneg %p3611
    $region46: #{temporal_self_attention.1} parent=5 // pred_check_branch
      %3614 = sbr.rel (%p3612) target = $region48
    $region47: #{temporal_self_attention.1} parent=5 // pred_region
      %s3615 = ssub.s32 %s11, 2
      // Predicated region
      $region49: #{temporal_self_attention.1} parent=47 // pred_check
        %p3616 = pneg %p150
      $region50: #{temporal_self_attention.1} parent=47 // pred_check_branch
        %3618 = sbr.rel (%p3616) target = $region52
      $region51: #{temporal_self_attention.1} parent=47 // pred_region
        %p3619 = scmp.lt.s32.totalorder %s17, 1
        %s3620 = scalar_select %p3619, %s17, 1
        %s3621 = smul.addr %s3620, 2
        %s3622 = smul.addr %s3621, 8
        %s3623 = scalar_lea.vmem %s5, %s3622
      $region52: #{temporal_self_attention.1} parent=47 // pred_fallthru
        _
    $region48: #{temporal_self_attention.1} parent=5 // pred_fallthru
      _
  $region6: #{temporal_self_attention.1} parent=0 // loop_footer
    %s15 = sadd.s32 1, %s11
  $region7: #{temporal_self_attention.1} parent=0 // loop_footer_branch
    %10 = sbr.rel target = $region3
  $region8: #{temporal_self_attention.1} parent=0 // loop_exit
    _

</llo_original>
